<compile_context>
chip_gen: v7x
topology: tpu7x:2x2x1
jax: 0.10.0
libtpu: 0.0.40
codegen_flags: <defaults>
</compile_context>

<pallas_src>
import functools
import math

import jax
import jax.numpy as jnp
from jax.experimental import pallas as pl
from jax.experimental.pallas import tpu as pltpu

# --- model hyper-parameters (small, consistent with the module) -------------
D_MODEL = 32
N_HEAD = 4
HEAD_DIM = D_MODEL // N_HEAD
DIM_FF = 64
NUM_LAYERS = 2
EPS = 1e-5


def _layer_norm(x, gamma, beta):
    mu = jnp.mean(x, axis=-1, keepdims=True)
    var = jnp.mean((x - mu) ** 2, axis=-1, keepdims=True)
    return (x - mu) * jax.lax.rsqrt(var + EPS) * gamma + beta


# --- Pallas kernel: full encoder (all layers + final norm), one batch/block --
def fused_encoder_kernel(x_ref, wqkv_ref, bqkv_ref, wo_ref, bo_ref,
                         g1_ref, be1_ref, w1_ref, b1_ref, w2_ref, b2_ref,
                         g2_ref, be2_ref, gf_ref, bf_ref, out_ref,
                         *, num_layers, apply_final_norm):
    x = x_ref[0].astype(jnp.float32)                              # (S, D)
    S = x.shape[0]

    for l in range(num_layers):                                   # static unroll
        # packed QKV projection: wqkv pre-transposed (D, 3D), Q cols pre-scaled
        qkv = jnp.dot(x.astype(jnp.bfloat16), wqkv_ref[l],
                      preferred_element_type=jnp.float32) + bqkv_ref[l]   # (S, 3D)
        wo_l = wo_ref[l]                                          # (D, D) bf16 (= Wo.T)

        # per-head attention; head concat folded into accumulating out-proj.
        # Accumulator starts at (residual + out-proj bias) so no extra adds.
        acc = x + bo_ref[l]                                       # (S, D) f32
        for h in range(N_HEAD):
            lo = h * HEAD_DIM
            qh = qkv[:, lo:lo + HEAD_DIM].astype(jnp.bfloat16)
            kh = qkv[:, D_MODEL + lo:D_MODEL + lo + HEAD_DIM].astype(jnp.bfloat16)
            vh = qkv[:, 2 * D_MODEL + lo:2 * D_MODEL + lo + HEAD_DIM].astype(jnp.bfloat16)

            # scores: q @ k^T (1/sqrt(head_dim) already folded into Wq / bq)
            s = jax.lax.dot_general(qh, kh, (((1,), (1,)), ((), ())),
                                    preferred_element_type=jnp.float32)   # (S, S)
            s = s - jnp.max(s, axis=-1, keepdims=True)
            p = jnp.exp(s)
            p = p * pl.reciprocal(jnp.sum(p, axis=-1, keepdims=True), approx=True)

            head = jnp.dot(p.astype(jnp.bfloat16), vh,
                           preferred_element_type=jnp.float32)            # (S, HD)
            acc = acc + jnp.dot(head.astype(jnp.bfloat16),
                                wo_l[lo:lo + HEAD_DIM, :],
                                preferred_element_type=jnp.float32)       # (S, D)

        # post-norm residual block 1 (self-attention); acc == x + attn_out
        x1 = _layer_norm(acc, g1_ref[l], be1_ref[l])

        # feed-forward block: relu(x1 @ W1^T + b1) @ W2^T + b2  (weights pre-T)
        hdn = jnp.dot(x1.astype(jnp.bfloat16), w1_ref[l],
                      preferred_element_type=jnp.float32) + b1_ref[l]
        hdn = jnp.maximum(hdn, 0.0)
        ff = jnp.dot(hdn.astype(jnp.bfloat16), w2_ref[l],
                     preferred_element_type=jnp.float32) + b2_ref[l]

        # post-norm residual block 2
        x = _layer_norm(x1 + ff, g2_ref[l], be2_ref[l])

    if apply_final_norm:
        x = _layer_norm(x, gf_ref[...], bf_ref[...])

    out_ref[0] = x.astype(out_ref.dtype)


def _full_spec(shape):
    n = len(shape)
    return pl.BlockSpec(shape, lambda b, _n=n: (0,) * _n)


# --- host-side parameter packing (pre-transpose, pre-scale, bf16 cast, stack) -
def pack_params(layer_params, norm_params):
    scale = 1.0 / math.sqrt(HEAD_DIM)

    def prep(p):
        wqkv_t = p['wqkv'].T                                   # (D, 3D) = in_proj.T
        wqkv_t = wqkv_t.at[:, :D_MODEL].multiply(scale)        # fold q-scale into Wq
        bqkv = p['bqkv'].at[:D_MODEL].multiply(scale)          # ... and into bq
        return dict(
            wqkv=wqkv_t.astype(jnp.bfloat16),
            bqkv=bqkv[None, :].astype(jnp.float32),
            wo=p['wo'].T.astype(jnp.bfloat16),                 # (D, D)
            bo=p['bo'][None, :].astype(jnp.float32),
            g1=p['g1'][None, :].astype(jnp.float32),
            be1=p['be1'][None, :].astype(jnp.float32),
            w1=p['w1'].T.astype(jnp.bfloat16),                 # (D, FF)
            b1=p['b1'][None, :].astype(jnp.float32),
            w2=p['w2'].T.astype(jnp.bfloat16),                 # (FF, D)
            b2=p['b2'][None, :].astype(jnp.float32),
            g2=p['g2'][None, :].astype(jnp.float32),
            be2=p['be2'][None, :].astype(jnp.float32),
        )

    preps = [prep(p) for p in layer_params]
    stacked = {k: jnp.stack([pp[k] for pp in preps], axis=0) for k in preps[0]}
    if norm_params is not None:
        gf = norm_params['g'][None, :].astype(jnp.float32)
        bf = norm_params['b'][None, :].astype(jnp.float32)
    else:
        gf = jnp.ones((1, D_MODEL), jnp.float32)
        bf = jnp.zeros((1, D_MODEL), jnp.float32)
    return stacked, gf, bf


_PARAM_KEYS = ('wqkv', 'bqkv', 'wo', 'bo', 'g1', 'be1',
               'w1', 'b1', 'w2', 'b2', 'g2', 'be2')


def custom_transformer_encoder(src, layer_params, norm_params):
    """Mirrors CustomTransformerEncoder.forward with mask=None (non-causal),
    no key-padding mask, rotary disabled (config=None), eval mode.
    The full stack runs in a single pallas_call."""
    # TODO(synk): nested-tensor fast path and causal-mask auto-detection are
    # control-flow only when mask=None, so they are no-ops and omitted.
    B, S, D = src.shape
    stacked, gf, bf = pack_params(layer_params, norm_params)
    args = [stacked[k] for k in _PARAM_KEYS] + [gf, bf]

    kernel = functools.partial(fused_encoder_kernel,
                               num_layers=len(layer_params),
                               apply_final_norm=norm_params is not None)

    in_specs = [pl.BlockSpec((1, S, D), lambda b: (b, 0, 0))]
    in_specs += [_full_spec(t.shape) for t in args]

    return pl.pallas_call(
        kernel,
        out_shape=jax.ShapeDtypeStruct((B, S, D), src.dtype),
        grid=(B,),                       # parallel over batch -> both TCs on v7x
        in_specs=in_specs,
        out_specs=pl.BlockSpec((1, S, D), lambda b: (b, 0, 0)),
        compiler_params=pltpu.CompilerParams(
            dimension_semantics=("parallel",)),
    )(src, *args)


# --- pure-JAX reference (original PyTorch-convention params, full f32) -------
def _layer_ref(x, p):
    B, S, D = x.shape
    qkv = jnp.einsum('bsd,ed->bse', x, p['wqkv']) + p['bqkv']
    q = qkv[..., :D_MODEL].reshape(B, S, N_HEAD, HEAD_DIM)
    k = qkv[..., D_MODEL:2 * D_MODEL].reshape(B, S, N_HEAD, HEAD_DIM)
    v = qkv[..., 2 * D_MODEL:].reshape(B, S, N_HEAD, HEAD_DIM)
    s = jnp.einsum('bqhd,bkhd->bhqk', q, k) / math.sqrt(HEAD_DIM)
    a = jax.nn.softmax(s, axis=-1)
    o = jnp.einsum('bhqk,bkhd->bqhd', a, v).reshape(B, S, D)
    attn_out = o @ p['wo'].T + p['bo']
    x1 = _layer_norm(x + attn_out, p['g1'], p['be1'])
    h = jnp.maximum(x1 @ p['w1'].T + p['b1'], 0.0)
    ff = h @ p['w2'].T + p['b2']
    return _layer_norm(x1 + ff, p['g2'], p['be2'])


def _encoder_ref(src, layer_params, norm_params):
    out = src
    for p in layer_params:
        out = _layer_ref(out, p)
    if norm_params is not None:
        out = _layer_norm(out, norm_params['g'], norm_params['b'])
    return out


def make_layer_params(key):
    ks = jax.random.split(key, 8)
    scale = 0.1
    return {
        'wqkv': scale * jax.random.normal(ks[0], (3 * D_MODEL, D_MODEL), jnp.float32),
        'bqkv': scale * jax.random.normal(ks[1], (3 * D_MODEL,), jnp.float32),
        'wo':   scale * jax.random.normal(ks[2], (D_MODEL, D_MODEL), jnp.float32),
        'bo':   scale * jax.random.normal(ks[3], (D_MODEL,), jnp.float32),
        'g1':   jnp.ones((D_MODEL,), jnp.float32),
        'be1':  jnp.zeros((D_MODEL,), jnp.float32),
        'w1':   scale * jax.random.normal(ks[4], (DIM_FF, D_MODEL), jnp.float32),
        'b1':   scale * jax.random.normal(ks[5], (DIM_FF,), jnp.float32),
        'w2':   scale * jax.random.normal(ks[6], (D_MODEL, DIM_FF), jnp.float32),
        'b2':   scale * jax.random.normal(ks[7], (D_MODEL,), jnp.float32),
        'g2':   jnp.ones((D_MODEL,), jnp.float32),
        'be2':  jnp.zeros((D_MODEL,), jnp.float32),
    }


if __name__ == "__main__":
    key = jax.random.PRNGKey(0)
    k_x, k_p = jax.random.split(key)

    B, S = 2, 8
    src = jax.random.normal(k_x, (B, S, D_MODEL), jnp.float32)

    # _get_clones deep-copies one encoder layer -> all layers share identical
    # initial weights, so we reuse the same parameter dict per layer.
    layer_p = make_layer_params(k_p)
    layer_params = [layer_p for _ in range(NUM_LAYERS)]
    norm_params = {'g': jnp.ones((D_MODEL,), jnp.float32),
                   'b': jnp.zeros((D_MODEL,), jnp.float32)}

    out = custom_transformer_encoder(src, layer_params, norm_params)
    out = jax.block_until_ready(out)

    ref = _encoder_ref(src, layer_params, norm_params)
    max_err = float(jnp.max(jnp.abs(out - ref)))
    assert out.shape == (B, S, D_MODEL)
    assert max_err < 5e-2, f"mismatch vs reference: {max_err}"

    print("KERNEL_OK")
</pallas_src>

<mosaic_0001>
module attributes {stable_mosaic.version = 11 : i64} {
  func.func @fused_encoder_kernel(%arg0: i32, %arg1: memref<1x8x32xf32, #tpu.memory_space<vmem>>, %arg2: memref<2x32x96xbf16, #tpu.memory_space<vmem>>, %arg3: memref<2x1x96xf32, #tpu.memory_space<vmem>>, %arg4: memref<2x32x32xbf16, #tpu.memory_space<vmem>>, %arg5: memref<2x1x32xf32, #tpu.memory_space<vmem>>, %arg6: memref<2x1x32xf32, #tpu.memory_space<vmem>>, %arg7: memref<2x1x32xf32, #tpu.memory_space<vmem>>, %arg8: memref<2x32x64xbf16, #tpu.memory_space<vmem>>, %arg9: memref<2x1x64xf32, #tpu.memory_space<vmem>>, %arg10: memref<2x64x32xbf16, #tpu.memory_space<vmem>>, %arg11: memref<2x1x32xf32, #tpu.memory_space<vmem>>, %arg12: memref<2x1x32xf32, #tpu.memory_space<vmem>>, %arg13: memref<2x1x32xf32, #tpu.memory_space<vmem>>, %arg14: memref<1x32xf32, #tpu.memory_space<vmem>>, %arg15: memref<1x32xf32, #tpu.memory_space<vmem>>, %arg16: memref<1x8x32xf32, #tpu.memory_space<vmem>>) attributes {dimension_semantics = [#tpu.dimension_semantics<parallel>], iteration_bounds = array<i64: 2>, scalar_prefetch = 0 : i64, scratch_operands = 0 : i64, tpu.core_type = #tpu.core_type<tc>, window_params = [{transform_indices = @transform_0, window_bounds = array<i64: 1, 8, 32>}, {pipeline_mode = #tpu.pipeline_mode<synchronous>, transform_indices = @transform_1, window_bounds = array<i64: 2, 32, 96>}, {pipeline_mode = #tpu.pipeline_mode<synchronous>, transform_indices = @transform_2, window_bounds = array<i64: 2, 1, 96>}, {pipeline_mode = #tpu.pipeline_mode<synchronous>, transform_indices = @transform_3, window_bounds = array<i64: 2, 32, 32>}, {pipeline_mode = #tpu.pipeline_mode<synchronous>, transform_indices = @transform_4, window_bounds = array<i64: 2, 1, 32>}, {pipeline_mode = #tpu.pipeline_mode<synchronous>, transform_indices = @transform_5, window_bounds = array<i64: 2, 1, 32>}, {pipeline_mode = #tpu.pipeline_mode<synchronous>, transform_indices = @transform_6, window_bounds = array<i64: 2, 1, 32>}, {pipeline_mode = #tpu.pipeline_mode<synchronous>, transform_indices = @transform_7, window_bounds = array<i64: 2, 32, 64>}, {pipeline_mode = #tpu.pipeline_mode<synchronous>, transform_indices = @transform_8, window_bounds = array<i64: 2, 1, 64>}, {pipeline_mode = #tpu.pipeline_mode<synchronous>, transform_indices = @transform_9, window_bounds = array<i64: 2, 64, 32>}, {pipeline_mode = #tpu.pipeline_mode<synchronous>, transform_indices = @transform_10, window_bounds = array<i64: 2, 1, 32>}, {pipeline_mode = #tpu.pipeline_mode<synchronous>, transform_indices = @transform_11, window_bounds = array<i64: 2, 1, 32>}, {pipeline_mode = #tpu.pipeline_mode<synchronous>, transform_indices = @transform_12, window_bounds = array<i64: 2, 1, 32>}, {pipeline_mode = #tpu.pipeline_mode<synchronous>, transform_indices = @transform_13, window_bounds = array<i64: 1, 32>}, {pipeline_mode = #tpu.pipeline_mode<synchronous>, transform_indices = @transform_14, window_bounds = array<i64: 1, 32>}, {transform_indices = @transform_15, window_bounds = array<i64: 1, 8, 32>}]} {
    %c0 = arith.constant 0 : index
    %c0_0 = arith.constant 0 : index
    %c0_1 = arith.constant 0 : index
    %0 = vector.load %arg1[%c0, %c0_0, %c0_1] : memref<1x8x32xf32, #tpu.memory_space<vmem>>, vector<1x8x32xf32>
    %1 = vector.shape_cast %0 : vector<1x8x32xf32> to vector<8x32xf32>
    %2 = arith.truncf %1 : vector<8x32xf32> to vector<8x32xbf16>
    %c0_2 = arith.constant 0 : index
    %c0_3 = arith.constant 0 : index
    %c0_4 = arith.constant 0 : index
    %3 = vector.load %arg2[%c0_2, %c0_3, %c0_4] : memref<2x32x96xbf16, #tpu.memory_space<vmem>>, vector<1x32x96xbf16>
    %4 = vector.shape_cast %3 : vector<1x32x96xbf16> to vector<32x96xbf16>
    %cst = arith.constant dense<0.000000e+00> : vector<8x96xf32>
    %5 = tpu.matmul %2, %4, %cst {dimension_numbers = #tpu.dot_dimension_numbers<[1], [0], [0], [1], [0, 0, 1, 1], [], []>} : vector<8x32xbf16>, vector<32x96xbf16>, vector<8x96xf32> -> vector<8x96xf32>
    %c0_5 = arith.constant 0 : index
    %c0_6 = arith.constant 0 : index
    %c0_7 = arith.constant 0 : index
    %6 = vector.load %arg3[%c0_5, %c0_6, %c0_7] : memref<2x1x96xf32, #tpu.memory_space<vmem>>, vector<1x1x96xf32>
    %7 = vector.shape_cast %6 : vector<1x1x96xf32> to vector<1x96xf32>
    %8 = vector.broadcast %7 : vector<1x96xf32> to vector<8x96xf32>
    %9 = arith.addf %5, %8 : vector<8x96xf32>
    %c0_8 = arith.constant 0 : index
    %c0_9 = arith.constant 0 : index
    %c0_10 = arith.constant 0 : index
    %10 = vector.load %arg4[%c0_8, %c0_9, %c0_10] : memref<2x32x32xbf16, #tpu.memory_space<vmem>>, vector<1x32x32xbf16>
    %11 = vector.shape_cast %10 : vector<1x32x32xbf16> to vector<32x32xbf16>
    %c0_11 = arith.constant 0 : index
    %c0_12 = arith.constant 0 : index
    %c0_13 = arith.constant 0 : index
    %12 = vector.load %arg5[%c0_11, %c0_12, %c0_13] : memref<2x1x32xf32, #tpu.memory_space<vmem>>, vector<1x1x32xf32>
    %13 = vector.shape_cast %12 : vector<1x1x32xf32> to vector<1x32xf32>
    %14 = vector.broadcast %13 : vector<1x32xf32> to vector<8x32xf32>
    %15 = arith.addf %1, %14 : vector<8x32xf32>
    %16 = vector.extract_strided_slice %9 {offsets = [0, 0], sizes = [8, 8], strides = [1, 1]} : vector<8x96xf32> to vector<8x8xf32>
    %17 = arith.truncf %16 : vector<8x8xf32> to vector<8x8xbf16>
    %18 = vector.extract_strided_slice %9 {offsets = [0, 32], sizes = [8, 8], strides = [1, 1]} : vector<8x96xf32> to vector<8x8xf32>
    %19 = arith.truncf %18 : vector<8x8xf32> to vector<8x8xbf16>
    %20 = vector.extract_strided_slice %9 {offsets = [0, 64], sizes = [8, 8], strides = [1, 1]} : vector<8x96xf32> to vector<8x8xf32>
    %21 = arith.truncf %20 : vector<8x8xf32> to vector<8x8xbf16>
    %cst_14 = arith.constant dense<0.000000e+00> : vector<8x8xf32>
    %22 = tpu.matmul %17, %19, %cst_14 {dimension_numbers = #tpu.dot_dimension_numbers<[1], [1], [0], [0], [0, 0, 1, 0], [], []>} : vector<8x8xbf16>, vector<8x8xbf16>, vector<8x8xf32> -> vector<8x8xf32>
    %cst_15 = arith.constant dense<0xFF800000> : vector<8xf32>
    %23 = vector.multi_reduction <maximumf>, %22, %cst_15 [1] : vector<8x8xf32> to vector<8xf32>
    %24 = vector.shape_cast %23 : vector<8xf32> to vector<8x1xf32>
    %25 = vector.broadcast %24 : vector<8x1xf32> to vector<8x8xf32>
    %26 = arith.subf %22, %25 : vector<8x8xf32>
    %27 = math.exp %26 : vector<8x8xf32>
    %cst_16 = arith.constant dense<0.000000e+00> : vector<8xf32>
    %28 = vector.multi_reduction <add>, %27, %cst_16 [1] : vector<8x8xf32> to vector<8xf32>
    %29 = vector.shape_cast %28 : vector<8xf32> to vector<8x1xf32>
    %30 = tpu.reciprocal %29 {approx = true} : vector<8x1xf32> -> vector<8x1xf32>
    %31 = vector.broadcast %30 : vector<8x1xf32> to vector<8x8xf32>
    %32 = arith.mulf %27, %31 : vector<8x8xf32>
    %33 = arith.truncf %32 : vector<8x8xf32> to vector<8x8xbf16>
    %cst_17 = arith.constant dense<0.000000e+00> : vector<8x8xf32>
    %34 = tpu.matmul %33, %21, %cst_17 {dimension_numbers = #tpu.dot_dimension_numbers<[1], [0], [0], [1], [0, 0, 1, 1], [], []>} : vector<8x8xbf16>, vector<8x8xbf16>, vector<8x8xf32> -> vector<8x8xf32>
    %35 = arith.truncf %34 : vector<8x8xf32> to vector<8x8xbf16>
    %36 = vector.extract_strided_slice %11 {offsets = [0, 0], sizes = [8, 32], strides = [1, 1]} : vector<32x32xbf16> to vector<8x32xbf16>
    %cst_18 = arith.constant dense<0.000000e+00> : vector<8x32xf32>
    %37 = tpu.matmul %35, %36, %cst_18 {dimension_numbers = #tpu.dot_dimension_numbers<[1], [0], [0], [1], [0, 0, 1, 1], [], []>} : vector<8x8xbf16>, vector<8x32xbf16>, vector<8x32xf32> -> vector<8x32xf32>
    %38 = arith.addf %15, %37 : vector<8x32xf32>
    %39 = vector.extract_strided_slice %9 {offsets = [0, 8], sizes = [8, 8], strides = [1, 1]} : vector<8x96xf32> to vector<8x8xf32>
    %40 = arith.truncf %39 : vector<8x8xf32> to vector<8x8xbf16>
    %41 = vector.extract_strided_slice %9 {offsets = [0, 40], sizes = [8, 8], strides = [1, 1]} : vector<8x96xf32> to vector<8x8xf32>
    %42 = arith.truncf %41 : vector<8x8xf32> to vector<8x8xbf16>
    %43 = vector.extract_strided_slice %9 {offsets = [0, 72], sizes = [8, 8], strides = [1, 1]} : vector<8x96xf32> to vector<8x8xf32>
    %44 = arith.truncf %43 : vector<8x8xf32> to vector<8x8xbf16>
    %cst_19 = arith.constant dense<0.000000e+00> : vector<8x8xf32>
    %45 = tpu.matmul %40, %42, %cst_19 {dimension_numbers = #tpu.dot_dimension_numbers<[1], [1], [0], [0], [0, 0, 1, 0], [], []>} : vector<8x8xbf16>, vector<8x8xbf16>, vector<8x8xf32> -> vector<8x8xf32>
    %cst_20 = arith.constant dense<0xFF800000> : vector<8xf32>
    %46 = vector.multi_reduction <maximumf>, %45, %cst_20 [1] : vector<8x8xf32> to vector<8xf32>
    %47 = vector.shape_cast %46 : vector<8xf32> to vector<8x1xf32>
    %48 = vector.broadcast %47 : vector<8x1xf32> to vector<8x8xf32>
    %49 = arith.subf %45, %48 : vector<8x8xf32>
    %50 = math.exp %49 : vector<8x8xf32>
    %cst_21 = arith.constant dense<0.000000e+00> : vector<8xf32>
    %51 = vector.multi_reduction <add>, %50, %cst_21 [1] : vector<8x8xf32> to vector<8xf32>
    %52 = vector.shape_cast %51 : vector<8xf32> to vector<8x1xf32>
    %53 = tpu.reciprocal %52 {approx = true} : vector<8x1xf32> -> vector<8x1xf32>
    %54 = vector.broadcast %53 : vector<8x1xf32> to vector<8x8xf32>
    %55 = arith.mulf %50, %54 : vector<8x8xf32>
    %56 = arith.truncf %55 : vector<8x8xf32> to vector<8x8xbf16>
    %cst_22 = arith.constant dense<0.000000e+00> : vector<8x8xf32>
    %57 = tpu.matmul %56, %44, %cst_22 {dimension_numbers = #tpu.dot_dimension_numbers<[1], [0], [0], [1], [0, 0, 1, 1], [], []>} : vector<8x8xbf16>, vector<8x8xbf16>, vector<8x8xf32> -> vector<8x8xf32>
    %58 = arith.truncf %57 : vector<8x8xf32> to vector<8x8xbf16>
    %59 = vector.extract_strided_slice %11 {offsets = [8, 0], sizes = [8, 32], strides = [1, 1]} : vector<32x32xbf16> to vector<8x32xbf16>
    %cst_23 = arith.constant dense<0.000000e+00> : vector<8x32xf32>
    %60 = tpu.matmul %58, %59, %cst_23 {dimension_numbers = #tpu.dot_dimension_numbers<[1], [0], [0], [1], [0, 0, 1, 1], [], []>} : vector<8x8xbf16>, vector<8x32xbf16>, vector<8x32xf32> -> vector<8x32xf32>
    %61 = arith.addf %38, %60 : vector<8x32xf32>
    %62 = vector.extract_strided_slice %9 {offsets = [0, 16], sizes = [8, 8], strides = [1, 1]} : vector<8x96xf32> to vector<8x8xf32>
    %63 = arith.truncf %62 : vector<8x8xf32> to vector<8x8xbf16>
    %64 = vector.extract_strided_slice %9 {offsets = [0, 48], sizes = [8, 8], strides = [1, 1]} : vector<8x96xf32> to vector<8x8xf32>
    %65 = arith.truncf %64 : vector<8x8xf32> to vector<8x8xbf16>
    %66 = vector.extract_strided_slice %9 {offsets = [0, 80], sizes = [8, 8], strides = [1, 1]} : vector<8x96xf32> to vector<8x8xf32>
    %67 = arith.truncf %66 : vector<8x8xf32> to vector<8x8xbf16>
    %cst_24 = arith.constant dense<0.000000e+00> : vector<8x8xf32>
    %68 = tpu.matmul %63, %65, %cst_24 {dimension_numbers = #tpu.dot_dimension_numbers<[1], [1], [0], [0], [0, 0, 1, 0], [], []>} : vector<8x8xbf16>, vector<8x8xbf16>, vector<8x8xf32> -> vector<8x8xf32>
    %cst_25 = arith.constant dense<0xFF800000> : vector<8xf32>
    %69 = vector.multi_reduction <maximumf>, %68, %cst_25 [1] : vector<8x8xf32> to vector<8xf32>
    %70 = vector.shape_cast %69 : vector<8xf32> to vector<8x1xf32>
    %71 = vector.broadcast %70 : vector<8x1xf32> to vector<8x8xf32>
    %72 = arith.subf %68, %71 : vector<8x8xf32>
    %73 = math.exp %72 : vector<8x8xf32>
    %cst_26 = arith.constant dense<0.000000e+00> : vector<8xf32>
    %74 = vector.multi_reduction <add>, %73, %cst_26 [1] : vector<8x8xf32> to vector<8xf32>
    %75 = vector.shape_cast %74 : vector<8xf32> to vector<8x1xf32>
    %76 = tpu.reciprocal %75 {approx = true} : vector<8x1xf32> -> vector<8x1xf32>
    %77 = vector.broadcast %76 : vector<8x1xf32> to vector<8x8xf32>
    %78 = arith.mulf %73, %77 : vector<8x8xf32>
    %79 = arith.truncf %78 : vector<8x8xf32> to vector<8x8xbf16>
    %cst_27 = arith.constant dense<0.000000e+00> : vector<8x8xf32>
    %80 = tpu.matmul %79, %67, %cst_27 {dimension_numbers = #tpu.dot_dimension_numbers<[1], [0], [0], [1], [0, 0, 1, 1], [], []>} : vector<8x8xbf16>, vector<8x8xbf16>, vector<8x8xf32> -> vector<8x8xf32>
    %81 = arith.truncf %80 : vector<8x8xf32> to vector<8x8xbf16>
    %82 = vector.extract_strided_slice %11 {offsets = [16, 0], sizes = [8, 32], strides = [1, 1]} : vector<32x32xbf16> to vector<8x32xbf16>
    %cst_28 = arith.constant dense<0.000000e+00> : vector<8x32xf32>
    %83 = tpu.matmul %81, %82, %cst_28 {dimension_numbers = #tpu.dot_dimension_numbers<[1], [0], [0], [1], [0, 0, 1, 1], [], []>} : vector<8x8xbf16>, vector<8x32xbf16>, vector<8x32xf32> -> vector<8x32xf32>
    %84 = arith.addf %61, %83 : vector<8x32xf32>
    %85 = vector.extract_strided_slice %9 {offsets = [0, 24], sizes = [8, 8], strides = [1, 1]} : vector<8x96xf32> to vector<8x8xf32>
    %86 = arith.truncf %85 : vector<8x8xf32> to vector<8x8xbf16>
    %87 = vector.extract_strided_slice %9 {offsets = [0, 56], sizes = [8, 8], strides = [1, 1]} : vector<8x96xf32> to vector<8x8xf32>
    %88 = arith.truncf %87 : vector<8x8xf32> to vector<8x8xbf16>
    %89 = vector.extract_strided_slice %9 {offsets = [0, 88], sizes = [8, 8], strides = [1, 1]} : vector<8x96xf32> to vector<8x8xf32>
    %90 = arith.truncf %89 : vector<8x8xf32> to vector<8x8xbf16>
    %cst_29 = arith.constant dense<0.000000e+00> : vector<8x8xf32>
    %91 = tpu.matmul %86, %88, %cst_29 {dimension_numbers = #tpu.dot_dimension_numbers<[1], [1], [0], [0], [0, 0, 1, 0], [], []>} : vector<8x8xbf16>, vector<8x8xbf16>, vector<8x8xf32> -> vector<8x8xf32>
    %cst_30 = arith.constant dense<0xFF800000> : vector<8xf32>
    %92 = vector.multi_reduction <maximumf>, %91, %cst_30 [1] : vector<8x8xf32> to vector<8xf32>
    %93 = vector.shape_cast %92 : vector<8xf32> to vector<8x1xf32>
    %94 = vector.broadcast %93 : vector<8x1xf32> to vector<8x8xf32>
    %95 = arith.subf %91, %94 : vector<8x8xf32>
    %96 = math.exp %95 : vector<8x8xf32>
    %cst_31 = arith.constant dense<0.000000e+00> : vector<8xf32>
    %97 = vector.multi_reduction <add>, %96, %cst_31 [1] : vector<8x8xf32> to vector<8xf32>
    %98 = vector.shape_cast %97 : vector<8xf32> to vector<8x1xf32>
    %99 = tpu.reciprocal %98 {approx = true} : vector<8x1xf32> -> vector<8x1xf32>
    %100 = vector.broadcast %99 : vector<8x1xf32> to vector<8x8xf32>
    %101 = arith.mulf %96, %100 : vector<8x8xf32>
    %102 = arith.truncf %101 : vector<8x8xf32> to vector<8x8xbf16>
    %cst_32 = arith.constant dense<0.000000e+00> : vector<8x8xf32>
    %103 = tpu.matmul %102, %90, %cst_32 {dimension_numbers = #tpu.dot_dimension_numbers<[1], [0], [0], [1], [0, 0, 1, 1], [], []>} : vector<8x8xbf16>, vector<8x8xbf16>, vector<8x8xf32> -> vector<8x8xf32>
    %104 = arith.truncf %103 : vector<8x8xf32> to vector<8x8xbf16>
    %105 = vector.extract_strided_slice %11 {offsets = [24, 0], sizes = [8, 32], strides = [1, 1]} : vector<32x32xbf16> to vector<8x32xbf16>
    %cst_33 = arith.constant dense<0.000000e+00> : vector<8x32xf32>
    %106 = tpu.matmul %104, %105, %cst_33 {dimension_numbers = #tpu.dot_dimension_numbers<[1], [0], [0], [1], [0, 0, 1, 1], [], []>} : vector<8x8xbf16>, vector<8x32xbf16>, vector<8x32xf32> -> vector<8x32xf32>
    %107 = arith.addf %84, %106 : vector<8x32xf32>
    %c0_34 = arith.constant 0 : index
    %c0_35 = arith.constant 0 : index
    %c0_36 = arith.constant 0 : index
    %108 = vector.load %arg6[%c0_34, %c0_35, %c0_36] : memref<2x1x32xf32, #tpu.memory_space<vmem>>, vector<1x1x32xf32>
    %109 = vector.shape_cast %108 : vector<1x1x32xf32> to vector<1x32xf32>
    %c0_37 = arith.constant 0 : index
    %c0_38 = arith.constant 0 : index
    %c0_39 = arith.constant 0 : index
    %110 = vector.load %arg7[%c0_37, %c0_38, %c0_39] : memref<2x1x32xf32, #tpu.memory_space<vmem>>, vector<1x1x32xf32>
    %111 = vector.shape_cast %110 : vector<1x1x32xf32> to vector<1x32xf32>
    %cst_40 = arith.constant dense<0.000000e+00> : vector<8xf32>
    %112 = vector.multi_reduction <add>, %107, %cst_40 [1] : vector<8x32xf32> to vector<8xf32>
    %113 = vector.shape_cast %112 : vector<8xf32> to vector<8x1xf32>
    %cst_41 = arith.constant 3.200000e+01 : f32
    %114 = vector.broadcast %cst_41 : f32 to vector<8x1xf32>
    %115 = arith.divf %113, %114 : vector<8x1xf32>
    %116 = vector.broadcast %115 : vector<8x1xf32> to vector<8x32xf32>
    %117 = arith.subf %107, %116 : vector<8x32xf32>
    %118 = arith.mulf %117, %117 : vector<8x32xf32>
    %cst_42 = arith.constant dense<0.000000e+00> : vector<8xf32>
    %119 = vector.multi_reduction <add>, %118, %cst_42 [1] : vector<8x32xf32> to vector<8xf32>
    %120 = vector.shape_cast %119 : vector<8xf32> to vector<8x1xf32>
    %cst_43 = arith.constant 3.200000e+01 : f32
    %121 = vector.broadcast %cst_43 : f32 to vector<8x1xf32>
    %122 = arith.divf %120, %121 : vector<8x1xf32>
    %123 = vector.broadcast %115 : vector<8x1xf32> to vector<8x32xf32>
    %124 = arith.subf %107, %123 : vector<8x32xf32>
    %cst_44 = arith.constant 9.99999974E-6 : f32
    %125 = vector.broadcast %cst_44 : f32 to vector<8x1xf32>
    %126 = arith.addf %122, %125 : vector<8x1xf32>
    %127 = math.rsqrt %126 : vector<8x1xf32>
    %128 = vector.broadcast %127 : vector<8x1xf32> to vector<8x32xf32>
    %129 = arith.mulf %124, %128 : vector<8x32xf32>
    %130 = vector.broadcast %109 : vector<1x32xf32> to vector<8x32xf32>
    %131 = arith.mulf %129, %130 : vector<8x32xf32>
    %132 = vector.broadcast %111 : vector<1x32xf32> to vector<8x32xf32>
    %133 = arith.addf %131, %132 : vector<8x32xf32>
    %134 = arith.truncf %133 : vector<8x32xf32> to vector<8x32xbf16>
    %c0_45 = arith.constant 0 : index
    %c0_46 = arith.constant 0 : index
    %c0_47 = arith.constant 0 : index
    %135 = vector.load %arg8[%c0_45, %c0_46, %c0_47] : memref<2x32x64xbf16, #tpu.memory_space<vmem>>, vector<1x32x64xbf16>
    %136 = vector.shape_cast %135 : vector<1x32x64xbf16> to vector<32x64xbf16>
    %cst_48 = arith.constant dense<0.000000e+00> : vector<8x64xf32>
    %137 = tpu.matmul %134, %136, %cst_48 {dimension_numbers = #tpu.dot_dimension_numbers<[1], [0], [0], [1], [0, 0, 1, 1], [], []>} : vector<8x32xbf16>, vector<32x64xbf16>, vector<8x64xf32> -> vector<8x64xf32>
    %c0_49 = arith.constant 0 : index
    %c0_50 = arith.constant 0 : index
    %c0_51 = arith.constant 0 : index
    %138 = vector.load %arg9[%c0_49, %c0_50, %c0_51] : memref<2x1x64xf32, #tpu.memory_space<vmem>>, vector<1x1x64xf32>
    %139 = vector.shape_cast %138 : vector<1x1x64xf32> to vector<1x64xf32>
    %140 = vector.broadcast %139 : vector<1x64xf32> to vector<8x64xf32>
    %141 = arith.addf %137, %140 : vector<8x64xf32>
    %cst_52 = arith.constant 0.000000e+00 : f32
    %142 = vector.broadcast %cst_52 : f32 to vector<8x64xf32>
    %143 = arith.maximumf %141, %142 : vector<8x64xf32>
    %144 = arith.truncf %143 : vector<8x64xf32> to vector<8x64xbf16>
    %c0_53 = arith.constant 0 : index
    %c0_54 = arith.constant 0 : index
    %c0_55 = arith.constant 0 : index
    %145 = vector.load %arg10[%c0_53, %c0_54, %c0_55] : memref<2x64x32xbf16, #tpu.memory_space<vmem>>, vector<1x64x32xbf16>
    %146 = vector.shape_cast %145 : vector<1x64x32xbf16> to vector<64x32xbf16>
    %cst_56 = arith.constant dense<0.000000e+00> : vector<8x32xf32>
    %147 = tpu.matmul %144, %146, %cst_56 {dimension_numbers = #tpu.dot_dimension_numbers<[1], [0], [0], [1], [0, 0, 1, 1], [], []>} : vector<8x64xbf16>, vector<64x32xbf16>, vector<8x32xf32> -> vector<8x32xf32>
    %c0_57 = arith.constant 0 : index
    %c0_58 = arith.constant 0 : index
    %c0_59 = arith.constant 0 : index
    %148 = vector.load %arg11[%c0_57, %c0_58, %c0_59] : memref<2x1x32xf32, #tpu.memory_space<vmem>>, vector<1x1x32xf32>
    %149 = vector.shape_cast %148 : vector<1x1x32xf32> to vector<1x32xf32>
    %150 = vector.broadcast %149 : vector<1x32xf32> to vector<8x32xf32>
    %151 = arith.addf %147, %150 : vector<8x32xf32>
    %152 = arith.addf %133, %151 : vector<8x32xf32>
    %c0_60 = arith.constant 0 : index
    %c0_61 = arith.constant 0 : index
    %c0_62 = arith.constant 0 : index
    %153 = vector.load %arg12[%c0_60, %c0_61, %c0_62] : memref<2x1x32xf32, #tpu.memory_space<vmem>>, vector<1x1x32xf32>
    %154 = vector.shape_cast %153 : vector<1x1x32xf32> to vector<1x32xf32>
    %c0_63 = arith.constant 0 : index
    %c0_64 = arith.constant 0 : index
    %c0_65 = arith.constant 0 : index
    %155 = vector.load %arg13[%c0_63, %c0_64, %c0_65] : memref<2x1x32xf32, #tpu.memory_space<vmem>>, vector<1x1x32xf32>
    %156 = vector.shape_cast %155 : vector<1x1x32xf32> to vector<1x32xf32>
    %cst_66 = arith.constant dense<0.000000e+00> : vector<8xf32>
    %157 = vector.multi_reduction <add>, %152, %cst_66 [1] : vector<8x32xf32> to vector<8xf32>
    %158 = vector.shape_cast %157 : vector<8xf32> to vector<8x1xf32>
    %cst_67 = arith.constant 3.200000e+01 : f32
    %159 = vector.broadcast %cst_67 : f32 to vector<8x1xf32>
    %160 = arith.divf %158, %159 : vector<8x1xf32>
    %161 = vector.broadcast %160 : vector<8x1xf32> to vector<8x32xf32>
    %162 = arith.subf %152, %161 : vector<8x32xf32>
    %163 = arith.mulf %162, %162 : vector<8x32xf32>
    %cst_68 = arith.constant dense<0.000000e+00> : vector<8xf32>
    %164 = vector.multi_reduction <add>, %163, %cst_68 [1] : vector<8x32xf32> to vector<8xf32>
    %165 = vector.shape_cast %164 : vector<8xf32> to vector<8x1xf32>
    %cst_69 = arith.constant 3.200000e+01 : f32
    %166 = vector.broadcast %cst_69 : f32 to vector<8x1xf32>
    %167 = arith.divf %165, %166 : vector<8x1xf32>
    %168 = vector.broadcast %160 : vector<8x1xf32> to vector<8x32xf32>
    %169 = arith.subf %152, %168 : vector<8x32xf32>
    %cst_70 = arith.constant 9.99999974E-6 : f32
    %170 = vector.broadcast %cst_70 : f32 to vector<8x1xf32>
    %171 = arith.addf %167, %170 : vector<8x1xf32>
    %172 = math.rsqrt %171 : vector<8x1xf32>
    %173 = vector.broadcast %172 : vector<8x1xf32> to vector<8x32xf32>
    %174 = arith.mulf %169, %173 : vector<8x32xf32>
    %175 = vector.broadcast %154 : vector<1x32xf32> to vector<8x32xf32>
    %176 = arith.mulf %174, %175 : vector<8x32xf32>
    %177 = vector.broadcast %156 : vector<1x32xf32> to vector<8x32xf32>
    %178 = arith.addf %176, %177 : vector<8x32xf32>
    %179 = arith.truncf %178 : vector<8x32xf32> to vector<8x32xbf16>
    %c1 = arith.constant 1 : index
    %c0_71 = arith.constant 0 : index
    %c0_72 = arith.constant 0 : index
    %180 = vector.load %arg2[%c1, %c0_71, %c0_72] : memref<2x32x96xbf16, #tpu.memory_space<vmem>>, vector<1x32x96xbf16>
    %181 = vector.shape_cast %180 : vector<1x32x96xbf16> to vector<32x96xbf16>
    %cst_73 = arith.constant dense<0.000000e+00> : vector<8x96xf32>
    %182 = tpu.matmul %179, %181, %cst_73 {dimension_numbers = #tpu.dot_dimension_numbers<[1], [0], [0], [1], [0, 0, 1, 1], [], []>} : vector<8x32xbf16>, vector<32x96xbf16>, vector<8x96xf32> -> vector<8x96xf32>
    %c1_74 = arith.constant 1 : index
    %c0_75 = arith.constant 0 : index
    %c0_76 = arith.constant 0 : index
    %183 = vector.load %arg3[%c1_74, %c0_75, %c0_76] : memref<2x1x96xf32, #tpu.memory_space<vmem>>, vector<1x1x96xf32>
    %184 = vector.shape_cast %183 : vector<1x1x96xf32> to vector<1x96xf32>
    %185 = vector.broadcast %184 : vector<1x96xf32> to vector<8x96xf32>
    %186 = arith.addf %182, %185 : vector<8x96xf32>
    %c1_77 = arith.constant 1 : index
    %c0_78 = arith.constant 0 : index
    %c0_79 = arith.constant 0 : index
    %187 = vector.load %arg4[%c1_77, %c0_78, %c0_79] : memref<2x32x32xbf16, #tpu.memory_space<vmem>>, vector<1x32x32xbf16>
    %188 = vector.shape_cast %187 : vector<1x32x32xbf16> to vector<32x32xbf16>
    %c1_80 = arith.constant 1 : index
    %c0_81 = arith.constant 0 : index
    %c0_82 = arith.constant 0 : index
    %189 = vector.load %arg5[%c1_80, %c0_81, %c0_82] : memref<2x1x32xf32, #tpu.memory_space<vmem>>, vector<1x1x32xf32>
    %190 = vector.shape_cast %189 : vector<1x1x32xf32> to vector<1x32xf32>
    %191 = vector.broadcast %190 : vector<1x32xf32> to vector<8x32xf32>
    %192 = arith.addf %178, %191 : vector<8x32xf32>
    %193 = vector.extract_strided_slice %186 {offsets = [0, 0], sizes = [8, 8], strides = [1, 1]} : vector<8x96xf32> to vector<8x8xf32>
    %194 = arith.truncf %193 : vector<8x8xf32> to vector<8x8xbf16>
    %195 = vector.extract_strided_slice %186 {offsets = [0, 32], sizes = [8, 8], strides = [1, 1]} : vector<8x96xf32> to vector<8x8xf32>
    %196 = arith.truncf %195 : vector<8x8xf32> to vector<8x8xbf16>
    %197 = vector.extract_strided_slice %186 {offsets = [0, 64], sizes = [8, 8], strides = [1, 1]} : vector<8x96xf32> to vector<8x8xf32>
    %198 = arith.truncf %197 : vector<8x8xf32> to vector<8x8xbf16>
    %cst_83 = arith.constant dense<0.000000e+00> : vector<8x8xf32>
    %199 = tpu.matmul %194, %196, %cst_83 {dimension_numbers = #tpu.dot_dimension_numbers<[1], [1], [0], [0], [0, 0, 1, 0], [], []>} : vector<8x8xbf16>, vector<8x8xbf16>, vector<8x8xf32> -> vector<8x8xf32>
    %cst_84 = arith.constant dense<0xFF800000> : vector<8xf32>
    %200 = vector.multi_reduction <maximumf>, %199, %cst_84 [1] : vector<8x8xf32> to vector<8xf32>
    %201 = vector.shape_cast %200 : vector<8xf32> to vector<8x1xf32>
    %202 = vector.broadcast %201 : vector<8x1xf32> to vector<8x8xf32>
    %203 = arith.subf %199, %202 : vector<8x8xf32>
    %204 = math.exp %203 : vector<8x8xf32>
    %cst_85 = arith.constant dense<0.000000e+00> : vector<8xf32>
    %205 = vector.multi_reduction <add>, %204, %cst_85 [1] : vector<8x8xf32> to vector<8xf32>
    %206 = vector.shape_cast %205 : vector<8xf32> to vector<8x1xf32>
    %207 = tpu.reciprocal %206 {approx = true} : vector<8x1xf32> -> vector<8x1xf32>
    %208 = vector.broadcast %207 : vector<8x1xf32> to vector<8x8xf32>
    %209 = arith.mulf %204, %208 : vector<8x8xf32>
    %210 = arith.truncf %209 : vector<8x8xf32> to vector<8x8xbf16>
    %cst_86 = arith.constant dense<0.000000e+00> : vector<8x8xf32>
    %211 = tpu.matmul %210, %198, %cst_86 {dimension_numbers = #tpu.dot_dimension_numbers<[1], [0], [0], [1], [0, 0, 1, 1], [], []>} : vector<8x8xbf16>, vector<8x8xbf16>, vector<8x8xf32> -> vector<8x8xf32>
    %212 = arith.truncf %211 : vector<8x8xf32> to vector<8x8xbf16>
    %213 = vector.extract_strided_slice %188 {offsets = [0, 0], sizes = [8, 32], strides = [1, 1]} : vector<32x32xbf16> to vector<8x32xbf16>
    %cst_87 = arith.constant dense<0.000000e+00> : vector<8x32xf32>
    %214 = tpu.matmul %212, %213, %cst_87 {dimension_numbers = #tpu.dot_dimension_numbers<[1], [0], [0], [1], [0, 0, 1, 1], [], []>} : vector<8x8xbf16>, vector<8x32xbf16>, vector<8x32xf32> -> vector<8x32xf32>
    %215 = arith.addf %192, %214 : vector<8x32xf32>
    %216 = vector.extract_strided_slice %186 {offsets = [0, 8], sizes = [8, 8], strides = [1, 1]} : vector<8x96xf32> to vector<8x8xf32>
    %217 = arith.truncf %216 : vector<8x8xf32> to vector<8x8xbf16>
    %218 = vector.extract_strided_slice %186 {offsets = [0, 40], sizes = [8, 8], strides = [1, 1]} : vector<8x96xf32> to vector<8x8xf32>
    %219 = arith.truncf %218 : vector<8x8xf32> to vector<8x8xbf16>
    %220 = vector.extract_strided_slice %186 {offsets = [0, 72], sizes = [8, 8], strides = [1, 1]} : vector<8x96xf32> to vector<8x8xf32>
    %221 = arith.truncf %220 : vector<8x8xf32> to vector<8x8xbf16>
    %cst_88 = arith.constant dense<0.000000e+00> : vector<8x8xf32>
    %222 = tpu.matmul %217, %219, %cst_88 {dimension_numbers = #tpu.dot_dimension_numbers<[1], [1], [0], [0], [0, 0, 1, 0], [], []>} : vector<8x8xbf16>, vector<8x8xbf16>, vector<8x8xf32> -> vector<8x8xf32>
    %cst_89 = arith.constant dense<0xFF800000> : vector<8xf32>
    %223 = vector.multi_reduction <maximumf>, %222, %cst_89 [1] : vector<8x8xf32> to vector<8xf32>
    %224 = vector.shape_cast %223 : vector<8xf32> to vector<8x1xf32>
    %225 = vector.broadcast %224 : vector<8x1xf32> to vector<8x8xf32>
    %226 = arith.subf %222, %225 : vector<8x8xf32>
    %227 = math.exp %226 : vector<8x8xf32>
    %cst_90 = arith.constant dense<0.000000e+00> : vector<8xf32>
    %228 = vector.multi_reduction <add>, %227, %cst_90 [1] : vector<8x8xf32> to vector<8xf32>
    %229 = vector.shape_cast %228 : vector<8xf32> to vector<8x1xf32>
    %230 = tpu.reciprocal %229 {approx = true} : vector<8x1xf32> -> vector<8x1xf32>
    %231 = vector.broadcast %230 : vector<8x1xf32> to vector<8x8xf32>
    %232 = arith.mulf %227, %231 : vector<8x8xf32>
    %233 = arith.truncf %232 : vector<8x8xf32> to vector<8x8xbf16>
    %cst_91 = arith.constant dense<0.000000e+00> : vector<8x8xf32>
    %234 = tpu.matmul %233, %221, %cst_91 {dimension_numbers = #tpu.dot_dimension_numbers<[1], [0], [0], [1], [0, 0, 1, 1], [], []>} : vector<8x8xbf16>, vector<8x8xbf16>, vector<8x8xf32> -> vector<8x8xf32>
    %235 = arith.truncf %234 : vector<8x8xf32> to vector<8x8xbf16>
    %236 = vector.extract_strided_slice %188 {offsets = [8, 0], sizes = [8, 32], strides = [1, 1]} : vector<32x32xbf16> to vector<8x32xbf16>
    %cst_92 = arith.constant dense<0.000000e+00> : vector<8x32xf32>
    %237 = tpu.matmul %235, %236, %cst_92 {dimension_numbers = #tpu.dot_dimension_numbers<[1], [0], [0], [1], [0, 0, 1, 1], [], []>} : vector<8x8xbf16>, vector<8x32xbf16>, vector<8x32xf32> -> vector<8x32xf32>
    %238 = arith.addf %215, %237 : vector<8x32xf32>
    %239 = vector.extract_strided_slice %186 {offsets = [0, 16], sizes = [8, 8], strides = [1, 1]} : vector<8x96xf32> to vector<8x8xf32>
    %240 = arith.truncf %239 : vector<8x8xf32> to vector<8x8xbf16>
    %241 = vector.extract_strided_slice %186 {offsets = [0, 48], sizes = [8, 8], strides = [1, 1]} : vector<8x96xf32> to vector<8x8xf32>
    %242 = arith.truncf %241 : vector<8x8xf32> to vector<8x8xbf16>
    %243 = vector.extract_strided_slice %186 {offsets = [0, 80], sizes = [8, 8], strides = [1, 1]} : vector<8x96xf32> to vector<8x8xf32>
    %244 = arith.truncf %243 : vector<8x8xf32> to vector<8x8xbf16>
    %cst_93 = arith.constant dense<0.000000e+00> : vector<8x8xf32>
    %245 = tpu.matmul %240, %242, %cst_93 {dimension_numbers = #tpu.dot_dimension_numbers<[1], [1], [0], [0], [0, 0, 1, 0], [], []>} : vector<8x8xbf16>, vector<8x8xbf16>, vector<8x8xf32> -> vector<8x8xf32>
    %cst_94 = arith.constant dense<0xFF800000> : vector<8xf32>
    %246 = vector.multi_reduction <maximumf>, %245, %cst_94 [1] : vector<8x8xf32> to vector<8xf32>
    %247 = vector.shape_cast %246 : vector<8xf32> to vector<8x1xf32>
    %248 = vector.broadcast %247 : vector<8x1xf32> to vector<8x8xf32>
    %249 = arith.subf %245, %248 : vector<8x8xf32>
    %250 = math.exp %249 : vector<8x8xf32>
    %cst_95 = arith.constant dense<0.000000e+00> : vector<8xf32>
    %251 = vector.multi_reduction <add>, %250, %cst_95 [1] : vector<8x8xf32> to vector<8xf32>
    %252 = vector.shape_cast %251 : vector<8xf32> to vector<8x1xf32>
    %253 = tpu.reciprocal %252 {approx = true} : vector<8x1xf32> -> vector<8x1xf32>
    %254 = vector.broadcast %253 : vector<8x1xf32> to vector<8x8xf32>
    %255 = arith.mulf %250, %254 : vector<8x8xf32>
    %256 = arith.truncf %255 : vector<8x8xf32> to vector<8x8xbf16>
    %cst_96 = arith.constant dense<0.000000e+00> : vector<8x8xf32>
    %257 = tpu.matmul %256, %244, %cst_96 {dimension_numbers = #tpu.dot_dimension_numbers<[1], [0], [0], [1], [0, 0, 1, 1], [], []>} : vector<8x8xbf16>, vector<8x8xbf16>, vector<8x8xf32> -> vector<8x8xf32>
    %258 = arith.truncf %257 : vector<8x8xf32> to vector<8x8xbf16>
    %259 = vector.extract_strided_slice %188 {offsets = [16, 0], sizes = [8, 32], strides = [1, 1]} : vector<32x32xbf16> to vector<8x32xbf16>
    %cst_97 = arith.constant dense<0.000000e+00> : vector<8x32xf32>
    %260 = tpu.matmul %258, %259, %cst_97 {dimension_numbers = #tpu.dot_dimension_numbers<[1], [0], [0], [1], [0, 0, 1, 1], [], []>} : vector<8x8xbf16>, vector<8x32xbf16>, vector<8x32xf32> -> vector<8x32xf32>
    %261 = arith.addf %238, %260 : vector<8x32xf32>
    %262 = vector.extract_strided_slice %186 {offsets = [0, 24], sizes = [8, 8], strides = [1, 1]} : vector<8x96xf32> to vector<8x8xf32>
    %263 = arith.truncf %262 : vector<8x8xf32> to vector<8x8xbf16>
    %264 = vector.extract_strided_slice %186 {offsets = [0, 56], sizes = [8, 8], strides = [1, 1]} : vector<8x96xf32> to vector<8x8xf32>
    %265 = arith.truncf %264 : vector<8x8xf32> to vector<8x8xbf16>
    %266 = vector.extract_strided_slice %186 {offsets = [0, 88], sizes = [8, 8], strides = [1, 1]} : vector<8x96xf32> to vector<8x8xf32>
    %267 = arith.truncf %266 : vector<8x8xf32> to vector<8x8xbf16>
    %cst_98 = arith.constant dense<0.000000e+00> : vector<8x8xf32>
    %268 = tpu.matmul %263, %265, %cst_98 {dimension_numbers = #tpu.dot_dimension_numbers<[1], [1], [0], [0], [0, 0, 1, 0], [], []>} : vector<8x8xbf16>, vector<8x8xbf16>, vector<8x8xf32> -> vector<8x8xf32>
    %cst_99 = arith.constant dense<0xFF800000> : vector<8xf32>
    %269 = vector.multi_reduction <maximumf>, %268, %cst_99 [1] : vector<8x8xf32> to vector<8xf32>
    %270 = vector.shape_cast %269 : vector<8xf32> to vector<8x1xf32>
    %271 = vector.broadcast %270 : vector<8x1xf32> to vector<8x8xf32>
    %272 = arith.subf %268, %271 : vector<8x8xf32>
    %273 = math.exp %272 : vector<8x8xf32>
    %cst_100 = arith.constant dense<0.000000e+00> : vector<8xf32>
    %274 = vector.multi_reduction <add>, %273, %cst_100 [1] : vector<8x8xf32> to vector<8xf32>
    %275 = vector.shape_cast %274 : vector<8xf32> to vector<8x1xf32>
    %276 = tpu.reciprocal %275 {approx = true} : vector<8x1xf32> -> vector<8x1xf32>
    %277 = vector.broadcast %276 : vector<8x1xf32> to vector<8x8xf32>
    %278 = arith.mulf %273, %277 : vector<8x8xf32>
    %279 = arith.truncf %278 : vector<8x8xf32> to vector<8x8xbf16>
    %cst_101 = arith.constant dense<0.000000e+00> : vector<8x8xf32>
    %280 = tpu.matmul %279, %267, %cst_101 {dimension_numbers = #tpu.dot_dimension_numbers<[1], [0], [0], [1], [0, 0, 1, 1], [], []>} : vector<8x8xbf16>, vector<8x8xbf16>, vector<8x8xf32> -> vector<8x8xf32>
    %281 = arith.truncf %280 : vector<8x8xf32> to vector<8x8xbf16>
    %282 = vector.extract_strided_slice %188 {offsets = [24, 0], sizes = [8, 32], strides = [1, 1]} : vector<32x32xbf16> to vector<8x32xbf16>
    %cst_102 = arith.constant dense<0.000000e+00> : vector<8x32xf32>
    %283 = tpu.matmul %281, %282, %cst_102 {dimension_numbers = #tpu.dot_dimension_numbers<[1], [0], [0], [1], [0, 0, 1, 1], [], []>} : vector<8x8xbf16>, vector<8x32xbf16>, vector<8x32xf32> -> vector<8x32xf32>
    %284 = arith.addf %261, %283 : vector<8x32xf32>
    %c1_103 = arith.constant 1 : index
    %c0_104 = arith.constant 0 : index
    %c0_105 = arith.constant 0 : index
    %285 = vector.load %arg6[%c1_103, %c0_104, %c0_105] : memref<2x1x32xf32, #tpu.memory_space<vmem>>, vector<1x1x32xf32>
    %286 = vector.shape_cast %285 : vector<1x1x32xf32> to vector<1x32xf32>
    %c1_106 = arith.constant 1 : index
    %c0_107 = arith.constant 0 : index
    %c0_108 = arith.constant 0 : index
    %287 = vector.load %arg7[%c1_106, %c0_107, %c0_108] : memref<2x1x32xf32, #tpu.memory_space<vmem>>, vector<1x1x32xf32>
    %288 = vector.shape_cast %287 : vector<1x1x32xf32> to vector<1x32xf32>
    %cst_109 = arith.constant dense<0.000000e+00> : vector<8xf32>
    %289 = vector.multi_reduction <add>, %284, %cst_109 [1] : vector<8x32xf32> to vector<8xf32>
    %290 = vector.shape_cast %289 : vector<8xf32> to vector<8x1xf32>
    %cst_110 = arith.constant 3.200000e+01 : f32
    %291 = vector.broadcast %cst_110 : f32 to vector<8x1xf32>
    %292 = arith.divf %290, %291 : vector<8x1xf32>
    %293 = vector.broadcast %292 : vector<8x1xf32> to vector<8x32xf32>
    %294 = arith.subf %284, %293 : vector<8x32xf32>
    %295 = arith.mulf %294, %294 : vector<8x32xf32>
    %cst_111 = arith.constant dense<0.000000e+00> : vector<8xf32>
    %296 = vector.multi_reduction <add>, %295, %cst_111 [1] : vector<8x32xf32> to vector<8xf32>
    %297 = vector.shape_cast %296 : vector<8xf32> to vector<8x1xf32>
    %cst_112 = arith.constant 3.200000e+01 : f32
    %298 = vector.broadcast %cst_112 : f32 to vector<8x1xf32>
    %299 = arith.divf %297, %298 : vector<8x1xf32>
    %300 = vector.broadcast %292 : vector<8x1xf32> to vector<8x32xf32>
    %301 = arith.subf %284, %300 : vector<8x32xf32>
    %cst_113 = arith.constant 9.99999974E-6 : f32
    %302 = vector.broadcast %cst_113 : f32 to vector<8x1xf32>
    %303 = arith.addf %299, %302 : vector<8x1xf32>
    %304 = math.rsqrt %303 : vector<8x1xf32>
    %305 = vector.broadcast %304 : vector<8x1xf32> to vector<8x32xf32>
    %306 = arith.mulf %301, %305 : vector<8x32xf32>
    %307 = vector.broadcast %286 : vector<1x32xf32> to vector<8x32xf32>
    %308 = arith.mulf %306, %307 : vector<8x32xf32>
    %309 = vector.broadcast %288 : vector<1x32xf32> to vector<8x32xf32>
    %310 = arith.addf %308, %309 : vector<8x32xf32>
    %311 = arith.truncf %310 : vector<8x32xf32> to vector<8x32xbf16>
    %c1_114 = arith.constant 1 : index
    %c0_115 = arith.constant 0 : index
    %c0_116 = arith.constant 0 : index
    %312 = vector.load %arg8[%c1_114, %c0_115, %c0_116] : memref<2x32x64xbf16, #tpu.memory_space<vmem>>, vector<1x32x64xbf16>
    %313 = vector.shape_cast %312 : vector<1x32x64xbf16> to vector<32x64xbf16>
    %cst_117 = arith.constant dense<0.000000e+00> : vector<8x64xf32>
    %314 = tpu.matmul %311, %313, %cst_117 {dimension_numbers = #tpu.dot_dimension_numbers<[1], [0], [0], [1], [0, 0, 1, 1], [], []>} : vector<8x32xbf16>, vector<32x64xbf16>, vector<8x64xf32> -> vector<8x64xf32>
    %c1_118 = arith.constant 1 : index
    %c0_119 = arith.constant 0 : index
    %c0_120 = arith.constant 0 : index
    %315 = vector.load %arg9[%c1_118, %c0_119, %c0_120] : memref<2x1x64xf32, #tpu.memory_space<vmem>>, vector<1x1x64xf32>
    %316 = vector.shape_cast %315 : vector<1x1x64xf32> to vector<1x64xf32>
    %317 = vector.broadcast %316 : vector<1x64xf32> to vector<8x64xf32>
    %318 = arith.addf %314, %317 : vector<8x64xf32>
    %cst_121 = arith.constant 0.000000e+00 : f32
    %319 = vector.broadcast %cst_121 : f32 to vector<8x64xf32>
    %320 = arith.maximumf %318, %319 : vector<8x64xf32>
    %321 = arith.truncf %320 : vector<8x64xf32> to vector<8x64xbf16>
    %c1_122 = arith.constant 1 : index
    %c0_123 = arith.constant 0 : index
    %c0_124 = arith.constant 0 : index
    %322 = vector.load %arg10[%c1_122, %c0_123, %c0_124] : memref<2x64x32xbf16, #tpu.memory_space<vmem>>, vector<1x64x32xbf16>
    %323 = vector.shape_cast %322 : vector<1x64x32xbf16> to vector<64x32xbf16>
    %cst_125 = arith.constant dense<0.000000e+00> : vector<8x32xf32>
    %324 = tpu.matmul %321, %323, %cst_125 {dimension_numbers = #tpu.dot_dimension_numbers<[1], [0], [0], [1], [0, 0, 1, 1], [], []>} : vector<8x64xbf16>, vector<64x32xbf16>, vector<8x32xf32> -> vector<8x32xf32>
    %c1_126 = arith.constant 1 : index
    %c0_127 = arith.constant 0 : index
    %c0_128 = arith.constant 0 : index
    %325 = vector.load %arg11[%c1_126, %c0_127, %c0_128] : memref<2x1x32xf32, #tpu.memory_space<vmem>>, vector<1x1x32xf32>
    %326 = vector.shape_cast %325 : vector<1x1x32xf32> to vector<1x32xf32>
    %327 = vector.broadcast %326 : vector<1x32xf32> to vector<8x32xf32>
    %328 = arith.addf %324, %327 : vector<8x32xf32>
    %329 = arith.addf %310, %328 : vector<8x32xf32>
    %c1_129 = arith.constant 1 : index
    %c0_130 = arith.constant 0 : index
    %c0_131 = arith.constant 0 : index
    %330 = vector.load %arg12[%c1_129, %c0_130, %c0_131] : memref<2x1x32xf32, #tpu.memory_space<vmem>>, vector<1x1x32xf32>
    %331 = vector.shape_cast %330 : vector<1x1x32xf32> to vector<1x32xf32>
    %c1_132 = arith.constant 1 : index
    %c0_133 = arith.constant 0 : index
    %c0_134 = arith.constant 0 : index
    %332 = vector.load %arg13[%c1_132, %c0_133, %c0_134] : memref<2x1x32xf32, #tpu.memory_space<vmem>>, vector<1x1x32xf32>
    %333 = vector.shape_cast %332 : vector<1x1x32xf32> to vector<1x32xf32>
    %cst_135 = arith.constant dense<0.000000e+00> : vector<8xf32>
    %334 = vector.multi_reduction <add>, %329, %cst_135 [1] : vector<8x32xf32> to vector<8xf32>
    %335 = vector.shape_cast %334 : vector<8xf32> to vector<8x1xf32>
    %cst_136 = arith.constant 3.200000e+01 : f32
    %336 = vector.broadcast %cst_136 : f32 to vector<8x1xf32>
    %337 = arith.divf %335, %336 : vector<8x1xf32>
    %338 = vector.broadcast %337 : vector<8x1xf32> to vector<8x32xf32>
    %339 = arith.subf %329, %338 : vector<8x32xf32>
    %340 = arith.mulf %339, %339 : vector<8x32xf32>
    %cst_137 = arith.constant dense<0.000000e+00> : vector<8xf32>
    %341 = vector.multi_reduction <add>, %340, %cst_137 [1] : vector<8x32xf32> to vector<8xf32>
    %342 = vector.shape_cast %341 : vector<8xf32> to vector<8x1xf32>
    %cst_138 = arith.constant 3.200000e+01 : f32
    %343 = vector.broadcast %cst_138 : f32 to vector<8x1xf32>
    %344 = arith.divf %342, %343 : vector<8x1xf32>
    %345 = vector.broadcast %337 : vector<8x1xf32> to vector<8x32xf32>
    %346 = arith.subf %329, %345 : vector<8x32xf32>
    %cst_139 = arith.constant 9.99999974E-6 : f32
    %347 = vector.broadcast %cst_139 : f32 to vector<8x1xf32>
    %348 = arith.addf %344, %347 : vector<8x1xf32>
    %349 = math.rsqrt %348 : vector<8x1xf32>
    %350 = vector.broadcast %349 : vector<8x1xf32> to vector<8x32xf32>
    %351 = arith.mulf %346, %350 : vector<8x32xf32>
    %352 = vector.broadcast %331 : vector<1x32xf32> to vector<8x32xf32>
    %353 = arith.mulf %351, %352 : vector<8x32xf32>
    %354 = vector.broadcast %333 : vector<1x32xf32> to vector<8x32xf32>
    %355 = arith.addf %353, %354 : vector<8x32xf32>
    %c0_140 = arith.constant 0 : index
    %c0_141 = arith.constant 0 : index
    %356 = vector.load %arg14[%c0_140, %c0_141] : memref<1x32xf32, #tpu.memory_space<vmem>>, vector<1x32xf32>
    %c0_142 = arith.constant 0 : index
    %c0_143 = arith.constant 0 : index
    %357 = vector.load %arg15[%c0_142, %c0_143] : memref<1x32xf32, #tpu.memory_space<vmem>>, vector<1x32xf32>
    %cst_144 = arith.constant dense<0.000000e+00> : vector<8xf32>
    %358 = vector.multi_reduction <add>, %355, %cst_144 [1] : vector<8x32xf32> to vector<8xf32>
    %359 = vector.shape_cast %358 : vector<8xf32> to vector<8x1xf32>
    %cst_145 = arith.constant 3.200000e+01 : f32
    %360 = vector.broadcast %cst_145 : f32 to vector<8x1xf32>
    %361 = arith.divf %359, %360 : vector<8x1xf32>
    %362 = vector.broadcast %361 : vector<8x1xf32> to vector<8x32xf32>
    %363 = arith.subf %355, %362 : vector<8x32xf32>
    %364 = arith.mulf %363, %363 : vector<8x32xf32>
    %cst_146 = arith.constant dense<0.000000e+00> : vector<8xf32>
    %365 = vector.multi_reduction <add>, %364, %cst_146 [1] : vector<8x32xf32> to vector<8xf32>
    %366 = vector.shape_cast %365 : vector<8xf32> to vector<8x1xf32>
    %cst_147 = arith.constant 3.200000e+01 : f32
    %367 = vector.broadcast %cst_147 : f32 to vector<8x1xf32>
    %368 = arith.divf %366, %367 : vector<8x1xf32>
    %369 = vector.broadcast %361 : vector<8x1xf32> to vector<8x32xf32>
    %370 = arith.subf %355, %369 : vector<8x32xf32>
    %cst_148 = arith.constant 9.99999974E-6 : f32
    %371 = vector.broadcast %cst_148 : f32 to vector<8x1xf32>
    %372 = arith.addf %368, %371 : vector<8x1xf32>
    %373 = math.rsqrt %372 : vector<8x1xf32>
    %374 = vector.broadcast %373 : vector<8x1xf32> to vector<8x32xf32>
    %375 = arith.mulf %370, %374 : vector<8x32xf32>
    %376 = vector.broadcast %356 : vector<1x32xf32> to vector<8x32xf32>
    %377 = arith.mulf %375, %376 : vector<8x32xf32>
    %378 = vector.broadcast %357 : vector<1x32xf32> to vector<8x32xf32>
    %379 = arith.addf %377, %378 : vector<8x32xf32>
    %c0_149 = arith.constant 0 : index
    %c0_150 = arith.constant 0 : index
    %c0_151 = arith.constant 0 : index
    %380 = vector.load %arg16[%c0_149, %c0_150, %c0_151] : memref<1x8x32xf32, #tpu.memory_space<vmem>>, vector<1x8x32xf32>
    %381 = vector.shape_cast %380 : vector<1x8x32xf32> to vector<8x32xf32>
    %382 = vector.shape_cast %379 : vector<8x32xf32> to vector<1x8x32xf32>
    tpu.vector_store %arg16[%c0_149, %c0_150, %c0_151], %382 {strides = array<i32>} : memref<1x8x32xf32, #tpu.memory_space<vmem>>, vector<1x8x32xf32>,
    return
  }
  func.func @transform_0(%arg0: i32) -> (i32, i32, i32) {
    %c0_i32 = arith.constant 0 : i32
    %c0_i32_0 = arith.constant 0 : i32
    %c0_i32_1 = arith.constant 0 : i32
    return %arg0, %c0_i32, %c0_i32_0 : i32, i32, i32
  }
  func.func @transform_1(%arg0: i32) -> (i32, i32, i32) {
    %c0_i32 = arith.constant 0 : i32
    %c0_i32_0 = arith.constant 0 : i32
    %c0_i32_1 = arith.constant 0 : i32
    %c0_i32_2 = arith.constant 0 : i32
    return %c0_i32, %c0_i32_0, %c0_i32_1 : i32, i32, i32
  }
  func.func @transform_2(%arg0: i32) -> (i32, i32, i32) {
    %c0_i32 = arith.constant 0 : i32
    %c0_i32_0 = arith.constant 0 : i32
    %c0_i32_1 = arith.constant 0 : i32
    %c0_i32_2 = arith.constant 0 : i32
    return %c0_i32, %c0_i32_0, %c0_i32_1 : i32, i32, i32
  }
  func.func @transform_3(%arg0: i32) -> (i32, i32, i32) {
    %c0_i32 = arith.constant 0 : i32
    %c0_i32_0 = arith.constant 0 : i32
    %c0_i32_1 = arith.constant 0 : i32
    %c0_i32_2 = arith.constant 0 : i32
    return %c0_i32, %c0_i32_0, %c0_i32_1 : i32, i32, i32
  }
  func.func @transform_4(%arg0: i32) -> (i32, i32, i32) {
    %c0_i32 = arith.constant 0 : i32
    %c0_i32_0 = arith.constant 0 : i32
    %c0_i32_1 = arith.constant 0 : i32
    %c0_i32_2 = arith.constant 0 : i32
    return %c0_i32, %c0_i32_0, %c0_i32_1 : i32, i32, i32
  }
  func.func @transform_5(%arg0: i32) -> (i32, i32, i32) {
    %c0_i32 = arith.constant 0 : i32
    %c0_i32_0 = arith.constant 0 : i32
    %c0_i32_1 = arith.constant 0 : i32
    %c0_i32_2 = arith.constant 0 : i32
    return %c0_i32, %c0_i32_0, %c0_i32_1 : i32, i32, i32
  }
  func.func @transform_6(%arg0: i32) -> (i32, i32, i32) {
    %c0_i32 = arith.constant 0 : i32
    %c0_i32_0 = arith.constant 0 : i32
    %c0_i32_1 = arith.constant 0 : i32
    %c0_i32_2 = arith.constant 0 : i32
    return %c0_i32, %c0_i32_0, %c0_i32_1 : i32, i32, i32
  }
  func.func @transform_7(%arg0: i32) -> (i32, i32, i32) {
    %c0_i32 = arith.constant 0 : i32
    %c0_i32_0 = arith.constant 0 : i32
    %c0_i32_1 = arith.constant 0 : i32
    %c0_i32_2 = arith.constant 0 : i32
    return %c0_i32, %c0_i32_0, %c0_i32_1 : i32, i32, i32
  }
  func.func @transform_8(%arg0: i32) -> (i32, i32, i32) {
    %c0_i32 = arith.constant 0 : i32
    %c0_i32_0 = arith.constant 0 : i32
    %c0_i32_1 = arith.constant 0 : i32
    %c0_i32_2 = arith.constant 0 : i32
    return %c0_i32, %c0_i32_0, %c0_i32_1 : i32, i32, i32
  }
  func.func @transform_9(%arg0: i32) -> (i32, i32, i32) {
    %c0_i32 = arith.constant 0 : i32
    %c0_i32_0 = arith.constant 0 : i32
    %c0_i32_1 = arith.constant 0 : i32
    %c0_i32_2 = arith.constant 0 : i32
    return %c0_i32, %c0_i32_0, %c0_i32_1 : i32, i32, i32
  }
  func.func @transform_10(%arg0: i32) -> (i32, i32, i32) {
    %c0_i32 = arith.constant 0 : i32
    %c0_i32_0 = arith.constant 0 : i32
    %c0_i32_1 = arith.constant 0 : i32
    %c0_i32_2 = arith.constant 0 : i32
    return %c0_i32, %c0_i32_0, %c0_i32_1 : i32, i32, i32
  }
  func.func @transform_11(%arg0: i32) -> (i32, i32, i32) {
    %c0_i32 = arith.constant 0 : i32
    %c0_i32_0 = arith.constant 0 : i32
    %c0_i32_1 = arith.constant 0 : i32
    %c0_i32_2 = arith.constant 0 : i32
    return %c0_i32, %c0_i32_0, %c0_i32_1 : i32, i32, i32
  }
  func.func @transform_12(%arg0: i32) -> (i32, i32, i32) {
    %c0_i32 = arith.constant 0 : i32
    %c0_i32_0 = arith.constant 0 : i32
    %c0_i32_1 = arith.constant 0 : i32
    %c0_i32_2 = arith.constant 0 : i32
    return %c0_i32, %c0_i32_0, %c0_i32_1 : i32, i32, i32
  }
  func.func @transform_13(%arg0: i32) -> (i32, i32) {
    %c0_i32 = arith.constant 0 : i32
    %c0_i32_0 = arith.constant 0 : i32
    %c0_i32_1 = arith.constant 0 : i32
    return %c0_i32, %c0_i32_0 : i32, i32
  }
  func.func @transform_14(%arg0: i32) -> (i32, i32) {
    %c0_i32 = arith.constant 0 : i32
    %c0_i32_0 = arith.constant 0 : i32
    %c0_i32_1 = arith.constant 0 : i32
    return %c0_i32, %c0_i32_0 : i32, i32
  }
  func.func @transform_15(%arg0: i32) -> (i32, i32, i32) {
    %c0_i32 = arith.constant 0 : i32
    %c0_i32_0 = arith.constant 0 : i32
    %c0_i32_1 = arith.constant 0 : i32
    return %arg0, %c0_i32, %c0_i32_0 : i32, i32, i32
  }
}

</mosaic_0001>

<llo_original>
// kernel: tpu_custom_call.1
$region0: #{tpu_custom_call.1}
  #allocation0 [shape = 'u32[]', space=smem, size = 0x4, offset = 0x4, fixed_abs, tag = 'smem constant byte address 0x4 - core index']
  #allocation1 [shape = 'u32[144,128]{1,0:T(1,128)}', space=vmem, size = 0x12000, scoped, tag = 'internal scratch']
  %s0 = inlined_call_operand.hbm [shape: f32[2,8,32], index: 0, kind: input, shape index: {}]
  %s1 = inlined_call_operand.vmem [shape: bf16[2,32,96], index: 1, kind: input, shape index: {}]
  %s2 = inlined_call_operand.vmem [shape: f32[2,1,96], index: 2, kind: input, shape index: {}]
  %s3 = inlined_call_operand.vmem [shape: bf16[2,32,32], index: 3, kind: input, shape index: {}]
  %s4 = inlined_call_operand.hbm [shape: f32[2,1,32], index: 4, kind: input, shape index: {}]
  %s5 = inlined_call_operand.hbm [shape: f32[2,1,32], index: 5, kind: input, shape index: {}]
  %s6 = inlined_call_operand.hbm [shape: f32[2,1,32], index: 6, kind: input, shape index: {}]
  %s7 = inlined_call_operand.vmem [shape: bf16[2,32,64], index: 7, kind: input, shape index: {}]
  %s8 = inlined_call_operand.hbm [shape: f32[2,1,64], index: 8, kind: input, shape index: {}]
  %s9 = inlined_call_operand.vmem [shape: bf16[2,64,32], index: 9, kind: input, shape index: {}]
  %s10 = inlined_call_operand.vmem [shape: f32[2,1,32], index: 10, kind: input, shape index: {}]
  %s11 = inlined_call_operand.vmem [shape: f32[2,1,32], index: 11, kind: input, shape index: {}]
  %s12 = inlined_call_operand.vmem [shape: f32[2,1,32], index: 12, kind: input, shape index: {}]
  %s13 = inlined_call_operand.vmem [shape: f32[1,32], index: 13, kind: input, shape index: {}]
  %s14 = inlined_call_operand.vmem [shape: f32[1,32], index: 14, kind: input, shape index: {}]
  %s15 = inlined_call_operand.hbm [shape: f32[2,8,32], index: 15, kind: output, shape index: {}]
  %s16 = sld [smem:[#allocation0]]
  $region113: #{tpu_custom_call.1} parent=0
    _
  %s18 = ssub.s32 1, %s16
  %s19 = scalar_select 0, %s18, %s16
  $region1: #{tpu_custom_call.1} parent=0
    #allocation2 [shape = 'u8[8192]{0}', space=vmem, size = 0x2000, scoped, tag = 'input window, operand 0']
    #allocation3 [shape = 's32[2]{0}', space=sflag, size = 0x8, scoped, tag = 'scoped memory for tpu_custom_call.1']
    #allocation4 [shape = 's32[2]{0}', space=sflag, size = 0x8, scoped, tag = 'scoped memory for tpu_custom_call.1']
    #allocation5 [shape = 'u8[1024]{0}', space=vmem, size = 0x400, scoped, tag = 'input window, operand 4, single buffered']
    #allocation6 [shape = 's32[1]{0}', space=sflag, size = 0x4, scoped, tag = 'scoped memory for tpu_custom_call.1']
    #allocation7 [shape = 'u8[1024]{0}', space=vmem, size = 0x400, scoped, tag = 'input window, operand 5, single buffered']
    #allocation8 [shape = 'u8[1024]{0}', space=vmem, size = 0x400, scoped, tag = 'input window, operand 6, single buffered']
    #allocation9 [shape = 's32[1]{0}', space=sflag, size = 0x4, scoped, tag = 'scoped memory for tpu_custom_call.1']
    #allocation10 [shape = 'u8[1024]{0}', space=vmem, size = 0x400, scoped, tag = 'input window, operand 8, single buffered']
    #allocation11 [shape = 'u8[8192]{0}', space=vmem, size = 0x2000, scoped, tag = 'output window, operand 0']
    %20 = vsyncpa [#allocation3], 0
    %s21 = scalar_lea.sflag [#allocation3], 1
    %22 = vsyncpa %s21, 0
    %23 = vsyncpa [#allocation6], 0
    %24 = vsyncpa [#allocation9], 0
    %25 = vsyncpa [#allocation4], 0
    %s26 = scalar_lea.sflag [#allocation4], 1
    %27 = vsyncpa %s26, 0
    loop: start=0, step=1, limit=4
    $region2: #{tpu_custom_call.1} parent=1 // loop_pre_header
      _
    $region3: #{tpu_custom_call.1} parent=1 // loop_header
      %s29 = sphi 0, %s33
      %p30 = scmp.ge.s32.totalorder %s29, 4
      %s39 = sphi 0, %s41
      %s42 = sphi 0, %s39
      %s43 = sphi 0, %s42
      %s59 = sphi 0, %s43
      %s63 = sphi 0, %s63
      %s65 = sphi 0, %s63
      %s66 = sphi 0, %s65
      %s80 = sphi 0, %s66
      %s84 = sphi 0, %s84
      %s86 = sphi 0, %s84
      %s87 = sphi 0, %s86
      %s101 = sphi 0, %s87
      %s105 = sphi 0, %s105
      %s107 = sphi 0, %s105
      %s108 = sphi 0, %s107
      %s122 = sphi 0, %s108
      %s126 = sphi 0, %s126
      %s128 = sphi 0, %s126
      %s129 = sphi 0, %s128
      %s143 = sphi 0, %s129
      %s147 = sphi 0, %s147
      %s149 = sphi 0, %s147
      %s150 = sphi 0, %s149
      %s164 = sphi 0, %s150
      %s168 = sphi 0, %s168
      %s170 = sphi 0, %s168
      %s171 = sphi 0, %s170
      %s185 = sphi 0, %s171
      %s189 = sphi 0, %s189
      %s191 = sphi 0, %s189
      %s192 = sphi 0, %s191
      %s206 = sphi 0, %s192
      %s210 = sphi 0, %s210
      %s212 = sphi 0, %s210
      %s213 = sphi 0, %s212
      %s227 = sphi 0, %s213
      %s231 = sphi 0, %s231
      %s233 = sphi 0, %s231
      %s234 = sphi 0, %s233
      %s248 = sphi 0, %s234
      %s252 = sphi 0, %s252
      %s254 = sphi 0, %s252
      %s255 = sphi 0, %s254
      %s269 = sphi 0, %s255
      %s273 = sphi 0, %s273
      %s275 = sphi 0, %s273
      %s276 = sphi 0, %s275
      %s290 = sphi 0, %s276
      %s294 = sphi 0, %s294
      %s296 = sphi 0, %s294
      %s297 = sphi 0, %s296
      %s311 = sphi 0, %s297
      %s315 = sphi 0, %s315
      %s317 = sphi 0, %s315
      %s318 = sphi 0, %s317
      %s332 = sphi 0, %s318
      %s336 = sphi 0, %s336
      %s338 = sphi 0, %s336
      %s339 = sphi 0, %s338
      %s353 = sphi 0, %s339
      %s359 = sphi 0, %s361
      %s362 = sphi 0, %s359
      %s363 = sphi 0, %s362
      %s379 = sphi 0, %s363
    $region4: #{tpu_custom_call.1} parent=1 // loop_header_branch
      %32 = sbr.rel (%p30) target = $region8
    $region5: #{tpu_custom_call.1} parent=1 // loop_body
      %s34 = ssub.s32 %s29, 1
      %s35 = ssub.s32 %s29, 2
      %s36 = sadd.s32 %s29, 1
      %s37 = ssub.s32 %s29, %s36
      %p38 = scmp.eq.s32.totalorder %s37, 0
      %s40 = sadd.s32 %s39, 1
      %s41 = scalar_select %p38, %s39, %s40
      %p44 = pneg %p38
      %p45 = scmp.eq.s32.totalorder %s29, 1
      %p46 = por %p44, %p45
      %p47 = scmp.ne.s32.totalorder %s39, %s42
      %p48 = scmp.eq.s32.totalorder %s29, 0
      %p49 = por %p47, %p48
      %p50 = scmp.ne.s32.totalorder %s39, %s42
      %p51 = scmp.eq.s32.totalorder %s34, 1
      %p52 = por %p50, %p51
      %p53 = scmp.ne.s32.totalorder %s42, %s43
      %p54 = scmp.eq.s32.totalorder %s34, 0
      %p55 = por %p53, %p54
      %p56 = scmp.ne.s32.totalorder %s42, %s43
      %p57 = scmp.eq.s32.totalorder %s35, 1
      %p58 = por %p56, %p57
      %p60 = scmp.ne.s32.totalorder %s43, %s59
      %p61 = scmp.eq.s32.totalorder %s35, 0
      %p62 = por %p60, %p61
      %s64 = sadd.s32 %s63, 1
      %p67 = scmp.eq.s32.totalorder %s29, 1
      %p68 = scmp.ne.s32.totalorder %s63, %s65
      %p69 = scmp.eq.s32.totalorder %s29, 0
      %p70 = por %p68, %p69
      %p71 = scmp.ne.s32.totalorder %s63, %s65
      %p72 = scmp.eq.s32.totalorder %s34, 1
      %p73 = por %p71, %p72
      %p74 = scmp.ne.s32.totalorder %s65, %s66
      %p75 = scmp.eq.s32.totalorder %s34, 0
      %p76 = por %p74, %p75
      %p77 = scmp.ne.s32.totalorder %s65, %s66
      %p78 = scmp.eq.s32.totalorder %s35, 1
      %p79 = por %p77, %p78
      %p81 = scmp.ne.s32.totalorder %s66, %s80
      %p82 = scmp.eq.s32.totalorder %s35, 0
      %p83 = por %p81, %p82
      %s85 = sadd.s32 %s84, 1
      %p88 = scmp.eq.s32.totalorder %s29, 1
      %p89 = scmp.ne.s32.totalorder %s84, %s86
      %p90 = scmp.eq.s32.totalorder %s29, 0
      %p91 = por %p89, %p90
      %p92 = scmp.ne.s32.totalorder %s84, %s86
      %p93 = scmp.eq.s32.totalorder %s34, 1
      %p94 = por %p92, %p93
      %p95 = scmp.ne.s32.totalorder %s86, %s87
      %p96 = scmp.eq.s32.totalorder %s34, 0
      %p97 = por %p95, %p96
      %p98 = scmp.ne.s32.totalorder %s86, %s87
      %p99 = scmp.eq.s32.totalorder %s35, 1
      %p100 = por %p98, %p99
      %p102 = scmp.ne.s32.totalorder %s87, %s101
      %p103 = scmp.eq.s32.totalorder %s35, 0
      %p104 = por %p102, %p103
      %s106 = sadd.s32 %s105, 1
      %p109 = scmp.eq.s32.totalorder %s29, 1
      %p110 = scmp.ne.s32.totalorder %s105, %s107
      %p111 = scmp.eq.s32.totalorder %s29, 0
      %p112 = por %p110, %p111
      %p113 = scmp.ne.s32.totalorder %s105, %s107
      %p114 = scmp.eq.s32.totalorder %s34, 1
      %p115 = por %p113, %p114
      %p116 = scmp.ne.s32.totalorder %s107, %s108
      %p117 = scmp.eq.s32.totalorder %s34, 0
      %p118 = por %p116, %p117
      %p119 = scmp.ne.s32.totalorder %s107, %s108
      %p120 = scmp.eq.s32.totalorder %s35, 1
      %p121 = por %p119, %p120
      %p123 = scmp.ne.s32.totalorder %s108, %s122
      %p124 = scmp.eq.s32.totalorder %s35, 0
      %p125 = por %p123, %p124
      %s127 = sadd.s32 %s126, 1
      %p130 = scmp.eq.s32.totalorder %s29, 1
      %p131 = scmp.ne.s32.totalorder %s126, %s128
      %p132 = scmp.eq.s32.totalorder %s29, 0
      %p133 = por %p131, %p132
      %p134 = scmp.ne.s32.totalorder %s126, %s128
      %p135 = scmp.eq.s32.totalorder %s34, 1
      %p136 = por %p134, %p135
      %p137 = scmp.ne.s32.totalorder %s128, %s129
      %p138 = scmp.eq.s32.totalorder %s34, 0
      %p139 = por %p137, %p138
      %p140 = scmp.ne.s32.totalorder %s128, %s129
      %p141 = scmp.eq.s32.totalorder %s35, 1
      %p142 = por %p140, %p141
      %p144 = scmp.ne.s32.totalorder %s129, %s143
      %p145 = scmp.eq.s32.totalorder %s35, 0
      %p146 = por %p144, %p145
      %s148 = sadd.s32 %s147, 1
      %p151 = scmp.eq.s32.totalorder %s29, 1
      %p152 = scmp.ne.s32.totalorder %s147, %s149
      %p153 = scmp.eq.s32.totalorder %s29, 0
      %p154 = por %p152, %p153
      %p155 = scmp.ne.s32.totalorder %s147, %s149
      %p156 = scmp.eq.s32.totalorder %s34, 1
      %p157 = por %p155, %p156
      %p158 = scmp.ne.s32.totalorder %s149, %s150
      %p159 = scmp.eq.s32.totalorder %s34, 0
      %p160 = por %p158, %p159
      %p161 = scmp.ne.s32.totalorder %s149, %s150
      %p162 = scmp.eq.s32.totalorder %s35, 1
      %p163 = por %p161, %p162
      %p165 = scmp.ne.s32.totalorder %s150, %s164
      %p166 = scmp.eq.s32.totalorder %s35, 0
      %p167 = por %p165, %p166
      %s169 = sadd.s32 %s168, 1
      %p172 = scmp.eq.s32.totalorder %s29, 1
      %p173 = scmp.ne.s32.totalorder %s168, %s170
      %p174 = scmp.eq.s32.totalorder %s29, 0
      %p175 = por %p173, %p174
      %p176 = scmp.ne.s32.totalorder %s168, %s170
      %p177 = scmp.eq.s32.totalorder %s34, 1
      %p178 = por %p176, %p177
      %p179 = scmp.ne.s32.totalorder %s170, %s171
      %p180 = scmp.eq.s32.totalorder %s34, 0
      %p181 = por %p179, %p180
      %p182 = scmp.ne.s32.totalorder %s170, %s171
      %p183 = scmp.eq.s32.totalorder %s35, 1
      %p184 = por %p182, %p183
      %p186 = scmp.ne.s32.totalorder %s171, %s185
      %p187 = scmp.eq.s32.totalorder %s35, 0
      %p188 = por %p186, %p187
      %s190 = sadd.s32 %s189, 1
      %p193 = scmp.eq.s32.totalorder %s29, 1
      %p194 = scmp.ne.s32.totalorder %s189, %s191
      %p195 = scmp.eq.s32.totalorder %s29, 0
      %p196 = por %p194, %p195
      %p197 = scmp.ne.s32.totalorder %s189, %s191
      %p198 = scmp.eq.s32.totalorder %s34, 1
      %p199 = por %p197, %p198
      %p200 = scmp.ne.s32.totalorder %s191, %s192
      %p201 = scmp.eq.s32.totalorder %s34, 0
      %p202 = por %p200, %p201
      %p203 = scmp.ne.s32.totalorder %s191, %s192
      %p204 = scmp.eq.s32.totalorder %s35, 1
      %p205 = por %p203, %p204
      %p207 = scmp.ne.s32.totalorder %s192, %s206
      %p208 = scmp.eq.s32.totalorder %s35, 0
      %p209 = por %p207, %p208
      %s211 = sadd.s32 %s210, 1
      %p214 = scmp.eq.s32.totalorder %s29, 1
      %p215 = scmp.ne.s32.totalorder %s210, %s212
      %p216 = scmp.eq.s32.totalorder %s29, 0
      %p217 = por %p215, %p216
      %p218 = scmp.ne.s32.totalorder %s210, %s212
      %p219 = scmp.eq.s32.totalorder %s34, 1
      %p220 = por %p218, %p219
      %p221 = scmp.ne.s32.totalorder %s212, %s213
      %p222 = scmp.eq.s32.totalorder %s34, 0
      %p223 = por %p221, %p222
      %p224 = scmp.ne.s32.totalorder %s212, %s213
      %p225 = scmp.eq.s32.totalorder %s35, 1
      %p226 = por %p224, %p225
      %p228 = scmp.ne.s32.totalorder %s213, %s227
      %p229 = scmp.eq.s32.totalorder %s35, 0
      %p230 = por %p228, %p229
      %s232 = sadd.s32 %s231, 1
      %p235 = scmp.eq.s32.totalorder %s29, 1
      %p236 = scmp.ne.s32.totalorder %s231, %s233
      %p237 = scmp.eq.s32.totalorder %s29, 0
      %p238 = por %p236, %p237
      %p239 = scmp.ne.s32.totalorder %s231, %s233
      %p240 = scmp.eq.s32.totalorder %s34, 1
      %p241 = por %p239, %p240
      %p242 = scmp.ne.s32.totalorder %s233, %s234
      %p243 = scmp.eq.s32.totalorder %s34, 0
      %p244 = por %p242, %p243
      %p245 = scmp.ne.s32.totalorder %s233, %s234
      %p246 = scmp.eq.s32.totalorder %s35, 1
      %p247 = por %p245, %p246
      %p249 = scmp.ne.s32.totalorder %s234, %s248
      %p250 = scmp.eq.s32.totalorder %s35, 0
      %p251 = por %p249, %p250
      %s253 = sadd.s32 %s252, 1
      %p256 = scmp.eq.s32.totalorder %s29, 1
      %p257 = scmp.ne.s32.totalorder %s252, %s254
      %p258 = scmp.eq.s32.totalorder %s29, 0
      %p259 = por %p257, %p258
      %p260 = scmp.ne.s32.totalorder %s252, %s254
      %p261 = scmp.eq.s32.totalorder %s34, 1
      %p262 = por %p260, %p261
      %p263 = scmp.ne.s32.totalorder %s254, %s255
      %p264 = scmp.eq.s32.totalorder %s34, 0
      %p265 = por %p263, %p264
      %p266 = scmp.ne.s32.totalorder %s254, %s255
      %p267 = scmp.eq.s32.totalorder %s35, 1
      %p268 = por %p266, %p267
      %p270 = scmp.ne.s32.totalorder %s255, %s269
      %p271 = scmp.eq.s32.totalorder %s35, 0
      %p272 = por %p270, %p271
      %s274 = sadd.s32 %s273, 1
      %p277 = scmp.eq.s32.totalorder %s29, 1
      %p278 = scmp.ne.s32.totalorder %s273, %s275
      %p279 = scmp.eq.s32.totalorder %s29, 0
      %p280 = por %p278, %p279
      %p281 = scmp.ne.s32.totalorder %s273, %s275
      %p282 = scmp.eq.s32.totalorder %s34, 1
      %p283 = por %p281, %p282
      %p284 = scmp.ne.s32.totalorder %s275, %s276
      %p285 = scmp.eq.s32.totalorder %s34, 0
      %p286 = por %p284, %p285
      %p287 = scmp.ne.s32.totalorder %s275, %s276
      %p288 = scmp.eq.s32.totalorder %s35, 1
      %p289 = por %p287, %p288
      %p291 = scmp.ne.s32.totalorder %s276, %s290
      %p292 = scmp.eq.s32.totalorder %s35, 0
      %p293 = por %p291, %p292
      %s295 = sadd.s32 %s294, 1
      %p298 = scmp.eq.s32.totalorder %s29, 1
      %p299 = scmp.ne.s32.totalorder %s294, %s296
      %p300 = scmp.eq.s32.totalorder %s29, 0
      %p301 = por %p299, %p300
      %p302 = scmp.ne.s32.totalorder %s294, %s296
      %p303 = scmp.eq.s32.totalorder %s34, 1
      %p304 = por %p302, %p303
      %p305 = scmp.ne.s32.totalorder %s296, %s297
      %p306 = scmp.eq.s32.totalorder %s34, 0
      %p307 = por %p305, %p306
      %p308 = scmp.ne.s32.totalorder %s296, %s297
      %p309 = scmp.eq.s32.totalorder %s35, 1
      %p310 = por %p308, %p309
      %p312 = scmp.ne.s32.totalorder %s297, %s311
      %p313 = scmp.eq.s32.totalorder %s35, 0
      %p314 = por %p312, %p313
      %s316 = sadd.s32 %s315, 1
      %p319 = scmp.eq.s32.totalorder %s29, 1
      %p320 = scmp.ne.s32.totalorder %s315, %s317
      %p321 = scmp.eq.s32.totalorder %s29, 0
      %p322 = por %p320, %p321
      %p323 = scmp.ne.s32.totalorder %s315, %s317
      %p324 = scmp.eq.s32.totalorder %s34, 1
      %p325 = por %p323, %p324
      %p326 = scmp.ne.s32.totalorder %s317, %s318
      %p327 = scmp.eq.s32.totalorder %s34, 0
      %p328 = por %p326, %p327
      %p329 = scmp.ne.s32.totalorder %s317, %s318
      %p330 = scmp.eq.s32.totalorder %s35, 1
      %p331 = por %p329, %p330
      %p333 = scmp.ne.s32.totalorder %s318, %s332
      %p334 = scmp.eq.s32.totalorder %s35, 0
      %p335 = por %p333, %p334
      %s337 = sadd.s32 %s336, 1
      %p340 = scmp.eq.s32.totalorder %s29, 1
      %p341 = scmp.ne.s32.totalorder %s336, %s338
      %p342 = scmp.eq.s32.totalorder %s29, 0
      %p343 = por %p341, %p342
      %p344 = scmp.ne.s32.totalorder %s336, %s338
      %p345 = scmp.eq.s32.totalorder %s34, 1
      %p346 = por %p344, %p345
      %p347 = scmp.ne.s32.totalorder %s338, %s339
      %p348 = scmp.eq.s32.totalorder %s34, 0
      %p349 = por %p347, %p348
      %p350 = scmp.ne.s32.totalorder %s338, %s339
      %p351 = scmp.eq.s32.totalorder %s35, 1
      %p352 = por %p350, %p351
      %p354 = scmp.ne.s32.totalorder %s339, %s353
      %p355 = scmp.eq.s32.totalorder %s35, 0
      %p356 = por %p354, %p355
      %s357 = ssub.s32 %s29, %s36
      %p358 = scmp.eq.s32.totalorder %s357, 0
      %s360 = sadd.s32 %s359, 1
      %s361 = scalar_select %p358, %s359, %s360
      %p364 = pneg %p358
      %p365 = scmp.eq.s32.totalorder %s29, 1
      %p366 = por %p364, %p365
      %p367 = scmp.ne.s32.totalorder %s359, %s362
      %p368 = scmp.eq.s32.totalorder %s29, 0
      %p369 = por %p367, %p368
      %p370 = scmp.ne.s32.totalorder %s359, %s362
      %p371 = scmp.eq.s32.totalorder %s34, 1
      %p372 = por %p370, %p371
      %p373 = scmp.ne.s32.totalorder %s362, %s363
      %p374 = scmp.eq.s32.totalorder %s34, 0
      %p375 = por %p373, %p374
      %p376 = scmp.ne.s32.totalorder %s362, %s363
      %p377 = scmp.eq.s32.totalorder %s35, 1
      %p378 = por %p376, %p377
      %p380 = scmp.ne.s32.totalorder %s363, %s379
      %p381 = scmp.eq.s32.totalorder %s35, 0
      %p382 = por %p380, %p381
      %p383 = scmp.le.s32.totalorder 1, %s29
      %p384 = scmp.lt.s32.totalorder %s29, 3
      %p385 = pnand %p383, %p384
      %p386 = pneg %p385
      // Predicated region
      $region9: #{tpu_custom_call.1} parent=5 // pred_check
        _
      $region10: #{tpu_custom_call.1} parent=5 // pred_check_branch
        %388 = sbr.rel (%p385) target = $region12
      $region11: #{tpu_custom_call.1} parent=5 // pred_region
        %s389 = ssub.s32 %s29, 1
        // Predicated region
        $region13: #{tpu_custom_call.1} parent=11 // pred_check
          %p390 = pneg %p76
        $region14: #{tpu_custom_call.1} parent=11 // pred_check_branch
          %392 = sbr.rel (%p390) target = $region16
        $region15: #{tpu_custom_call.1} parent=11 // pred_region
          _
        $region16: #{tpu_custom_call.1} parent=11 // pred_fallthru
          _
        // Predicated region
        $region17: #{tpu_custom_call.1} parent=11 // pred_check
          %p393 = pneg %p97
        $region18: #{tpu_custom_call.1} parent=11 // pred_check_branch
          %395 = sbr.rel (%p393) target = $region20
        $region19: #{tpu_custom_call.1} parent=11 // pred_region
          _
        $region20: #{tpu_custom_call.1} parent=11 // pred_fallthru
          _
        // Predicated region
        $region21: #{tpu_custom_call.1} parent=11 // pred_check
          %p396 = pneg %p118
        $region22: #{tpu_custom_call.1} parent=11 // pred_check_branch
          %398 = sbr.rel (%p396) target = $region24
        $region23: #{tpu_custom_call.1} parent=11 // pred_region
          _
        $region24: #{tpu_custom_call.1} parent=11 // pred_fallthru
          _
        // Predicated region
        $region25: #{tpu_custom_call.1} parent=11 // pred_check
          %p399 = pneg %p139
        $region26: #{tpu_custom_call.1} parent=11 // pred_check_branch
          %401 = sbr.rel (%p399) target = $region28
        $region27: #{tpu_custom_call.1} parent=11 // pred_region
          %s403 = ssub.s32 32, 32
          %404 = vsyncadd [#allocation6], %s403
          %s405 = sshll.u32 [#allocation5], 4
          %s406 = int_to_ptr.vmem [resolvable:$true] %s405
          %411 = dma.hbm_to_vmem [thread:$0]  %s4, 32, %s406, [#allocation6], 16, 16, 1
        $region28: #{tpu_custom_call.1} parent=11 // pred_fallthru
          _
        // Predicated region
        $region29: #{tpu_custom_call.1} parent=11 // pred_check
          %p412 = pneg %p160
        $region30: #{tpu_custom_call.1} parent=11 // pred_check_branch
          %414 = sbr.rel (%p412) target = $region32
        $region31: #{tpu_custom_call.1} parent=11 // pred_region
          %s416 = ssub.s32 32, 32
          %417 = vsyncadd [#allocation6], %s416
          %s418 = sshll.u32 [#allocation7], 4
          %s419 = int_to_ptr.vmem [resolvable:$true] %s418
          %424 = dma.hbm_to_vmem [thread:$0]  %s5, 32, %s419, [#allocation6], 16, 16, 1
        $region32: #{tpu_custom_call.1} parent=11 // pred_fallthru
          _
        // Predicated region
        $region33: #{tpu_custom_call.1} parent=11 // pred_check
          %p425 = pneg %p181
        $region34: #{tpu_custom_call.1} parent=11 // pred_check_branch
          %427 = sbr.rel (%p425) target = $region36
        $region35: #{tpu_custom_call.1} parent=11 // pred_region
          %s429 = ssub.s32 32, 32
          %430 = vsyncadd [#allocation9], %s429
          %s431 = sshll.u32 [#allocation8], 4
          %s432 = int_to_ptr.vmem [resolvable:$true] %s431
          %437 = dma.hbm_to_vmem [thread:$0]  %s6, 32, %s432, [#allocation9], 16, 16, 1
        $region36: #{tpu_custom_call.1} parent=11 // pred_fallthru
          _
        // Predicated region
        $region37: #{tpu_custom_call.1} parent=11 // pred_check
          %p438 = pneg %p202
        $region38: #{tpu_custom_call.1} parent=11 // pred_check_branch
          %440 = sbr.rel (%p438) target = $region40
        $region39: #{tpu_custom_call.1} parent=11 // pred_region
          _
        $region40: #{tpu_custom_call.1} parent=11 // pred_fallthru
          _
        // Predicated region
        $region41: #{tpu_custom_call.1} parent=11 // pred_check
          %p441 = pneg %p223
        $region42: #{tpu_custom_call.1} parent=11 // pred_check_branch
          %443 = sbr.rel (%p441) target = $region44
        $region43: #{tpu_custom_call.1} parent=11 // pred_region
          %s445 = ssub.s32 32, 32
          %446 = vsyncadd [#allocation9], %s445
          %s447 = sshll.u32 [#allocation10], 4
          %s448 = int_to_ptr.vmem [resolvable:$true] %s447
          %453 = dma.hbm_to_vmem [thread:$0]  %s8, 32, %s448, [#allocation9], 16, 16, 1
        $region44: #{tpu_custom_call.1} parent=11 // pred_fallthru
          _
        // Predicated region
        $region45: #{tpu_custom_call.1} parent=11 // pred_check
          %p454 = pneg %p244
        $region46: #{tpu_custom_call.1} parent=11 // pred_check_branch
          %456 = sbr.rel (%p454) target = $region48
        $region47: #{tpu_custom_call.1} parent=11 // pred_region
          _
        $region48: #{tpu_custom_call.1} parent=11 // pred_fallthru
          _
        // Predicated region
        $region49: #{tpu_custom_call.1} parent=11 // pred_check
          %p457 = pneg %p265
        $region50: #{tpu_custom_call.1} parent=11 // pred_check_branch
          %459 = sbr.rel (%p457) target = $region52
        $region51: #{tpu_custom_call.1} parent=11 // pred_region
          _
        $region52: #{tpu_custom_call.1} parent=11 // pred_fallthru
          _
        // Predicated region
        $region53: #{tpu_custom_call.1} parent=11 // pred_check
          %p460 = pneg %p286
        $region54: #{tpu_custom_call.1} parent=11 // pred_check_branch
          %462 = sbr.rel (%p460) target = $region56
        $region55: #{tpu_custom_call.1} parent=11 // pred_region
          _
        $region56: #{tpu_custom_call.1} parent=11 // pred_fallthru
          _
        // Predicated region
        $region57: #{tpu_custom_call.1} parent=11 // pred_check
          %p463 = pneg %p307
        $region58: #{tpu_custom_call.1} parent=11 // pred_check_branch
          %465 = sbr.rel (%p463) target = $region60
        $region59: #{tpu_custom_call.1} parent=11 // pred_region
          _
        $region60: #{tpu_custom_call.1} parent=11 // pred_fallthru
          _
        // Predicated region
        $region61: #{tpu_custom_call.1} parent=11 // pred_check
          %p466 = pneg %p328
        $region62: #{tpu_custom_call.1} parent=11 // pred_check_branch
          %468 = sbr.rel (%p466) target = $region64
        $region63: #{tpu_custom_call.1} parent=11 // pred_region
          _
        $region64: #{tpu_custom_call.1} parent=11 // pred_fallthru
          _
        // Predicated region
        $region65: #{tpu_custom_call.1} parent=11 // pred_check
          %p469 = pneg %p349
        $region66: #{tpu_custom_call.1} parent=11 // pred_check_branch
          %471 = sbr.rel (%p469) target = $region68
        $region67: #{tpu_custom_call.1} parent=11 // pred_region
          _
        $region68: #{tpu_custom_call.1} parent=11 // pred_fallthru
          _
      $region12: #{tpu_custom_call.1} parent=5 // pred_fallthru
        _
      %p472 = scmp.lt.s32.totalorder %s29, 2
      // Predicated region
      $region69: #{tpu_custom_call.1} parent=5 // pred_check
        %p473 = pneg %p472
      $region70: #{tpu_custom_call.1} parent=5 // pred_check_branch
        %475 = sbr.rel (%p473) target = $region72
      $region71: #{tpu_custom_call.1} parent=5 // pred_region
        // Predicated region
        $region73: #{tpu_custom_call.1} parent=71 // pred_check
          %p476 = pneg %p49
        $region74: #{tpu_custom_call.1} parent=71 // pred_check_branch
          %478 = sbr.rel (%p476) target = $region76
        $region75: #{tpu_custom_call.1} parent=71 // pred_region
          %s479 = sand.u32 %s39, 1
          %s480 = scalar_lea.sflag [#allocation3], %s479
          %s481 = sand.u32 %s39, 1
          %s482 = smul.addr %s481, 8
          %s483 = scalar_lea.vmem [#allocation2], %s482
          %s485 = ssub.s32 128, 128
          %486 = vsyncadd %s480, %s485
          %s487 = smul.addr %s29, 128
          %s488 = scalar_lea.hbm %s0, %s487
          %s490 = sshll.u32 %s483, 4
          %s491 = int_to_ptr.vmem [resolvable:$true] %s490
          %493 = dma.hbm_to_vmem [thread:$0]  %s488, 128, %s491, %s480
        $region76: #{tpu_custom_call.1} parent=71 // pred_fallthru
          _
      $region72: #{tpu_custom_call.1} parent=5 // pred_fallthru
        _
      %p494 = scmp.le.s32.totalorder 1, %s29
      %p495 = scmp.lt.s32.totalorder %s29, 3
      %p496 = pnand %p494, %p495
      %p497 = pneg %p496
      // Predicated region
      $region77: #{tpu_custom_call.1} parent=5 // pred_check
        _
      $region78: #{tpu_custom_call.1} parent=5 // pred_check_branch
        %499 = sbr.rel (%p496) target = $region80
      $region79: #{tpu_custom_call.1} parent=5 // pred_region
        %s500 = ssub.s32 %s29, 1
        %s501 = sand.u32 %s42, 1
        %s502 = scalar_lea.sflag [#allocation3], %s501
        %s503 = sand.u32 %s42, 1
        %s504 = smul.addr %s503, 8
        %s505 = scalar_lea.vmem [#allocation2], %s504
        // Predicated region
        $region81: #{tpu_custom_call.1} parent=79 // pred_check
          %p506 = pneg %p55
        $region82: #{tpu_custom_call.1} parent=79 // pred_check_branch
          %508 = sbr.rel (%p506) target = $region84
        $region83: #{tpu_custom_call.1} parent=79 // pred_region
          %509 = dma.done %s502, 128
        $region84: #{tpu_custom_call.1} parent=79 // pred_fallthru
          _
        // Predicated region
        $region85: #{tpu_custom_call.1} parent=79 // pred_check
          %p510 = pneg %p139
        $region86: #{tpu_custom_call.1} parent=79 // pred_check_branch
          %512 = sbr.rel (%p510) target = $region88
        $region87: #{tpu_custom_call.1} parent=79 // pred_region
          %513 = dma.done [#allocation6], 32
        $region88: #{tpu_custom_call.1} parent=79 // pred_fallthru
          _
        // Predicated region
        $region89: #{tpu_custom_call.1} parent=79 // pred_check
          %p514 = pneg %p160
        $region90: #{tpu_custom_call.1} parent=79 // pred_check_branch
          %516 = sbr.rel (%p514) target = $region92
        $region91: #{tpu_custom_call.1} parent=79 // pred_region
          %517 = dma.done [#allocation6], 32
        $region92: #{tpu_custom_call.1} parent=79 // pred_fallthru
          _
        // Predicated region
        $region93: #{tpu_custom_call.1} parent=79 // pred_check
          %p518 = pneg %p181
        $region94: #{tpu_custom_call.1} parent=79 // pred_check_branch
          %520 = sbr.rel (%p518) target = $region96
        $region95: #{tpu_custom_call.1} parent=79 // pred_region
          %521 = dma.done [#allocation9], 32
        $region96: #{tpu_custom_call.1} parent=79 // pred_fallthru
          _
        // Predicated region
        $region97: #{tpu_custom_call.1} parent=79 // pred_check
          %p522 = pneg %p223
        $region98: #{tpu_custom_call.1} parent=79 // pred_check_branch
          %524 = sbr.rel (%p522) target = $region100
        $region99: #{tpu_custom_call.1} parent=79 // pred_region
          %525 = dma.done [#allocation9], 32
        $region100: #{tpu_custom_call.1} parent=79 // pred_fallthru
          _
        %s526 = sand.u32 %s42, 1
        %s527 = scalar_lea.sflag [#allocation3], %s526
        %s528 = sand.u32 %s42, 1
        %s529 = smul.addr %s528, 8
        %s530 = scalar_lea.vmem [#allocation2], %s529
        %p531 = pneg %p55
        %p532 = pneg %p52
        %p533 = pneg %p76
        %p534 = pneg %p73
        %p535 = pneg %p97
        %p536 = pneg %p94
        %p537 = pneg %p118
        %p538 = pneg %p115
        %p539 = pneg %p139
        %p540 = pneg %p136
        %p541 = pneg %p160
        %p542 = pneg %p157
        %p543 = pneg %p181
        %p544 = pneg %p178
        %p545 = pneg %p202
        %p546 = pneg %p199
        %p547 = pneg %p223
        %p548 = pneg %p220
        %p549 = pneg %p244
        %p550 = pneg %p241
        %p551 = pneg %p265
        %p552 = pneg %p262
        %p553 = pneg %p286
        %p554 = pneg %p283
        %p555 = pneg %p307
        %p556 = pneg %p304
        %p557 = pneg %p328
        %p558 = pneg %p325
        %p559 = pneg %p349
        %p560 = pneg %p346
        %p561 = pneg %p375
        %p562 = pneg %p372
        %s563 = sand.u32 %s362, 1
        %s564 = scalar_lea.sflag [#allocation4], %s563
        %s565 = sand.u32 %s362, 1
        %s566 = smul.addr %s565, 8
        %s567 = scalar_lea.vmem [#allocation11], %s566
        %v569 = vld [vmem:[%s505] sm:$0xff]
        %v570 = vpack.c.bf16 %v569, %v569
        %v571 = vld [vmem:[%s1] sm:$0xf]
        %v572 = vld [vmem:[%s1 + $0x4] sm:$0xf]
        %v573 = vld [vmem:[%s1 + $0x8] sm:$0xf]
        %v574 = vld [vmem:[%s1 + $0xc] sm:$0xf]
        %v575 = vld [vmem:[%s2] sm:$0x1]
        %v577 = vlaneseq
        %v578 = vshrl.u32 %v577, 7
        %v579 = vsub.s32 0, %v578
        %v580 = vrot.slane %v575, %v579
        %v586 = vunpack.c.l.b16 %v571
        %v587 = vunpack.c.l.b16 %v572
        %v588 = vunpack.c.l.b16 %v573
        %v589 = vunpack.c.l.b16 %v574
        %v590 = vpack.c.b16 %v587, %v586
        %v591 = vpack.c.b16 %v589, %v588
        %vm594 = vcmask 261120
        %v596 = vsel %vm594, %v570, 0
        %598 = vmatprep.subr.bf16.mxu0 0
        %599 = vmatpush1.bf16.msra.mxu0 %v590
        %600 = vmatprep.subr.bf16.mxu0 0
        %601 = vmatpush1.bf16.msra.mxu0 %v591
        %602 = vmatprep.subr.bf16.mxu0 0
        %603 = vmatpush1.bf16.msra.mxu0 0
        %604 = vmatprep.subr.bf16.mxu0 0
        %605 = vmatpush1.bf16.msra.mxu0 0
        %606 = vmatprep.subr.bf16.mxu0 0
        %607 = vmatpush1.bf16.msra.mxu0 0
        %608 = vmatprep.subr.bf16.mxu0 0
        %609 = vmatpush1.bf16.msra.mxu0 0
        %610 = vmatprep.subr.bf16.mxu0 0
        %611 = vmatpush1.bf16.msra.mxu0 0
        %612 = vmatprep.subr.bf16.mxu0 0
        %613 = vmatpush1.bf16.msra.mxu0 0
        %614 = vmatprep.subr.bf16.mxu0 0
        %615 = vmatpush1.bf16.msra.mxu0 0
        %616 = vmatprep.subr.bf16.mxu0 0
        %617 = vmatpush1.bf16.msra.mxu0 0
        %618 = vmatprep.subr.bf16.mxu0 0
        %619 = vmatpush1.bf16.msra.mxu0 0
        %620 = vmatprep.subr.bf16.mxu0 0
        %621 = vmatpush1.bf16.msra.mxu0 0
        %622 = vmatprep.subr.bf16.mxu0 0
        %623 = vmatpush1.bf16.msra.mxu0 0
        %624 = vmatprep.subr.bf16.mxu0 0
        %625 = vmatpush1.bf16.msra.mxu0 0
        %626 = vmatprep.subr.bf16.mxu0 0
        %627 = vmatpush1.bf16.msra.mxu0 0
        %628 = vmatprep.subr.bf16.mxu0 0
        %629 = vmatpush1.bf16.msra.mxu0 0
        %630 = vmatprep.mubr.bf16.mxu0 0
        %631 = vmatmul.mubr.bf16.gmra.mrb[0].mxu0 %v596
        %v632 = vpop.f32.mrb[0].mxu0
        %v633 = vadd.f32 %v580, %v632
        %v634 = vpop.f32.mrb[0].mxu0
        %v635 = vpop.f32.mrb[0].mxu0
        %v636 = vpop.f32.mrb[0].mxu0
        %637 = vdwg.mxu0
        %v638 = vld [vmem:[%s3] sm:$0xf]
        %v639 = vld [vmem:[%s3 + $0x4] sm:$0xf]
        %v640 = vld [vmem:[%s3 + $0x8] sm:$0xf]
        %v641 = vld [vmem:[%s3 + $0xc] sm:$0xf]
        %v642 = vld [vmem:[#allocation5] sm:$0x1]
        %v644 = vlaneseq
        %v645 = vshrl.u32 %v644, 7
        %v646 = vsub.s32 0, %v645
        %v647 = vrot.slane %v642, %v646
        %v649 = vadd.f32 %v569, %v647
        %v650 = vpack.c.bf16 %v633, %v633
        %652 = vrot.lane.b32.xlu0 %v650, 96
        %v653 = vpop.permute.xlu0 %652
        %vm654 = vcmask 64512
        %v656 = vsel %vm654, %v650, 0
        %v659 = vsel %vm654, %v653, 0
        %661 = vmatprep.subr.bf16.mxu0 0
        %662 = vmatpush1.bf16.xpose.msra.mxu0 %v659
        %663 = vmatprep.subr.bf16.mxu0 0
        %664 = vmatpush1.bf16.xpose.msra.mxu0 0
        %665 = vmatprep.subr.bf16.mxu0 0
        %666 = vmatpush1.bf16.xpose.msra.mxu0 0
        %667 = vmatprep.subr.bf16.mxu0 0
        %668 = vmatpush1.bf16.xpose.msra.mxu0 0
        %669 = vmatprep.subr.bf16.mxu0 0
        %670 = vmatpush1.bf16.xpose.msra.mxu0 0
        %671 = vmatprep.subr.bf16.mxu0 0
        %672 = vmatpush1.bf16.xpose.msra.mxu0 0
        %673 = vmatprep.subr.bf16.mxu0 0
        %674 = vmatpush1.bf16.xpose.msra.mxu0 0
        %675 = vmatprep.subr.bf16.mxu0 0
        %676 = vmatpush1.bf16.xpose.msra.mxu0 0
        %677 = vmatprep.subr.bf16.mxu0 0
        %678 = vmatpush1.bf16.xpose.msra.mxu0 0
        %679 = vmatprep.subr.bf16.mxu0 0
        %680 = vmatpush1.bf16.xpose.msra.mxu0 0
        %681 = vmatprep.subr.bf16.mxu0 0
        %682 = vmatpush1.bf16.xpose.msra.mxu0 0
        %683 = vmatprep.subr.bf16.mxu0 0
        %684 = vmatpush1.bf16.xpose.msra.mxu0 0
        %685 = vmatprep.subr.bf16.mxu0 0
        %686 = vmatpush1.bf16.xpose.msra.mxu0 0
        %687 = vmatprep.subr.bf16.mxu0 0
        %688 = vmatpush1.bf16.xpose.msra.mxu0 0
        %689 = vmatprep.subr.bf16.mxu0 0
        %690 = vmatpush1.bf16.xpose.msra.mxu0 0
        %691 = vmatprep.subr.bf16.mxu0 0
        %692 = vmatpush1.bf16.xpose.msra.mxu0 0
        %693 = vmatprep.mubr.bf16.mxu0 0
        %694 = vmatmul.mubr.bf16.gmra.mrb[0].mxu0 %v656
        %v695 = vpop.f32.mrb[0].mxu0
        %v696 = vadd.f32 0.0, %v695
        %v697 = vpop.f32.mrb[0].mxu0
        %v698 = vpop.f32.mrb[0].mxu0
        %v699 = vpop.f32.mrb[0].mxu0
        %700 = vdwg.mxu0
        %v701 = vsel %vm654, %v696, -inf
        %702 = vmax.xlane.f32.xlu0 %v701
        %v703 = vpop.xlane.xlu0 %702
        %v704 = vsub.f32 %v696, %v703
        %v705 = vmul.f32 %v704, 1.442695
        %v706 = vpow.pop %v705
        %v707 = vsel %vm654, %v706, 0.0
        %708 = vadd.xlane.f32.xlu0 %v707
        %v709 = vpop.xlane.xlu0 %708
        %v710 = vrcp.pop %v709
        %v711 = vmul.f32 %v706, %v710
        %v712 = vpack.c.bf16 %v711, %v711
        %713 = vrot.lane.b32.xlu0 %v650, 64
        %v714 = vpop.permute.xlu0 %713
        %v716 = vsel %vm654, %v712, 0
        %vm718 = vcmask 1043456
        %v720 = vsel %vm718, %v714, 0
        %722 = vmatprep.subr.bf16.mxu0 0
        %723 = vmatpush1.bf16.msra.mxu0 %v720
        %724 = vmatprep.subr.bf16.mxu0 0
        %725 = vmatpush1.bf16.msra.mxu0 0
        %726 = vmatprep.subr.bf16.mxu0 0
        %727 = vmatpush1.bf16.msra.mxu0 0
        %728 = vmatprep.subr.bf16.mxu0 0
        %729 = vmatpush1.bf16.msra.mxu0 0
        %730 = vmatprep.subr.bf16.mxu0 0
        %731 = vmatpush1.bf16.msra.mxu0 0
        %732 = vmatprep.subr.bf16.mxu0 0
        %733 = vmatpush1.bf16.msra.mxu0 0
        %734 = vmatprep.subr.bf16.mxu0 0
        %735 = vmatpush1.bf16.msra.mxu0 0
        %736 = vmatprep.subr.bf16.mxu0 0
        %737 = vmatpush1.bf16.msra.mxu0 0
        %738 = vmatprep.subr.bf16.mxu0 0
        %739 = vmatpush1.bf16.msra.mxu0 0
        %740 = vmatprep.subr.bf16.mxu0 0
        %741 = vmatpush1.bf16.msra.mxu0 0
        %742 = vmatprep.subr.bf16.mxu0 0
        %743 = vmatpush1.bf16.msra.mxu0 0
        %744 = vmatprep.subr.bf16.mxu0 0
        %745 = vmatpush1.bf16.msra.mxu0 0
        %746 = vmatprep.subr.bf16.mxu0 0
        %747 = vmatpush1.bf16.msra.mxu0 0
        %748 = vmatprep.subr.bf16.mxu0 0
        %749 = vmatpush1.bf16.msra.mxu0 0
        %750 = vmatprep.subr.bf16.mxu0 0
        %751 = vmatpush1.bf16.msra.mxu0 0
        %752 = vmatprep.subr.bf16.mxu0 0
        %753 = vmatpush1.bf16.msra.mxu0 0
        %754 = vmatprep.mubr.bf16.mxu0 0
        %755 = vmatmul.mubr.bf16.gmra.mrb[0].mxu0 %v716
        %v756 = vpop.f32.mrb[0].mxu0
        %v757 = vadd.f32 0.0, %v756
        %v758 = vpop.f32.mrb[0].mxu0
        %v759 = vpop.f32.mrb[0].mxu0
        %v760 = vpop.f32.mrb[0].mxu0
        %761 = vdwg.mxu0
        %v762 = vpack.c.bf16 %v757, %v757
        %v764 = vsel %vm654, %v762, 0
        %v767 = vsel %vm718, %v638, 0
        %769 = vmatprep.subr.bf16.mxu0 0
        %770 = vmatpush1.bf16.msra.mxu0 %v767
        %771 = vmatprep.subr.bf16.mxu0 0
        %772 = vmatpush1.bf16.msra.mxu0 0
        %773 = vmatprep.subr.bf16.mxu0 0
        %774 = vmatpush1.bf16.msra.mxu0 0
        %775 = vmatprep.subr.bf16.mxu0 0
        %776 = vmatpush1.bf16.msra.mxu0 0
        %777 = vmatprep.subr.bf16.mxu0 0
        %778 = vmatpush1.bf16.msra.mxu0 0
        %779 = vmatprep.subr.bf16.mxu0 0
        %780 = vmatpush1.bf16.msra.mxu0 0
        %781 = vmatprep.subr.bf16.mxu0 0
        %782 = vmatpush1.bf16.msra.mxu0 0
        %783 = vmatprep.subr.bf16.mxu0 0
        %784 = vmatpush1.bf16.msra.mxu0 0
        %785 = vmatprep.subr.bf16.mxu0 0
        %786 = vmatpush1.bf16.msra.mxu0 0
        %787 = vmatprep.subr.bf16.mxu0 0
        %788 = vmatpush1.bf16.msra.mxu0 0
        %789 = vmatprep.subr.bf16.mxu0 0
        %790 = vmatpush1.bf16.msra.mxu0 0
        %791 = vmatprep.subr.bf16.mxu0 0
        %792 = vmatpush1.bf16.msra.mxu0 0
        %793 = vmatprep.subr.bf16.mxu0 0
        %794 = vmatpush1.bf16.msra.mxu0 0
        %795 = vmatprep.subr.bf16.mxu0 0
        %796 = vmatpush1.bf16.msra.mxu0 0
        %797 = vmatprep.subr.bf16.mxu0 0
        %798 = vmatpush1.bf16.msra.mxu0 0
        %799 = vmatprep.subr.bf16.mxu0 0
        %800 = vmatpush1.bf16.msra.mxu0 0
        %801 = vmatprep.mubr.bf16.mxu0 0
        %802 = vmatmul.mubr.bf16.gmra.mrb[0].mxu0 %v764
        %v803 = vpop.f32.mrb[0].mxu0
        %v804 = vadd.f32 0.0, %v803
        %v805 = vpop.f32.mrb[0].mxu0
        %v806 = vpop.f32.mrb[0].mxu0
        %v807 = vpop.f32.mrb[0].mxu0
        %808 = vdwg.mxu0
        %v809 = vadd.f32 %v649, %v804
        %810 = vrot.lane.b32.xlu0 %v650, 120
        %v811 = vpop.permute.xlu0 %810
        %812 = vrot.lane.b32.xlu0 %v650, 88
        %v813 = vpop.permute.xlu0 %812
        %v815 = vsel %vm654, %v811, 0
        %v818 = vsel %vm654, %v813, 0
        %820 = vmatprep.subr.bf16.mxu0 0
        %821 = vmatpush1.bf16.xpose.msra.mxu0 %v818
        %822 = vmatprep.subr.bf16.mxu0 0
        %823 = vmatpush1.bf16.xpose.msra.mxu0 0
        %824 = vmatprep.subr.bf16.mxu0 0
        %825 = vmatpush1.bf16.xpose.msra.mxu0 0
        %826 = vmatprep.subr.bf16.mxu0 0
        %827 = vmatpush1.bf16.xpose.msra.mxu0 0
        %828 = vmatprep.subr.bf16.mxu0 0
        %829 = vmatpush1.bf16.xpose.msra.mxu0 0
        %830 = vmatprep.subr.bf16.mxu0 0
        %831 = vmatpush1.bf16.xpose.msra.mxu0 0
        %832 = vmatprep.subr.bf16.mxu0 0
        %833 = vmatpush1.bf16.xpose.msra.mxu0 0
        %834 = vmatprep.subr.bf16.mxu0 0
        %835 = vmatpush1.bf16.xpose.msra.mxu0 0
        %836 = vmatprep.subr.bf16.mxu0 0
        %837 = vmatpush1.bf16.xpose.msra.mxu0 0
        %838 = vmatprep.subr.bf16.mxu0 0
        %839 = vmatpush1.bf16.xpose.msra.mxu0 0
        %840 = vmatprep.subr.bf16.mxu0 0
        %841 = vmatpush1.bf16.xpose.msra.mxu0 0
        %842 = vmatprep.subr.bf16.mxu0 0
        %843 = vmatpush1.bf16.xpose.msra.mxu0 0
        %844 = vmatprep.subr.bf16.mxu0 0
        %845 = vmatpush1.bf16.xpose.msra.mxu0 0
        %846 = vmatprep.subr.bf16.mxu0 0
        %847 = vmatpush1.bf16.xpose.msra.mxu0 0
        %848 = vmatprep.subr.bf16.mxu0 0
        %849 = vmatpush1.bf16.xpose.msra.mxu0 0
        %850 = vmatprep.subr.bf16.mxu0 0
        %851 = vmatpush1.bf16.xpose.msra.mxu0 0
        %852 = vmatprep.mubr.bf16.mxu0 0
        %853 = vmatmul.mubr.bf16.gmra.mrb[0].mxu0 %v815
        %v854 = vpop.f32.mrb[0].mxu0
        %v855 = vadd.f32 0.0, %v854
        %v856 = vpop.f32.mrb[0].mxu0
        %v857 = vpop.f32.mrb[0].mxu0
        %v858 = vpop.f32.mrb[0].mxu0
        %859 = vdwg.mxu0
        %v860 = vsel %vm654, %v855, -inf
        %861 = vmax.xlane.f32.xlu0 %v860
        %v862 = vpop.xlane.xlu0 %861
        %v863 = vsub.f32 %v855, %v862
        %v864 = vmul.f32 %v863, 1.442695
        %v865 = vpow.pop %v864
        %v866 = vsel %vm654, %v865, 0.0
        %867 = vadd.xlane.f32.xlu0 %v866
        %v868 = vpop.xlane.xlu0 %867
        %v869 = vrcp.pop %v868
        %v870 = vmul.f32 %v865, %v869
        %v871 = vpack.c.bf16 %v870, %v870
        %872 = vrot.lane.b32.xlu0 %v650, 56
        %v873 = vpop.permute.xlu0 %872
        %v875 = vsel %vm654, %v871, 0
        %v878 = vsel %vm718, %v873, 0
        %880 = vmatprep.subr.bf16.mxu0 0
        %881 = vmatpush1.bf16.msra.mxu0 %v878
        %882 = vmatprep.subr.bf16.mxu0 0
        %883 = vmatpush1.bf16.msra.mxu0 0
        %884 = vmatprep.subr.bf16.mxu0 0
        %885 = vmatpush1.bf16.msra.mxu0 0
        %886 = vmatprep.subr.bf16.mxu0 0
        %887 = vmatpush1.bf16.msra.mxu0 0
        %888 = vmatprep.subr.bf16.mxu0 0
        %889 = vmatpush1.bf16.msra.mxu0 0
        %890 = vmatprep.subr.bf16.mxu0 0
        %891 = vmatpush1.bf16.msra.mxu0 0
        %892 = vmatprep.subr.bf16.mxu0 0
        %893 = vmatpush1.bf16.msra.mxu0 0
        %894 = vmatprep.subr.bf16.mxu0 0
        %895 = vmatpush1.bf16.msra.mxu0 0
        %896 = vmatprep.subr.bf16.mxu0 0
        %897 = vmatpush1.bf16.msra.mxu0 0
        %898 = vmatprep.subr.bf16.mxu0 0
        %899 = vmatpush1.bf16.msra.mxu0 0
        %900 = vmatprep.subr.bf16.mxu0 0
        %901 = vmatpush1.bf16.msra.mxu0 0
        %902 = vmatprep.subr.bf16.mxu0 0
        %903 = vmatpush1.bf16.msra.mxu0 0
        %904 = vmatprep.subr.bf16.mxu0 0
        %905 = vmatpush1.bf16.msra.mxu0 0
        %906 = vmatprep.subr.bf16.mxu0 0
        %907 = vmatpush1.bf16.msra.mxu0 0
        %908 = vmatprep.subr.bf16.mxu0 0
        %909 = vmatpush1.bf16.msra.mxu0 0
        %910 = vmatprep.subr.bf16.mxu0 0
        %911 = vmatpush1.bf16.msra.mxu0 0
        %912 = vmatprep.mubr.bf16.mxu0 0
        %913 = vmatmul.mubr.bf16.gmra.mrb[0].mxu0 %v875
        %v914 = vpop.f32.mrb[0].mxu0
        %v915 = vadd.f32 0.0, %v914
        %v916 = vpop.f32.mrb[0].mxu0
        %v917 = vpop.f32.mrb[0].mxu0
        %v918 = vpop.f32.mrb[0].mxu0
        %919 = vdwg.mxu0
        %v920 = vpack.c.bf16 %v915, %v915
        %v922 = vsel %vm654, %v920, 0
        %v925 = vsel %vm718, %v639, 0
        %927 = vmatprep.subr.bf16.mxu0 0
        %928 = vmatpush1.bf16.msra.mxu0 %v925
        %929 = vmatprep.subr.bf16.mxu0 0
        %930 = vmatpush1.bf16.msra.mxu0 0
        %931 = vmatprep.subr.bf16.mxu0 0
        %932 = vmatpush1.bf16.msra.mxu0 0
        %933 = vmatprep.subr.bf16.mxu0 0
        %934 = vmatpush1.bf16.msra.mxu0 0
        %935 = vmatprep.subr.bf16.mxu0 0
        %936 = vmatpush1.bf16.msra.mxu0 0
        %937 = vmatprep.subr.bf16.mxu0 0
        %938 = vmatpush1.bf16.msra.mxu0 0
        %939 = vmatprep.subr.bf16.mxu0 0
        %940 = vmatpush1.bf16.msra.mxu0 0
        %941 = vmatprep.subr.bf16.mxu0 0
        %942 = vmatpush1.bf16.msra.mxu0 0
        %943 = vmatprep.subr.bf16.mxu0 0
        %944 = vmatpush1.bf16.msra.mxu0 0
        %945 = vmatprep.subr.bf16.mxu0 0
        %946 = vmatpush1.bf16.msra.mxu0 0
        %947 = vmatprep.subr.bf16.mxu0 0
        %948 = vmatpush1.bf16.msra.mxu0 0
        %949 = vmatprep.subr.bf16.mxu0 0
        %950 = vmatpush1.bf16.msra.mxu0 0
        %951 = vmatprep.subr.bf16.mxu0 0
        %952 = vmatpush1.bf16.msra.mxu0 0
        %953 = vmatprep.subr.bf16.mxu0 0
        %954 = vmatpush1.bf16.msra.mxu0 0
        %955 = vmatprep.subr.bf16.mxu0 0
        %956 = vmatpush1.bf16.msra.mxu0 0
        %957 = vmatprep.subr.bf16.mxu0 0
        %958 = vmatpush1.bf16.msra.mxu0 0
        %959 = vmatprep.mubr.bf16.mxu0 0
        %960 = vmatmul.mubr.bf16.gmra.mrb[0].mxu0 %v922
        %v961 = vpop.f32.mrb[0].mxu0
        %v962 = vadd.f32 0.0, %v961
        %v963 = vpop.f32.mrb[0].mxu0
        %v964 = vpop.f32.mrb[0].mxu0
        %v965 = vpop.f32.mrb[0].mxu0
        %966 = vdwg.mxu0
        %v967 = vadd.f32 %v809, %v962
        %968 = vrot.lane.b32.xlu0 %v650, 112
        %v969 = vpop.permute.xlu0 %968
        %970 = vrot.lane.b32.xlu0 %v650, 80
        %v971 = vpop.permute.xlu0 %970
        %v973 = vsel %vm654, %v969, 0
        %v976 = vsel %vm654, %v971, 0
        %978 = vmatprep.subr.bf16.mxu0 0
        %979 = vmatpush1.bf16.xpose.msra.mxu0 %v976
        %980 = vmatprep.subr.bf16.mxu0 0
        %981 = vmatpush1.bf16.xpose.msra.mxu0 0
        %982 = vmatprep.subr.bf16.mxu0 0
        %983 = vmatpush1.bf16.xpose.msra.mxu0 0
        %984 = vmatprep.subr.bf16.mxu0 0
        %985 = vmatpush1.bf16.xpose.msra.mxu0 0
        %986 = vmatprep.subr.bf16.mxu0 0
        %987 = vmatpush1.bf16.xpose.msra.mxu0 0
        %988 = vmatprep.subr.bf16.mxu0 0
        %989 = vmatpush1.bf16.xpose.msra.mxu0 0
        %990 = vmatprep.subr.bf16.mxu0 0
        %991 = vmatpush1.bf16.xpose.msra.mxu0 0
        %992 = vmatprep.subr.bf16.mxu0 0
        %993 = vmatpush1.bf16.xpose.msra.mxu0 0
        %994 = vmatprep.subr.bf16.mxu0 0
        %995 = vmatpush1.bf16.xpose.msra.mxu0 0
        %996 = vmatprep.subr.bf16.mxu0 0
        %997 = vmatpush1.bf16.xpose.msra.mxu0 0
        %998 = vmatprep.subr.bf16.mxu0 0
        %999 = vmatpush1.bf16.xpose.msra.mxu0 0
        %1000 = vmatprep.subr.bf16.mxu0 0
        %1001 = vmatpush1.bf16.xpose.msra.mxu0 0
        %1002 = vmatprep.subr.bf16.mxu0 0
        %1003 = vmatpush1.bf16.xpose.msra.mxu0 0
        %1004 = vmatprep.subr.bf16.mxu0 0
        %1005 = vmatpush1.bf16.xpose.msra.mxu0 0
        %1006 = vmatprep.subr.bf16.mxu0 0
        %1007 = vmatpush1.bf16.xpose.msra.mxu0 0
        %1008 = vmatprep.subr.bf16.mxu0 0
        %1009 = vmatpush1.bf16.xpose.msra.mxu0 0
        %1010 = vmatprep.mubr.bf16.mxu0 0
        %1011 = vmatmul.mubr.bf16.gmra.mrb[0].mxu0 %v973
        %v1012 = vpop.f32.mrb[0].mxu0
        %v1013 = vadd.f32 0.0, %v1012
        %v1014 = vpop.f32.mrb[0].mxu0
        %v1015 = vpop.f32.mrb[0].mxu0
        %v1016 = vpop.f32.mrb[0].mxu0
        %1017 = vdwg.mxu0
        %v1018 = vsel %vm654, %v1013, -inf
        %1019 = vmax.xlane.f32.xlu0 %v1018
        %v1020 = vpop.xlane.xlu0 %1019
        %v1021 = vsub.f32 %v1013, %v1020
        %v1022 = vmul.f32 %v1021, 1.442695
        %v1023 = vpow.pop %v1022
        %v1024 = vsel %vm654, %v1023, 0.0
        %1025 = vadd.xlane.f32.xlu0 %v1024
        %v1026 = vpop.xlane.xlu0 %1025
        %v1027 = vrcp.pop %v1026
        %v1028 = vmul.f32 %v1023, %v1027
        %v1029 = vpack.c.bf16 %v1028, %v1028
        %1030 = vrot.lane.b32.xlu0 %v650, 48
        %v1031 = vpop.permute.xlu0 %1030
        %v1033 = vsel %vm654, %v1029, 0
        %v1036 = vsel %vm718, %v1031, 0
        %1038 = vmatprep.subr.bf16.mxu0 0
        %1039 = vmatpush1.bf16.msra.mxu0 %v1036
        %1040 = vmatprep.subr.bf16.mxu0 0
        %1041 = vmatpush1.bf16.msra.mxu0 0
        %1042 = vmatprep.subr.bf16.mxu0 0
        %1043 = vmatpush1.bf16.msra.mxu0 0
        %1044 = vmatprep.subr.bf16.mxu0 0
        %1045 = vmatpush1.bf16.msra.mxu0 0
        %1046 = vmatprep.subr.bf16.mxu0 0
        %1047 = vmatpush1.bf16.msra.mxu0 0
        %1048 = vmatprep.subr.bf16.mxu0 0
        %1049 = vmatpush1.bf16.msra.mxu0 0
        %1050 = vmatprep.subr.bf16.mxu0 0
        %1051 = vmatpush1.bf16.msra.mxu0 0
        %1052 = vmatprep.subr.bf16.mxu0 0
        %1053 = vmatpush1.bf16.msra.mxu0 0
        %1054 = vmatprep.subr.bf16.mxu0 0
        %1055 = vmatpush1.bf16.msra.mxu0 0
        %1056 = vmatprep.subr.bf16.mxu0 0
        %1057 = vmatpush1.bf16.msra.mxu0 0
        %1058 = vmatprep.subr.bf16.mxu0 0
        %1059 = vmatpush1.bf16.msra.mxu0 0
        %1060 = vmatprep.subr.bf16.mxu0 0
        %1061 = vmatpush1.bf16.msra.mxu0 0
        %1062 = vmatprep.subr.bf16.mxu0 0
        %1063 = vmatpush1.bf16.msra.mxu0 0
        %1064 = vmatprep.subr.bf16.mxu0 0
        %1065 = vmatpush1.bf16.msra.mxu0 0
        %1066 = vmatprep.subr.bf16.mxu0 0
        %1067 = vmatpush1.bf16.msra.mxu0 0
        %1068 = vmatprep.subr.bf16.mxu0 0
        %1069 = vmatpush1.bf16.msra.mxu0 0
        %1070 = vmatprep.mubr.bf16.mxu0 0
        %1071 = vmatmul.mubr.bf16.gmra.mrb[0].mxu0 %v1033
        %v1072 = vpop.f32.mrb[0].mxu0
        %v1073 = vadd.f32 0.0, %v1072
        %v1074 = vpop.f32.mrb[0].mxu0
        %v1075 = vpop.f32.mrb[0].mxu0
        %v1076 = vpop.f32.mrb[0].mxu0
        %1077 = vdwg.mxu0
        %v1078 = vpack.c.bf16 %v1073, %v1073
        %v1080 = vsel %vm654, %v1078, 0
        %v1083 = vsel %vm718, %v640, 0
        %1085 = vmatprep.subr.bf16.mxu0 0
        %1086 = vmatpush1.bf16.msra.mxu0 %v1083
        %1087 = vmatprep.subr.bf16.mxu0 0
        %1088 = vmatpush1.bf16.msra.mxu0 0
        %1089 = vmatprep.subr.bf16.mxu0 0
        %1090 = vmatpush1.bf16.msra.mxu0 0
        %1091 = vmatprep.subr.bf16.mxu0 0
        %1092 = vmatpush1.bf16.msra.mxu0 0
        %1093 = vmatprep.subr.bf16.mxu0 0
        %1094 = vmatpush1.bf16.msra.mxu0 0
        %1095 = vmatprep.subr.bf16.mxu0 0
        %1096 = vmatpush1.bf16.msra.mxu0 0
        %1097 = vmatprep.subr.bf16.mxu0 0
        %1098 = vmatpush1.bf16.msra.mxu0 0
        %1099 = vmatprep.subr.bf16.mxu0 0
        %1100 = vmatpush1.bf16.msra.mxu0 0
        %1101 = vmatprep.subr.bf16.mxu0 0
        %1102 = vmatpush1.bf16.msra.mxu0 0
        %1103 = vmatprep.subr.bf16.mxu0 0
        %1104 = vmatpush1.bf16.msra.mxu0 0
        %1105 = vmatprep.subr.bf16.mxu0 0
        %1106 = vmatpush1.bf16.msra.mxu0 0
        %1107 = vmatprep.subr.bf16.mxu0 0
        %1108 = vmatpush1.bf16.msra.mxu0 0
        %1109 = vmatprep.subr.bf16.mxu0 0
        %1110 = vmatpush1.bf16.msra.mxu0 0
        %1111 = vmatprep.subr.bf16.mxu0 0
        %1112 = vmatpush1.bf16.msra.mxu0 0
        %1113 = vmatprep.subr.bf16.mxu0 0
        %1114 = vmatpush1.bf16.msra.mxu0 0
        %1115 = vmatprep.subr.bf16.mxu0 0
        %1116 = vmatpush1.bf16.msra.mxu0 0
        %1117 = vmatprep.mubr.bf16.mxu0 0
        %1118 = vmatmul.mubr.bf16.gmra.mrb[0].mxu0 %v1080
        %v1119 = vpop.f32.mrb[0].mxu0
        %v1120 = vadd.f32 0.0, %v1119
        %v1121 = vpop.f32.mrb[0].mxu0
        %v1122 = vpop.f32.mrb[0].mxu0
        %v1123 = vpop.f32.mrb[0].mxu0
        %1124 = vdwg.mxu0
        %v1125 = vadd.f32 %v967, %v1120
        %1126 = vrot.lane.b32.xlu0 %v650, 104
        %v1127 = vpop.permute.xlu0 %1126
        %1128 = vrot.lane.b32.xlu0 %v650, 72
        %v1129 = vpop.permute.xlu0 %1128
        %v1131 = vsel %vm654, %v1127, 0
        %v1134 = vsel %vm654, %v1129, 0
        %1136 = vmatprep.subr.bf16.mxu0 0
        %1137 = vmatpush1.bf16.xpose.msra.mxu0 %v1134
        %1138 = vmatprep.subr.bf16.mxu0 0
        %1139 = vmatpush1.bf16.xpose.msra.mxu0 0
        %1140 = vmatprep.subr.bf16.mxu0 0
        %1141 = vmatpush1.bf16.xpose.msra.mxu0 0
        %1142 = vmatprep.subr.bf16.mxu0 0
        %1143 = vmatpush1.bf16.xpose.msra.mxu0 0
        %1144 = vmatprep.subr.bf16.mxu0 0
        %1145 = vmatpush1.bf16.xpose.msra.mxu0 0
        %1146 = vmatprep.subr.bf16.mxu0 0
        %1147 = vmatpush1.bf16.xpose.msra.mxu0 0
        %1148 = vmatprep.subr.bf16.mxu0 0
        %1149 = vmatpush1.bf16.xpose.msra.mxu0 0
        %1150 = vmatprep.subr.bf16.mxu0 0
        %1151 = vmatpush1.bf16.xpose.msra.mxu0 0
        %1152 = vmatprep.subr.bf16.mxu0 0
        %1153 = vmatpush1.bf16.xpose.msra.mxu0 0
        %1154 = vmatprep.subr.bf16.mxu0 0
        %1155 = vmatpush1.bf16.xpose.msra.mxu0 0
        %1156 = vmatprep.subr.bf16.mxu0 0
        %1157 = vmatpush1.bf16.xpose.msra.mxu0 0
        %1158 = vmatprep.subr.bf16.mxu0 0
        %1159 = vmatpush1.bf16.xpose.msra.mxu0 0
        %1160 = vmatprep.subr.bf16.mxu0 0
        %1161 = vmatpush1.bf16.xpose.msra.mxu0 0
        %1162 = vmatprep.subr.bf16.mxu0 0
        %1163 = vmatpush1.bf16.xpose.msra.mxu0 0
        %1164 = vmatprep.subr.bf16.mxu0 0
        %1165 = vmatpush1.bf16.xpose.msra.mxu0 0
        %1166 = vmatprep.subr.bf16.mxu0 0
        %1167 = vmatpush1.bf16.xpose.msra.mxu0 0
        %1168 = vmatprep.mubr.bf16.mxu0 0
        %1169 = vmatmul.mubr.bf16.gmra.mrb[0].mxu0 %v1131
        %v1170 = vpop.f32.mrb[0].mxu0
        %v1171 = vadd.f32 0.0, %v1170
        %v1172 = vpop.f32.mrb[0].mxu0
        %v1173 = vpop.f32.mrb[0].mxu0
        %v1174 = vpop.f32.mrb[0].mxu0
        %1175 = vdwg.mxu0
        %v1176 = vsel %vm654, %v1171, -inf
        %1177 = vmax.xlane.f32.xlu0 %v1176
        %v1178 = vpop.xlane.xlu0 %1177
        %v1179 = vsub.f32 %v1171, %v1178
        %v1180 = vmul.f32 %v1179, 1.442695
        %v1181 = vpow.pop %v1180
        %v1182 = vsel %vm654, %v1181, 0.0
        %1183 = vadd.xlane.f32.xlu0 %v1182
        %v1184 = vpop.xlane.xlu0 %1183
        %v1185 = vrcp.pop %v1184
        %v1186 = vmul.f32 %v1181, %v1185
        %v1187 = vpack.c.bf16 %v1186, %v1186
        %1188 = vrot.lane.b32.xlu0 %v650, 40
        %v1189 = vpop.permute.xlu0 %1188
        %v1191 = vsel %vm654, %v1187, 0
        %v1194 = vsel %vm718, %v1189, 0
        %1196 = vmatprep.subr.bf16.mxu0 0
        %1197 = vmatpush1.bf16.msra.mxu0 %v1194
        %1198 = vmatprep.subr.bf16.mxu0 0
        %1199 = vmatpush1.bf16.msra.mxu0 0
        %1200 = vmatprep.subr.bf16.mxu0 0
        %1201 = vmatpush1.bf16.msra.mxu0 0
        %1202 = vmatprep.subr.bf16.mxu0 0
        %1203 = vmatpush1.bf16.msra.mxu0 0
        %1204 = vmatprep.subr.bf16.mxu0 0
        %1205 = vmatpush1.bf16.msra.mxu0 0
        %1206 = vmatprep.subr.bf16.mxu0 0
        %1207 = vmatpush1.bf16.msra.mxu0 0
        %1208 = vmatprep.subr.bf16.mxu0 0
        %1209 = vmatpush1.bf16.msra.mxu0 0
        %1210 = vmatprep.subr.bf16.mxu0 0
        %1211 = vmatpush1.bf16.msra.mxu0 0
        %1212 = vmatprep.subr.bf16.mxu0 0
        %1213 = vmatpush1.bf16.msra.mxu0 0
        %1214 = vmatprep.subr.bf16.mxu0 0
        %1215 = vmatpush1.bf16.msra.mxu0 0
        %1216 = vmatprep.subr.bf16.mxu0 0
        %1217 = vmatpush1.bf16.msra.mxu0 0
        %1218 = vmatprep.subr.bf16.mxu0 0
        %1219 = vmatpush1.bf16.msra.mxu0 0
        %1220 = vmatprep.subr.bf16.mxu0 0
        %1221 = vmatpush1.bf16.msra.mxu0 0
        %1222 = vmatprep.subr.bf16.mxu0 0
        %1223 = vmatpush1.bf16.msra.mxu0 0
        %1224 = vmatprep.subr.bf16.mxu0 0
        %1225 = vmatpush1.bf16.msra.mxu0 0
        %1226 = vmatprep.subr.bf16.mxu0 0
        %1227 = vmatpush1.bf16.msra.mxu0 0
        %1228 = vmatprep.mubr.bf16.mxu0 0
        %1229 = vmatmul.mubr.bf16.gmra.mrb[0].mxu0 %v1191
        %v1230 = vpop.f32.mrb[0].mxu0
        %v1231 = vadd.f32 0.0, %v1230
        %v1232 = vpop.f32.mrb[0].mxu0
        %v1233 = vpop.f32.mrb[0].mxu0
        %v1234 = vpop.f32.mrb[0].mxu0
        %1235 = vdwg.mxu0
        %v1236 = vpack.c.bf16 %v1231, %v1231
        %v1238 = vsel %vm654, %v1236, 0
        %v1241 = vsel %vm718, %v641, 0
        %1243 = vmatprep.subr.bf16.mxu0 0
        %1244 = vmatpush1.bf16.msra.mxu0 %v1241
        %1245 = vmatprep.subr.bf16.mxu0 0
        %1246 = vmatpush1.bf16.msra.mxu0 0
        %1247 = vmatprep.subr.bf16.mxu0 0
        %1248 = vmatpush1.bf16.msra.mxu0 0
        %1249 = vmatprep.subr.bf16.mxu0 0
        %1250 = vmatpush1.bf16.msra.mxu0 0
        %1251 = vmatprep.subr.bf16.mxu0 0
        %1252 = vmatpush1.bf16.msra.mxu0 0
        %1253 = vmatprep.subr.bf16.mxu0 0
        %1254 = vmatpush1.bf16.msra.mxu0 0
        %1255 = vmatprep.subr.bf16.mxu0 0
        %1256 = vmatpush1.bf16.msra.mxu0 0
        %1257 = vmatprep.subr.bf16.mxu0 0
        %1258 = vmatpush1.bf16.msra.mxu0 0
        %1259 = vmatprep.subr.bf16.mxu0 0
        %1260 = vmatpush1.bf16.msra.mxu0 0
        %1261 = vmatprep.subr.bf16.mxu0 0
        %1262 = vmatpush1.bf16.msra.mxu0 0
        %1263 = vmatprep.subr.bf16.mxu0 0
        %1264 = vmatpush1.bf16.msra.mxu0 0
        %1265 = vmatprep.subr.bf16.mxu0 0
        %1266 = vmatpush1.bf16.msra.mxu0 0
        %1267 = vmatprep.subr.bf16.mxu0 0
        %1268 = vmatpush1.bf16.msra.mxu0 0
        %1269 = vmatprep.subr.bf16.mxu0 0
        %1270 = vmatpush1.bf16.msra.mxu0 0
        %1271 = vmatprep.subr.bf16.mxu0 0
        %1272 = vmatpush1.bf16.msra.mxu0 0
        %1273 = vmatprep.subr.bf16.mxu0 0
        %1274 = vmatpush1.bf16.msra.mxu0 0
        %1275 = vmatprep.mubr.bf16.mxu0 0
        %1276 = vmatmul.mubr.bf16.gmra.mrb[0].mxu0 %v1238
        %v1277 = vpop.f32.mrb[0].mxu0
        %v1278 = vadd.f32 0.0, %v1277
        %v1279 = vpop.f32.mrb[0].mxu0
        %v1280 = vpop.f32.mrb[0].mxu0
        %v1281 = vpop.f32.mrb[0].mxu0
        %1282 = vdwg.mxu0
        %v1283 = vadd.f32 %v1125, %v1278
        %v1284 = vld [vmem:[#allocation7] sm:$0x1]
        %v1285 = vld [vmem:[#allocation8] sm:$0x1]
        %v1286 = vsel %vm594, %v1283, 0.0
        %1287 = vadd.xlane.f32.xlu0 %v1286
        %v1288 = vpop.xlane.xlu0 %1287
        %v1289 = vrcp.pop 32.0
        %v1290 = vmul.f32 %v1288, %v1289
        %v1291 = vsub.f32 %v1283, %v1290
        %v1292 = vmul.f32 %v1291, %v1291
        %v1293 = vsel %vm594, %v1292, 0.0
        %1294 = vadd.xlane.f32.xlu0 %v1293
        %v1295 = vpop.xlane.xlu0 %1294
        %v1296 = vmul.f32 %v1295, %v1289
        %v1297 = vadd.f32 %v1296, 1e-05
        %v1298 = vrsqrt.pop %v1297
        %v1299 = vmul.f32 %v1291, %v1298
        %v1301 = vlaneseq
        %v1302 = vshrl.u32 %v1301, 7
        %v1303 = vsub.s32 0, %v1302
        %v1304 = vrot.slane %v1284, %v1303
        %v1306 = vmul.f32 %v1299, %v1304
        %v1308 = vlaneseq
        %v1309 = vshrl.u32 %v1308, 7
        %v1310 = vsub.s32 0, %v1309
        %v1311 = vrot.slane %v1285, %v1310
        %v1313 = vadd.f32 %v1306, %v1311
        %v1314 = vpack.c.bf16 %v1313, %v1313
        %v1315 = vld [vmem:[%s7] sm:$0xf]
        %v1316 = vld [vmem:[%s7 + $0x4] sm:$0xf]
        %v1317 = vld [vmem:[%s7 + $0x8] sm:$0xf]
        %v1318 = vld [vmem:[%s7 + $0xc] sm:$0xf]
        %v1319 = vld [vmem:[#allocation10] sm:$0x1]
        %v1321 = vlaneseq
        %v1322 = vshrl.u32 %v1321, 7
        %v1323 = vsub.s32 0, %v1322
        %v1324 = vrot.slane %v1319, %v1323
        %v1330 = vunpack.c.l.b16 %v1315
        %v1331 = vunpack.c.l.b16 %v1316
        %v1332 = vunpack.c.l.b16 %v1317
        %v1333 = vunpack.c.l.b16 %v1318
        %v1334 = vpack.c.b16 %v1331, %v1330
        %v1335 = vpack.c.b16 %v1333, %v1332
        %v1339 = vsel %vm594, %v1314, 0
        %1341 = vmatprep.subr.bf16.mxu0 0
        %1342 = vmatpush1.bf16.msra.mxu0 %v1334
        %1343 = vmatprep.subr.bf16.mxu0 0
        %1344 = vmatpush1.bf16.msra.mxu0 %v1335
        %1345 = vmatprep.subr.bf16.mxu0 0
        %1346 = vmatpush1.bf16.msra.mxu0 0
        %1347 = vmatprep.subr.bf16.mxu0 0
        %1348 = vmatpush1.bf16.msra.mxu0 0
        %1349 = vmatprep.subr.bf16.mxu0 0
        %1350 = vmatpush1.bf16.msra.mxu0 0
        %1351 = vmatprep.subr.bf16.mxu0 0
        %1352 = vmatpush1.bf16.msra.mxu0 0
        %1353 = vmatprep.subr.bf16.mxu0 0
        %1354 = vmatpush1.bf16.msra.mxu0 0
        %1355 = vmatprep.subr.bf16.mxu0 0
        %1356 = vmatpush1.bf16.msra.mxu0 0
        %1357 = vmatprep.subr.bf16.mxu0 0
        %1358 = vmatpush1.bf16.msra.mxu0 0
        %1359 = vmatprep.subr.bf16.mxu0 0
        %1360 = vmatpush1.bf16.msra.mxu0 0
        %1361 = vmatprep.subr.bf16.mxu0 0
        %1362 = vmatpush1.bf16.msra.mxu0 0
        %1363 = vmatprep.subr.bf16.mxu0 0
        %1364 = vmatpush1.bf16.msra.mxu0 0
        %1365 = vmatprep.subr.bf16.mxu0 0
        %1366 = vmatpush1.bf16.msra.mxu0 0
        %1367 = vmatprep.subr.bf16.mxu0 0
        %1368 = vmatpush1.bf16.msra.mxu0 0
        %1369 = vmatprep.subr.bf16.mxu0 0
        %1370 = vmatpush1.bf16.msra.mxu0 0
        %1371 = vmatprep.subr.bf16.mxu0 0
        %1372 = vmatpush1.bf16.msra.mxu0 0
        %1373 = vmatprep.mubr.bf16.mxu0 0
        %1374 = vmatmul.mubr.bf16.gmra.mrb[0].mxu0 %v1339
        %v1375 = vpop.f32.mrb[0].mxu0
        %v1376 = vadd.f32 %v1324, %v1375
        %v1377 = vpop.f32.mrb[0].mxu0
        %v1378 = vpop.f32.mrb[0].mxu0
        %v1379 = vpop.f32.mrb[0].mxu0
        %1380 = vdwg.mxu0
        %v1381 = vmax.f32 %v1376, 0.0
        %v1382 = vpack.c.bf16 %v1381, %v1381
        %v1383 = vld [vmem:[%s9] sm:$0xf]
        %v1384 = vld [vmem:[%s9 + $0x4] sm:$0xf]
        %v1385 = vld [vmem:[%s9 + $0x8] sm:$0xf]
        %v1386 = vld [vmem:[%s9 + $0xc] sm:$0xf]
        %v1387 = vld [vmem:[%s9 + $0x10] sm:$0xf]
        %v1388 = vld [vmem:[%s9 + $0x14] sm:$0xf]
        %v1389 = vld [vmem:[%s9 + $0x18] sm:$0xf]
        %v1390 = vld [vmem:[%s9 + $0x1c] sm:$0xf]
        %v1391 = vld [vmem:[%s10] sm:$0x1]
        %v1393 = vlaneseq
        %v1394 = vshrl.u32 %v1393, 7
        %v1395 = vsub.s32 0, %v1394
        %v1396 = vrot.slane %v1391, %v1395
        %v1406 = vunpack.c.l.b16 %v1383
        %v1407 = vunpack.c.l.b16 %v1384
        %v1408 = vunpack.c.l.b16 %v1385
        %v1409 = vunpack.c.l.b16 %v1386
        %v1410 = vunpack.c.l.b16 %v1387
        %v1411 = vunpack.c.l.b16 %v1388
        %v1412 = vunpack.c.l.b16 %v1389
        %v1413 = vunpack.c.l.b16 %v1390
        %v1414 = vpack.c.b16 %v1407, %v1406
        %v1415 = vpack.c.b16 %v1409, %v1408
        %v1416 = vpack.c.b16 %v1411, %v1410
        %v1417 = vpack.c.b16 %v1413, %v1412
        %vm1422 = vcmask 523264
        %v1424 = vsel %vm1422, %v1382, 0
        %1426 = vmatprep.subr.bf16.mxu0 0
        %1427 = vmatpush1.bf16.msra.mxu0 %v1414
        %1428 = vmatprep.subr.bf16.mxu0 0
        %1429 = vmatpush1.bf16.msra.mxu0 %v1415
        %1430 = vmatprep.subr.bf16.mxu0 0
        %1431 = vmatpush1.bf16.msra.mxu0 %v1416
        %1432 = vmatprep.subr.bf16.mxu0 0
        %1433 = vmatpush1.bf16.msra.mxu0 %v1417
        %1434 = vmatprep.subr.bf16.mxu0 0
        %1435 = vmatpush1.bf16.msra.mxu0 0
        %1436 = vmatprep.subr.bf16.mxu0 0
        %1437 = vmatpush1.bf16.msra.mxu0 0
        %1438 = vmatprep.subr.bf16.mxu0 0
        %1439 = vmatpush1.bf16.msra.mxu0 0
        %1440 = vmatprep.subr.bf16.mxu0 0
        %1441 = vmatpush1.bf16.msra.mxu0 0
        %1442 = vmatprep.subr.bf16.mxu0 0
        %1443 = vmatpush1.bf16.msra.mxu0 0
        %1444 = vmatprep.subr.bf16.mxu0 0
        %1445 = vmatpush1.bf16.msra.mxu0 0
        %1446 = vmatprep.subr.bf16.mxu0 0
        %1447 = vmatpush1.bf16.msra.mxu0 0
        %1448 = vmatprep.subr.bf16.mxu0 0
        %1449 = vmatpush1.bf16.msra.mxu0 0
        %1450 = vmatprep.subr.bf16.mxu0 0
        %1451 = vmatpush1.bf16.msra.mxu0 0
        %1452 = vmatprep.subr.bf16.mxu0 0
        %1453 = vmatpush1.bf16.msra.mxu0 0
        %1454 = vmatprep.subr.bf16.mxu0 0
        %1455 = vmatpush1.bf16.msra.mxu0 0
        %1456 = vmatprep.subr.bf16.mxu0 0
        %1457 = vmatpush1.bf16.msra.mxu0 0
        %1458 = vmatprep.mubr.bf16.mxu0 0
        %1459 = vmatmul.mubr.bf16.gmra.mrb[0].mxu0 %v1424
        %v1460 = vpop.f32.mrb[0].mxu0
        %v1461 = vadd.f32 %v1396, %v1460
        %v1462 = vpop.f32.mrb[0].mxu0
        %v1463 = vpop.f32.mrb[0].mxu0
        %v1464 = vpop.f32.mrb[0].mxu0
        %1465 = vdwg.mxu0
        %v1466 = vadd.f32 %v1313, %v1461
        %v1467 = vld [vmem:[%s11] sm:$0x1]
        %v1468 = vld [vmem:[%s12] sm:$0x1]
        %v1469 = vsel %vm594, %v1466, 0.0
        %1470 = vadd.xlane.f32.xlu0 %v1469
        %v1471 = vpop.xlane.xlu0 %1470
        %v1472 = vmul.f32 %v1471, %v1289
        %v1473 = vsub.f32 %v1466, %v1472
        %v1474 = vmul.f32 %v1473, %v1473
        %v1475 = vsel %vm594, %v1474, 0.0
        %1476 = vadd.xlane.f32.xlu0 %v1475
        %v1477 = vpop.xlane.xlu0 %1476
        %v1478 = vmul.f32 %v1477, %v1289
        %v1479 = vadd.f32 %v1478, 1e-05
        %v1480 = vrsqrt.pop %v1479
        %v1481 = vmul.f32 %v1473, %v1480
        %v1483 = vlaneseq
        %v1484 = vshrl.u32 %v1483, 7
        %v1485 = vsub.s32 0, %v1484
        %v1486 = vrot.slane %v1467, %v1485
        %v1488 = vmul.f32 %v1481, %v1486
        %v1490 = vlaneseq
        %v1491 = vshrl.u32 %v1490, 7
        %v1492 = vsub.s32 0, %v1491
        %v1493 = vrot.slane %v1468, %v1492
        %v1495 = vadd.f32 %v1488, %v1493
        %v1496 = vpack.c.bf16 %v1495, %v1495
        %s1497 = scalar_lea.vmem %s1, 16
        %v1498 = vld [vmem:[%s1497] sm:$0xf]
        %v1499 = vld [vmem:[%s1497 + $0x4] sm:$0xf]
        %v1500 = vld [vmem:[%s1497 + $0x8] sm:$0xf]
        %v1501 = vld [vmem:[%s1497 + $0xc] sm:$0xf]
        %s1502 = scalar_lea.vmem %s2, 1
        %v1503 = vld [vmem:[%s1502] sm:$0x1]
        %v1505 = vlaneseq
        %v1506 = vshrl.u32 %v1505, 7
        %v1507 = vsub.s32 0, %v1506
        %v1508 = vrot.slane %v1503, %v1507
        %v1514 = vunpack.c.l.b16 %v1498
        %v1515 = vunpack.c.l.b16 %v1499
        %v1516 = vunpack.c.l.b16 %v1500
        %v1517 = vunpack.c.l.b16 %v1501
        %v1518 = vpack.c.b16 %v1515, %v1514
        %v1519 = vpack.c.b16 %v1517, %v1516
        %v1523 = vsel %vm594, %v1496, 0
        %1525 = vmatprep.subr.bf16.mxu0 0
        %1526 = vmatpush1.bf16.msra.mxu0 %v1518
        %1527 = vmatprep.subr.bf16.mxu0 0
        %1528 = vmatpush1.bf16.msra.mxu0 %v1519
        %1529 = vmatprep.subr.bf16.mxu0 0
        %1530 = vmatpush1.bf16.msra.mxu0 0
        %1531 = vmatprep.subr.bf16.mxu0 0
        %1532 = vmatpush1.bf16.msra.mxu0 0
        %1533 = vmatprep.subr.bf16.mxu0 0
        %1534 = vmatpush1.bf16.msra.mxu0 0
        %1535 = vmatprep.subr.bf16.mxu0 0
        %1536 = vmatpush1.bf16.msra.mxu0 0
        %1537 = vmatprep.subr.bf16.mxu0 0
        %1538 = vmatpush1.bf16.msra.mxu0 0
        %1539 = vmatprep.subr.bf16.mxu0 0
        %1540 = vmatpush1.bf16.msra.mxu0 0
        %1541 = vmatprep.subr.bf16.mxu0 0
        %1542 = vmatpush1.bf16.msra.mxu0 0
        %1543 = vmatprep.subr.bf16.mxu0 0
        %1544 = vmatpush1.bf16.msra.mxu0 0
        %1545 = vmatprep.subr.bf16.mxu0 0
        %1546 = vmatpush1.bf16.msra.mxu0 0
        %1547 = vmatprep.subr.bf16.mxu0 0
        %1548 = vmatpush1.bf16.msra.mxu0 0
        %1549 = vmatprep.subr.bf16.mxu0 0
        %1550 = vmatpush1.bf16.msra.mxu0 0
        %1551 = vmatprep.subr.bf16.mxu0 0
        %1552 = vmatpush1.bf16.msra.mxu0 0
        %1553 = vmatprep.subr.bf16.mxu0 0
        %1554 = vmatpush1.bf16.msra.mxu0 0
        %1555 = vmatprep.subr.bf16.mxu0 0
        %1556 = vmatpush1.bf16.msra.mxu0 0
        %1557 = vmatprep.mubr.bf16.mxu0 0
        %1558 = vmatmul.mubr.bf16.gmra.mrb[0].mxu0 %v1523
        %v1559 = vpop.f32.mrb[0].mxu0
        %v1560 = vadd.f32 %v1508, %v1559
        %v1561 = vpop.f32.mrb[0].mxu0
        %v1562 = vpop.f32.mrb[0].mxu0
        %v1563 = vpop.f32.mrb[0].mxu0
        %1564 = vdwg.mxu0
        %s1565 = scalar_lea.vmem %s3, 16
        %v1566 = vld [vmem:[%s1565] sm:$0xf]
        %v1567 = vld [vmem:[%s1565 + $0x4] sm:$0xf]
        %v1568 = vld [vmem:[%s1565 + $0x8] sm:$0xf]
        %v1569 = vld [vmem:[%s1565 + $0xc] sm:$0xf]
        %s1570 = scalar_lea.vmem [#allocation5], 1
        %v1571 = vld [vmem:[%s1570] sm:$0x1]
        %v1573 = vlaneseq
        %v1574 = vshrl.u32 %v1573, 7
        %v1575 = vsub.s32 0, %v1574
        %v1576 = vrot.slane %v1571, %v1575
        %v1578 = vadd.f32 %v1495, %v1576
        %v1579 = vpack.c.bf16 %v1560, %v1560
        %1581 = vrot.lane.b32.xlu0 %v1579, 96
        %v1582 = vpop.permute.xlu0 %1581
        %v1584 = vsel %vm654, %v1579, 0
        %v1587 = vsel %vm654, %v1582, 0
        %1589 = vmatprep.subr.bf16.mxu0 0
        %1590 = vmatpush1.bf16.xpose.msra.mxu0 %v1587
        %1591 = vmatprep.subr.bf16.mxu0 0
        %1592 = vmatpush1.bf16.xpose.msra.mxu0 0
        %1593 = vmatprep.subr.bf16.mxu0 0
        %1594 = vmatpush1.bf16.xpose.msra.mxu0 0
        %1595 = vmatprep.subr.bf16.mxu0 0
        %1596 = vmatpush1.bf16.xpose.msra.mxu0 0
        %1597 = vmatprep.subr.bf16.mxu0 0
        %1598 = vmatpush1.bf16.xpose.msra.mxu0 0
        %1599 = vmatprep.subr.bf16.mxu0 0
        %1600 = vmatpush1.bf16.xpose.msra.mxu0 0
        %1601 = vmatprep.subr.bf16.mxu0 0
        %1602 = vmatpush1.bf16.xpose.msra.mxu0 0
        %1603 = vmatprep.subr.bf16.mxu0 0
        %1604 = vmatpush1.bf16.xpose.msra.mxu0 0
        %1605 = vmatprep.subr.bf16.mxu0 0
        %1606 = vmatpush1.bf16.xpose.msra.mxu0 0
        %1607 = vmatprep.subr.bf16.mxu0 0
        %1608 = vmatpush1.bf16.xpose.msra.mxu0 0
        %1609 = vmatprep.subr.bf16.mxu0 0
        %1610 = vmatpush1.bf16.xpose.msra.mxu0 0
        %1611 = vmatprep.subr.bf16.mxu0 0
        %1612 = vmatpush1.bf16.xpose.msra.mxu0 0
        %1613 = vmatprep.subr.bf16.mxu0 0
        %1614 = vmatpush1.bf16.xpose.msra.mxu0 0
        %1615 = vmatprep.subr.bf16.mxu0 0
        %1616 = vmatpush1.bf16.xpose.msra.mxu0 0
        %1617 = vmatprep.subr.bf16.mxu0 0
        %1618 = vmatpush1.bf16.xpose.msra.mxu0 0
        %1619 = vmatprep.subr.bf16.mxu0 0
        %1620 = vmatpush1.bf16.xpose.msra.mxu0 0
        %1621 = vmatprep.mubr.bf16.mxu0 0
        %1622 = vmatmul.mubr.bf16.gmra.mrb[0].mxu0 %v1584
        %v1623 = vpop.f32.mrb[0].mxu0
        %v1624 = vadd.f32 0.0, %v1623
        %v1625 = vpop.f32.mrb[0].mxu0
        %v1626 = vpop.f32.mrb[0].mxu0
        %v1627 = vpop.f32.mrb[0].mxu0
        %1628 = vdwg.mxu0
        %v1629 = vsel %vm654, %v1624, -inf
        %1630 = vmax.xlane.f32.xlu0 %v1629
        %v1631 = vpop.xlane.xlu0 %1630
        %v1632 = vsub.f32 %v1624, %v1631
        %v1633 = vmul.f32 %v1632, 1.442695
        %v1634 = vpow.pop %v1633
        %v1635 = vsel %vm654, %v1634, 0.0
        %1636 = vadd.xlane.f32.xlu0 %v1635
        %v1637 = vpop.xlane.xlu0 %1636
        %v1638 = vrcp.pop %v1637
        %v1639 = vmul.f32 %v1634, %v1638
        %v1640 = vpack.c.bf16 %v1639, %v1639
        %1641 = vrot.lane.b32.xlu0 %v1579, 64
        %v1642 = vpop.permute.xlu0 %1641
        %v1644 = vsel %vm654, %v1640, 0
        %v1647 = vsel %vm718, %v1642, 0
        %1649 = vmatprep.subr.bf16.mxu0 0
        %1650 = vmatpush1.bf16.msra.mxu0 %v1647
        %1651 = vmatprep.subr.bf16.mxu0 0
        %1652 = vmatpush1.bf16.msra.mxu0 0
        %1653 = vmatprep.subr.bf16.mxu0 0
        %1654 = vmatpush1.bf16.msra.mxu0 0
        %1655 = vmatprep.subr.bf16.mxu0 0
        %1656 = vmatpush1.bf16.msra.mxu0 0
        %1657 = vmatprep.subr.bf16.mxu0 0
        %1658 = vmatpush1.bf16.msra.mxu0 0
        %1659 = vmatprep.subr.bf16.mxu0 0
        %1660 = vmatpush1.bf16.msra.mxu0 0
        %1661 = vmatprep.subr.bf16.mxu0 0
        %1662 = vmatpush1.bf16.msra.mxu0 0
        %1663 = vmatprep.subr.bf16.mxu0 0
        %1664 = vmatpush1.bf16.msra.mxu0 0
        %1665 = vmatprep.subr.bf16.mxu0 0
        %1666 = vmatpush1.bf16.msra.mxu0 0
        %1667 = vmatprep.subr.bf16.mxu0 0
        %1668 = vmatpush1.bf16.msra.mxu0 0
        %1669 = vmatprep.subr.bf16.mxu0 0
        %1670 = vmatpush1.bf16.msra.mxu0 0
        %1671 = vmatprep.subr.bf16.mxu0 0
        %1672 = vmatpush1.bf16.msra.mxu0 0
        %1673 = vmatprep.subr.bf16.mxu0 0
        %1674 = vmatpush1.bf16.msra.mxu0 0
        %1675 = vmatprep.subr.bf16.mxu0 0
        %1676 = vmatpush1.bf16.msra.mxu0 0
        %1677 = vmatprep.subr.bf16.mxu0 0
        %1678 = vmatpush1.bf16.msra.mxu0 0
        %1679 = vmatprep.subr.bf16.mxu0 0
        %1680 = vmatpush1.bf16.msra.mxu0 0
        %1681 = vmatprep.mubr.bf16.mxu0 0
        %1682 = vmatmul.mubr.bf16.gmra.mrb[0].mxu0 %v1644
        %v1683 = vpop.f32.mrb[0].mxu0
        %v1684 = vadd.f32 0.0, %v1683
        %v1685 = vpop.f32.mrb[0].mxu0
        %v1686 = vpop.f32.mrb[0].mxu0
        %v1687 = vpop.f32.mrb[0].mxu0
        %1688 = vdwg.mxu0
        %v1689 = vpack.c.bf16 %v1684, %v1684
        %v1691 = vsel %vm654, %v1689, 0
        %v1694 = vsel %vm718, %v1566, 0
        %1696 = vmatprep.subr.bf16.mxu0 0
        %1697 = vmatpush1.bf16.msra.mxu0 %v1694
        %1698 = vmatprep.subr.bf16.mxu0 0
        %1699 = vmatpush1.bf16.msra.mxu0 0
        %1700 = vmatprep.subr.bf16.mxu0 0
        %1701 = vmatpush1.bf16.msra.mxu0 0
        %1702 = vmatprep.subr.bf16.mxu0 0
        %1703 = vmatpush1.bf16.msra.mxu0 0
        %1704 = vmatprep.subr.bf16.mxu0 0
        %1705 = vmatpush1.bf16.msra.mxu0 0
        %1706 = vmatprep.subr.bf16.mxu0 0
        %1707 = vmatpush1.bf16.msra.mxu0 0
        %1708 = vmatprep.subr.bf16.mxu0 0
        %1709 = vmatpush1.bf16.msra.mxu0 0
        %1710 = vmatprep.subr.bf16.mxu0 0
        %1711 = vmatpush1.bf16.msra.mxu0 0
        %1712 = vmatprep.subr.bf16.mxu0 0
        %1713 = vmatpush1.bf16.msra.mxu0 0
        %1714 = vmatprep.subr.bf16.mxu0 0
        %1715 = vmatpush1.bf16.msra.mxu0 0
        %1716 = vmatprep.subr.bf16.mxu0 0
        %1717 = vmatpush1.bf16.msra.mxu0 0
        %1718 = vmatprep.subr.bf16.mxu0 0
        %1719 = vmatpush1.bf16.msra.mxu0 0
        %1720 = vmatprep.subr.bf16.mxu0 0
        %1721 = vmatpush1.bf16.msra.mxu0 0
        %1722 = vmatprep.subr.bf16.mxu0 0
        %1723 = vmatpush1.bf16.msra.mxu0 0
        %1724 = vmatprep.subr.bf16.mxu0 0
        %1725 = vmatpush1.bf16.msra.mxu0 0
        %1726 = vmatprep.subr.bf16.mxu0 0
        %1727 = vmatpush1.bf16.msra.mxu0 0
        %1728 = vmatprep.mubr.bf16.mxu0 0
        %1729 = vmatmul.mubr.bf16.gmra.mrb[0].mxu0 %v1691
        %v1730 = vpop.f32.mrb[0].mxu0
        %v1731 = vadd.f32 0.0, %v1730
        %v1732 = vpop.f32.mrb[0].mxu0
        %v1733 = vpop.f32.mrb[0].mxu0
        %v1734 = vpop.f32.mrb[0].mxu0
        %1735 = vdwg.mxu0
        %v1736 = vadd.f32 %v1578, %v1731
        %1737 = vrot.lane.b32.xlu0 %v1579, 120
        %v1738 = vpop.permute.xlu0 %1737
        %1739 = vrot.lane.b32.xlu0 %v1579, 88
        %v1740 = vpop.permute.xlu0 %1739
        %v1742 = vsel %vm654, %v1738, 0
        %v1745 = vsel %vm654, %v1740, 0
        %1747 = vmatprep.subr.bf16.mxu0 0
        %1748 = vmatpush1.bf16.xpose.msra.mxu0 %v1745
        %1749 = vmatprep.subr.bf16.mxu0 0
        %1750 = vmatpush1.bf16.xpose.msra.mxu0 0
        %1751 = vmatprep.subr.bf16.mxu0 0
        %1752 = vmatpush1.bf16.xpose.msra.mxu0 0
        %1753 = vmatprep.subr.bf16.mxu0 0
        %1754 = vmatpush1.bf16.xpose.msra.mxu0 0
        %1755 = vmatprep.subr.bf16.mxu0 0
        %1756 = vmatpush1.bf16.xpose.msra.mxu0 0
        %1757 = vmatprep.subr.bf16.mxu0 0
        %1758 = vmatpush1.bf16.xpose.msra.mxu0 0
        %1759 = vmatprep.subr.bf16.mxu0 0
        %1760 = vmatpush1.bf16.xpose.msra.mxu0 0
        %1761 = vmatprep.subr.bf16.mxu0 0
        %1762 = vmatpush1.bf16.xpose.msra.mxu0 0
        %1763 = vmatprep.subr.bf16.mxu0 0
        %1764 = vmatpush1.bf16.xpose.msra.mxu0 0
        %1765 = vmatprep.subr.bf16.mxu0 0
        %1766 = vmatpush1.bf16.xpose.msra.mxu0 0
        %1767 = vmatprep.subr.bf16.mxu0 0
        %1768 = vmatpush1.bf16.xpose.msra.mxu0 0
        %1769 = vmatprep.subr.bf16.mxu0 0
        %1770 = vmatpush1.bf16.xpose.msra.mxu0 0
        %1771 = vmatprep.subr.bf16.mxu0 0
        %1772 = vmatpush1.bf16.xpose.msra.mxu0 0
        %1773 = vmatprep.subr.bf16.mxu0 0
        %1774 = vmatpush1.bf16.xpose.msra.mxu0 0
        %1775 = vmatprep.subr.bf16.mxu0 0
        %1776 = vmatpush1.bf16.xpose.msra.mxu0 0
        %1777 = vmatprep.subr.bf16.mxu0 0
        %1778 = vmatpush1.bf16.xpose.msra.mxu0 0
        %1779 = vmatprep.mubr.bf16.mxu0 0
        %1780 = vmatmul.mubr.bf16.gmra.mrb[0].mxu0 %v1742
        %v1781 = vpop.f32.mrb[0].mxu0
        %v1782 = vadd.f32 0.0, %v1781
        %v1783 = vpop.f32.mrb[0].mxu0
        %v1784 = vpop.f32.mrb[0].mxu0
        %v1785 = vpop.f32.mrb[0].mxu0
        %1786 = vdwg.mxu0
        %v1787 = vsel %vm654, %v1782, -inf
        %1788 = vmax.xlane.f32.xlu0 %v1787
        %v1789 = vpop.xlane.xlu0 %1788
        %v1790 = vsub.f32 %v1782, %v1789
        %v1791 = vmul.f32 %v1790, 1.442695
        %v1792 = vpow.pop %v1791
        %v1793 = vsel %vm654, %v1792, 0.0
        %1794 = vadd.xlane.f32.xlu0 %v1793
        %v1795 = vpop.xlane.xlu0 %1794
        %v1796 = vrcp.pop %v1795
        %v1797 = vmul.f32 %v1792, %v1796
        %v1798 = vpack.c.bf16 %v1797, %v1797
        %1799 = vrot.lane.b32.xlu0 %v1579, 56
        %v1800 = vpop.permute.xlu0 %1799
        %v1802 = vsel %vm654, %v1798, 0
        %v1805 = vsel %vm718, %v1800, 0
        %1807 = vmatprep.subr.bf16.mxu0 0
        %1808 = vmatpush1.bf16.msra.mxu0 %v1805
        %1809 = vmatprep.subr.bf16.mxu0 0
        %1810 = vmatpush1.bf16.msra.mxu0 0
        %1811 = vmatprep.subr.bf16.mxu0 0
        %1812 = vmatpush1.bf16.msra.mxu0 0
        %1813 = vmatprep.subr.bf16.mxu0 0
        %1814 = vmatpush1.bf16.msra.mxu0 0
        %1815 = vmatprep.subr.bf16.mxu0 0
        %1816 = vmatpush1.bf16.msra.mxu0 0
        %1817 = vmatprep.subr.bf16.mxu0 0
        %1818 = vmatpush1.bf16.msra.mxu0 0
        %1819 = vmatprep.subr.bf16.mxu0 0
        %1820 = vmatpush1.bf16.msra.mxu0 0
        %1821 = vmatprep.subr.bf16.mxu0 0
        %1822 = vmatpush1.bf16.msra.mxu0 0
        %1823 = vmatprep.subr.bf16.mxu0 0
        %1824 = vmatpush1.bf16.msra.mxu0 0
        %1825 = vmatprep.subr.bf16.mxu0 0
        %1826 = vmatpush1.bf16.msra.mxu0 0
        %1827 = vmatprep.subr.bf16.mxu0 0
        %1828 = vmatpush1.bf16.msra.mxu0 0
        %1829 = vmatprep.subr.bf16.mxu0 0
        %1830 = vmatpush1.bf16.msra.mxu0 0
        %1831 = vmatprep.subr.bf16.mxu0 0
        %1832 = vmatpush1.bf16.msra.mxu0 0
        %1833 = vmatprep.subr.bf16.mxu0 0
        %1834 = vmatpush1.bf16.msra.mxu0 0
        %1835 = vmatprep.subr.bf16.mxu0 0
        %1836 = vmatpush1.bf16.msra.mxu0 0
        %1837 = vmatprep.subr.bf16.mxu0 0
        %1838 = vmatpush1.bf16.msra.mxu0 0
        %1839 = vmatprep.mubr.bf16.mxu0 0
        %1840 = vmatmul.mubr.bf16.gmra.mrb[0].mxu0 %v1802
        %v1841 = vpop.f32.mrb[0].mxu0
        %v1842 = vadd.f32 0.0, %v1841
        %v1843 = vpop.f32.mrb[0].mxu0
        %v1844 = vpop.f32.mrb[0].mxu0
        %v1845 = vpop.f32.mrb[0].mxu0
        %1846 = vdwg.mxu0
        %v1847 = vpack.c.bf16 %v1842, %v1842
        %v1849 = vsel %vm654, %v1847, 0
        %v1852 = vsel %vm718, %v1567, 0
        %1854 = vmatprep.subr.bf16.mxu0 0
        %1855 = vmatpush1.bf16.msra.mxu0 %v1852
        %1856 = vmatprep.subr.bf16.mxu0 0
        %1857 = vmatpush1.bf16.msra.mxu0 0
        %1858 = vmatprep.subr.bf16.mxu0 0
        %1859 = vmatpush1.bf16.msra.mxu0 0
        %1860 = vmatprep.subr.bf16.mxu0 0
        %1861 = vmatpush1.bf16.msra.mxu0 0
        %1862 = vmatprep.subr.bf16.mxu0 0
        %1863 = vmatpush1.bf16.msra.mxu0 0
        %1864 = vmatprep.subr.bf16.mxu0 0
        %1865 = vmatpush1.bf16.msra.mxu0 0
        %1866 = vmatprep.subr.bf16.mxu0 0
        %1867 = vmatpush1.bf16.msra.mxu0 0
        %1868 = vmatprep.subr.bf16.mxu0 0
        %1869 = vmatpush1.bf16.msra.mxu0 0
        %1870 = vmatprep.subr.bf16.mxu0 0
        %1871 = vmatpush1.bf16.msra.mxu0 0
        %1872 = vmatprep.subr.bf16.mxu0 0
        %1873 = vmatpush1.bf16.msra.mxu0 0
        %1874 = vmatprep.subr.bf16.mxu0 0
        %1875 = vmatpush1.bf16.msra.mxu0 0
        %1876 = vmatprep.subr.bf16.mxu0 0
        %1877 = vmatpush1.bf16.msra.mxu0 0
        %1878 = vmatprep.subr.bf16.mxu0 0
        %1879 = vmatpush1.bf16.msra.mxu0 0
        %1880 = vmatprep.subr.bf16.mxu0 0
        %1881 = vmatpush1.bf16.msra.mxu0 0
        %1882 = vmatprep.subr.bf16.mxu0 0
        %1883 = vmatpush1.bf16.msra.mxu0 0
        %1884 = vmatprep.subr.bf16.mxu0 0
        %1885 = vmatpush1.bf16.msra.mxu0 0
        %1886 = vmatprep.mubr.bf16.mxu0 0
        %1887 = vmatmul.mubr.bf16.gmra.mrb[0].mxu0 %v1849
        %v1888 = vpop.f32.mrb[0].mxu0
        %v1889 = vadd.f32 0.0, %v1888
        %v1890 = vpop.f32.mrb[0].mxu0
        %v1891 = vpop.f32.mrb[0].mxu0
        %v1892 = vpop.f32.mrb[0].mxu0
        %1893 = vdwg.mxu0
        %v1894 = vadd.f32 %v1736, %v1889
        %1895 = vrot.lane.b32.xlu0 %v1579, 112
        %v1896 = vpop.permute.xlu0 %1895
        %1897 = vrot.lane.b32.xlu0 %v1579, 80
        %v1898 = vpop.permute.xlu0 %1897
        %v1900 = vsel %vm654, %v1896, 0
        %v1903 = vsel %vm654, %v1898, 0
        %1905 = vmatprep.subr.bf16.mxu0 0
        %1906 = vmatpush1.bf16.xpose.msra.mxu0 %v1903
        %1907 = vmatprep.subr.bf16.mxu0 0
        %1908 = vmatpush1.bf16.xpose.msra.mxu0 0
        %1909 = vmatprep.subr.bf16.mxu0 0
        %1910 = vmatpush1.bf16.xpose.msra.mxu0 0
        %1911 = vmatprep.subr.bf16.mxu0 0
        %1912 = vmatpush1.bf16.xpose.msra.mxu0 0
        %1913 = vmatprep.subr.bf16.mxu0 0
        %1914 = vmatpush1.bf16.xpose.msra.mxu0 0
        %1915 = vmatprep.subr.bf16.mxu0 0
        %1916 = vmatpush1.bf16.xpose.msra.mxu0 0
        %1917 = vmatprep.subr.bf16.mxu0 0
        %1918 = vmatpush1.bf16.xpose.msra.mxu0 0
        %1919 = vmatprep.subr.bf16.mxu0 0
        %1920 = vmatpush1.bf16.xpose.msra.mxu0 0
        %1921 = vmatprep.subr.bf16.mxu0 0
        %1922 = vmatpush1.bf16.xpose.msra.mxu0 0
        %1923 = vmatprep.subr.bf16.mxu0 0
        %1924 = vmatpush1.bf16.xpose.msra.mxu0 0
        %1925 = vmatprep.subr.bf16.mxu0 0
        %1926 = vmatpush1.bf16.xpose.msra.mxu0 0
        %1927 = vmatprep.subr.bf16.mxu0 0
        %1928 = vmatpush1.bf16.xpose.msra.mxu0 0
        %1929 = vmatprep.subr.bf16.mxu0 0
        %1930 = vmatpush1.bf16.xpose.msra.mxu0 0
        %1931 = vmatprep.subr.bf16.mxu0 0
        %1932 = vmatpush1.bf16.xpose.msra.mxu0 0
        %1933 = vmatprep.subr.bf16.mxu0 0
        %1934 = vmatpush1.bf16.xpose.msra.mxu0 0
        %1935 = vmatprep.subr.bf16.mxu0 0
        %1936 = vmatpush1.bf16.xpose.msra.mxu0 0
        %1937 = vmatprep.mubr.bf16.mxu0 0
        %1938 = vmatmul.mubr.bf16.gmra.mrb[0].mxu0 %v1900
        %v1939 = vpop.f32.mrb[0].mxu0
        %v1940 = vadd.f32 0.0, %v1939
        %v1941 = vpop.f32.mrb[0].mxu0
        %v1942 = vpop.f32.mrb[0].mxu0
        %v1943 = vpop.f32.mrb[0].mxu0
        %1944 = vdwg.mxu0
        %v1945 = vsel %vm654, %v1940, -inf
        %1946 = vmax.xlane.f32.xlu0 %v1945
        %v1947 = vpop.xlane.xlu0 %1946
        %v1948 = vsub.f32 %v1940, %v1947
        %v1949 = vmul.f32 %v1948, 1.442695
        %v1950 = vpow.pop %v1949
        %v1951 = vsel %vm654, %v1950, 0.0
        %1952 = vadd.xlane.f32.xlu0 %v1951
        %v1953 = vpop.xlane.xlu0 %1952
        %v1954 = vrcp.pop %v1953
        %v1955 = vmul.f32 %v1950, %v1954
        %v1956 = vpack.c.bf16 %v1955, %v1955
        %1957 = vrot.lane.b32.xlu0 %v1579, 48
        %v1958 = vpop.permute.xlu0 %1957
        %v1960 = vsel %vm654, %v1956, 0
        %v1963 = vsel %vm718, %v1958, 0
        %1965 = vmatprep.subr.bf16.mxu0 0
        %1966 = vmatpush1.bf16.msra.mxu0 %v1963
        %1967 = vmatprep.subr.bf16.mxu0 0
        %1968 = vmatpush1.bf16.msra.mxu0 0
        %1969 = vmatprep.subr.bf16.mxu0 0
        %1970 = vmatpush1.bf16.msra.mxu0 0
        %1971 = vmatprep.subr.bf16.mxu0 0
        %1972 = vmatpush1.bf16.msra.mxu0 0
        %1973 = vmatprep.subr.bf16.mxu0 0
        %1974 = vmatpush1.bf16.msra.mxu0 0
        %1975 = vmatprep.subr.bf16.mxu0 0
        %1976 = vmatpush1.bf16.msra.mxu0 0
        %1977 = vmatprep.subr.bf16.mxu0 0
        %1978 = vmatpush1.bf16.msra.mxu0 0
        %1979 = vmatprep.subr.bf16.mxu0 0
        %1980 = vmatpush1.bf16.msra.mxu0 0
        %1981 = vmatprep.subr.bf16.mxu0 0
        %1982 = vmatpush1.bf16.msra.mxu0 0
        %1983 = vmatprep.subr.bf16.mxu0 0
        %1984 = vmatpush1.bf16.msra.mxu0 0
        %1985 = vmatprep.subr.bf16.mxu0 0
        %1986 = vmatpush1.bf16.msra.mxu0 0
        %1987 = vmatprep.subr.bf16.mxu0 0
        %1988 = vmatpush1.bf16.msra.mxu0 0
        %1989 = vmatprep.subr.bf16.mxu0 0
        %1990 = vmatpush1.bf16.msra.mxu0 0
        %1991 = vmatprep.subr.bf16.mxu0 0
        %1992 = vmatpush1.bf16.msra.mxu0 0
        %1993 = vmatprep.subr.bf16.mxu0 0
        %1994 = vmatpush1.bf16.msra.mxu0 0
        %1995 = vmatprep.subr.bf16.mxu0 0
        %1996 = vmatpush1.bf16.msra.mxu0 0
        %1997 = vmatprep.mubr.bf16.mxu0 0
        %1998 = vmatmul.mubr.bf16.gmra.mrb[0].mxu0 %v1960
        %v1999 = vpop.f32.mrb[0].mxu0
        %v2000 = vadd.f32 0.0, %v1999
        %v2001 = vpop.f32.mrb[0].mxu0
        %v2002 = vpop.f32.mrb[0].mxu0
        %v2003 = vpop.f32.mrb[0].mxu0
        %2004 = vdwg.mxu0
        %v2005 = vpack.c.bf16 %v2000, %v2000
        %v2007 = vsel %vm654, %v2005, 0
        %v2010 = vsel %vm718, %v1568, 0
        %2012 = vmatprep.subr.bf16.mxu0 0
        %2013 = vmatpush1.bf16.msra.mxu0 %v2010
        %2014 = vmatprep.subr.bf16.mxu0 0
        %2015 = vmatpush1.bf16.msra.mxu0 0
        %2016 = vmatprep.subr.bf16.mxu0 0
        %2017 = vmatpush1.bf16.msra.mxu0 0
        %2018 = vmatprep.subr.bf16.mxu0 0
        %2019 = vmatpush1.bf16.msra.mxu0 0
        %2020 = vmatprep.subr.bf16.mxu0 0
        %2021 = vmatpush1.bf16.msra.mxu0 0
        %2022 = vmatprep.subr.bf16.mxu0 0
        %2023 = vmatpush1.bf16.msra.mxu0 0
        %2024 = vmatprep.subr.bf16.mxu0 0
        %2025 = vmatpush1.bf16.msra.mxu0 0
        %2026 = vmatprep.subr.bf16.mxu0 0
        %2027 = vmatpush1.bf16.msra.mxu0 0
        %2028 = vmatprep.subr.bf16.mxu0 0
        %2029 = vmatpush1.bf16.msra.mxu0 0
        %2030 = vmatprep.subr.bf16.mxu0 0
        %2031 = vmatpush1.bf16.msra.mxu0 0
        %2032 = vmatprep.subr.bf16.mxu0 0
        %2033 = vmatpush1.bf16.msra.mxu0 0
        %2034 = vmatprep.subr.bf16.mxu0 0
        %2035 = vmatpush1.bf16.msra.mxu0 0
        %2036 = vmatprep.subr.bf16.mxu0 0
        %2037 = vmatpush1.bf16.msra.mxu0 0
        %2038 = vmatprep.subr.bf16.mxu0 0
        %2039 = vmatpush1.bf16.msra.mxu0 0
        %2040 = vmatprep.subr.bf16.mxu0 0
        %2041 = vmatpush1.bf16.msra.mxu0 0
        %2042 = vmatprep.subr.bf16.mxu0 0
        %2043 = vmatpush1.bf16.msra.mxu0 0
        %2044 = vmatprep.mubr.bf16.mxu0 0
        %2045 = vmatmul.mubr.bf16.gmra.mrb[0].mxu0 %v2007
        %v2046 = vpop.f32.mrb[0].mxu0
        %v2047 = vadd.f32 0.0, %v2046
        %v2048 = vpop.f32.mrb[0].mxu0
        %v2049 = vpop.f32.mrb[0].mxu0
        %v2050 = vpop.f32.mrb[0].mxu0
        %2051 = vdwg.mxu0
        %v2052 = vadd.f32 %v1894, %v2047
        %2053 = vrot.lane.b32.xlu0 %v1579, 104
        %v2054 = vpop.permute.xlu0 %2053
        %2055 = vrot.lane.b32.xlu0 %v1579, 72
        %v2056 = vpop.permute.xlu0 %2055
        %v2058 = vsel %vm654, %v2054, 0
        %v2061 = vsel %vm654, %v2056, 0
        %2063 = vmatprep.subr.bf16.mxu0 0
        %2064 = vmatpush1.bf16.xpose.msra.mxu0 %v2061
        %2065 = vmatprep.subr.bf16.mxu0 0
        %2066 = vmatpush1.bf16.xpose.msra.mxu0 0
        %2067 = vmatprep.subr.bf16.mxu0 0
        %2068 = vmatpush1.bf16.xpose.msra.mxu0 0
        %2069 = vmatprep.subr.bf16.mxu0 0
        %2070 = vmatpush1.bf16.xpose.msra.mxu0 0
        %2071 = vmatprep.subr.bf16.mxu0 0
        %2072 = vmatpush1.bf16.xpose.msra.mxu0 0
        %2073 = vmatprep.subr.bf16.mxu0 0
        %2074 = vmatpush1.bf16.xpose.msra.mxu0 0
        %2075 = vmatprep.subr.bf16.mxu0 0
        %2076 = vmatpush1.bf16.xpose.msra.mxu0 0
        %2077 = vmatprep.subr.bf16.mxu0 0
        %2078 = vmatpush1.bf16.xpose.msra.mxu0 0
        %2079 = vmatprep.subr.bf16.mxu0 0
        %2080 = vmatpush1.bf16.xpose.msra.mxu0 0
        %2081 = vmatprep.subr.bf16.mxu0 0
        %2082 = vmatpush1.bf16.xpose.msra.mxu0 0
        %2083 = vmatprep.subr.bf16.mxu0 0
        %2084 = vmatpush1.bf16.xpose.msra.mxu0 0
        %2085 = vmatprep.subr.bf16.mxu0 0
        %2086 = vmatpush1.bf16.xpose.msra.mxu0 0
        %2087 = vmatprep.subr.bf16.mxu0 0
        %2088 = vmatpush1.bf16.xpose.msra.mxu0 0
        %2089 = vmatprep.subr.bf16.mxu0 0
        %2090 = vmatpush1.bf16.xpose.msra.mxu0 0
        %2091 = vmatprep.subr.bf16.mxu0 0
        %2092 = vmatpush1.bf16.xpose.msra.mxu0 0
        %2093 = vmatprep.subr.bf16.mxu0 0
        %2094 = vmatpush1.bf16.xpose.msra.mxu0 0
        %2095 = vmatprep.mubr.bf16.mxu0 0
        %2096 = vmatmul.mubr.bf16.gmra.mrb[0].mxu0 %v2058
        %v2097 = vpop.f32.mrb[0].mxu0
        %v2098 = vadd.f32 0.0, %v2097
        %v2099 = vpop.f32.mrb[0].mxu0
        %v2100 = vpop.f32.mrb[0].mxu0
        %v2101 = vpop.f32.mrb[0].mxu0
        %2102 = vdwg.mxu0
        %v2103 = vsel %vm654, %v2098, -inf
        %2104 = vmax.xlane.f32.xlu0 %v2103
        %v2105 = vpop.xlane.xlu0 %2104
        %v2106 = vsub.f32 %v2098, %v2105
        %v2107 = vmul.f32 %v2106, 1.442695
        %v2108 = vpow.pop %v2107
        %v2109 = vsel %vm654, %v2108, 0.0
        %2110 = vadd.xlane.f32.xlu0 %v2109
        %v2111 = vpop.xlane.xlu0 %2110
        %v2112 = vrcp.pop %v2111
        %v2113 = vmul.f32 %v2108, %v2112
        %v2114 = vpack.c.bf16 %v2113, %v2113
        %2115 = vrot.lane.b32.xlu0 %v1579, 40
        %v2116 = vpop.permute.xlu0 %2115
        %v2118 = vsel %vm654, %v2114, 0
        %v2121 = vsel %vm718, %v2116, 0
        %2123 = vmatprep.subr.bf16.mxu0 0
        %2124 = vmatpush1.bf16.msra.mxu0 %v2121
        %2125 = vmatprep.subr.bf16.mxu0 0
        %2126 = vmatpush1.bf16.msra.mxu0 0
        %2127 = vmatprep.subr.bf16.mxu0 0
        %2128 = vmatpush1.bf16.msra.mxu0 0
        %2129 = vmatprep.subr.bf16.mxu0 0
        %2130 = vmatpush1.bf16.msra.mxu0 0
        %2131 = vmatprep.subr.bf16.mxu0 0
        %2132 = vmatpush1.bf16.msra.mxu0 0
        %2133 = vmatprep.subr.bf16.mxu0 0
        %2134 = vmatpush1.bf16.msra.mxu0 0
        %2135 = vmatprep.subr.bf16.mxu0 0
        %2136 = vmatpush1.bf16.msra.mxu0 0
        %2137 = vmatprep.subr.bf16.mxu0 0
        %2138 = vmatpush1.bf16.msra.mxu0 0
        %2139 = vmatprep.subr.bf16.mxu0 0
        %2140 = vmatpush1.bf16.msra.mxu0 0
        %2141 = vmatprep.subr.bf16.mxu0 0
        %2142 = vmatpush1.bf16.msra.mxu0 0
        %2143 = vmatprep.subr.bf16.mxu0 0
        %2144 = vmatpush1.bf16.msra.mxu0 0
        %2145 = vmatprep.subr.bf16.mxu0 0
        %2146 = vmatpush1.bf16.msra.mxu0 0
        %2147 = vmatprep.subr.bf16.mxu0 0
        %2148 = vmatpush1.bf16.msra.mxu0 0
        %2149 = vmatprep.subr.bf16.mxu0 0
        %2150 = vmatpush1.bf16.msra.mxu0 0
        %2151 = vmatprep.subr.bf16.mxu0 0
        %2152 = vmatpush1.bf16.msra.mxu0 0
        %2153 = vmatprep.subr.bf16.mxu0 0
        %2154 = vmatpush1.bf16.msra.mxu0 0
        %2155 = vmatprep.mubr.bf16.mxu0 0
        %2156 = vmatmul.mubr.bf16.gmra.mrb[0].mxu0 %v2118
        %v2157 = vpop.f32.mrb[0].mxu0
        %v2158 = vadd.f32 0.0, %v2157
        %v2159 = vpop.f32.mrb[0].mxu0
        %v2160 = vpop.f32.mrb[0].mxu0
        %v2161 = vpop.f32.mrb[0].mxu0
        %2162 = vdwg.mxu0
        %v2163 = vpack.c.bf16 %v2158, %v2158
        %v2165 = vsel %vm654, %v2163, 0
        %v2168 = vsel %vm718, %v1569, 0
        %2170 = vmatprep.subr.bf16.mxu0 0
        %2171 = vmatpush1.bf16.msra.mxu0 %v2168
        %2172 = vmatprep.subr.bf16.mxu0 0
        %2173 = vmatpush1.bf16.msra.mxu0 0
        %2174 = vmatprep.subr.bf16.mxu0 0
        %2175 = vmatpush1.bf16.msra.mxu0 0
        %2176 = vmatprep.subr.bf16.mxu0 0
        %2177 = vmatpush1.bf16.msra.mxu0 0
        %2178 = vmatprep.subr.bf16.mxu0 0
        %2179 = vmatpush1.bf16.msra.mxu0 0
        %2180 = vmatprep.subr.bf16.mxu0 0
        %2181 = vmatpush1.bf16.msra.mxu0 0
        %2182 = vmatprep.subr.bf16.mxu0 0
        %2183 = vmatpush1.bf16.msra.mxu0 0
        %2184 = vmatprep.subr.bf16.mxu0 0
        %2185 = vmatpush1.bf16.msra.mxu0 0
        %2186 = vmatprep.subr.bf16.mxu0 0
        %2187 = vmatpush1.bf16.msra.mxu0 0
        %2188 = vmatprep.subr.bf16.mxu0 0
        %2189 = vmatpush1.bf16.msra.mxu0 0
        %2190 = vmatprep.subr.bf16.mxu0 0
        %2191 = vmatpush1.bf16.msra.mxu0 0
        %2192 = vmatprep.subr.bf16.mxu0 0
        %2193 = vmatpush1.bf16.msra.mxu0 0
        %2194 = vmatprep.subr.bf16.mxu0 0
        %2195 = vmatpush1.bf16.msra.mxu0 0
        %2196 = vmatprep.subr.bf16.mxu0 0
        %2197 = vmatpush1.bf16.msra.mxu0 0
        %2198 = vmatprep.subr.bf16.mxu0 0
        %2199 = vmatpush1.bf16.msra.mxu0 0
        %2200 = vmatprep.subr.bf16.mxu0 0
        %2201 = vmatpush1.bf16.msra.mxu0 0
        %2202 = vmatprep.mubr.bf16.mxu0 0
        %2203 = vmatmul.mubr.bf16.gmra.mrb[0].mxu0 %v2165
        %v2204 = vpop.f32.mrb[0].mxu0
        %v2205 = vadd.f32 0.0, %v2204
        %v2206 = vpop.f32.mrb[0].mxu0
        %v2207 = vpop.f32.mrb[0].mxu0
        %v2208 = vpop.f32.mrb[0].mxu0
        %2209 = vdwg.mxu0
        %v2210 = vadd.f32 %v2052, %v2205
        %s2211 = scalar_lea.vmem [#allocation7], 1
        %v2212 = vld [vmem:[%s2211] sm:$0x1]
        %s2213 = scalar_lea.vmem [#allocation8], 1
        %v2214 = vld [vmem:[%s2213] sm:$0x1]
        %v2215 = vsel %vm594, %v2210, 0.0
        %2216 = vadd.xlane.f32.xlu0 %v2215
        %v2217 = vpop.xlane.xlu0 %2216
        %v2218 = vmul.f32 %v2217, %v1289
        %v2219 = vsub.f32 %v2210, %v2218
        %v2220 = vmul.f32 %v2219, %v2219
        %v2221 = vsel %vm594, %v2220, 0.0
        %2222 = vadd.xlane.f32.xlu0 %v2221
        %v2223 = vpop.xlane.xlu0 %2222
        %v2224 = vmul.f32 %v2223, %v1289
        %v2225 = vadd.f32 %v2224, 1e-05
        %v2226 = vrsqrt.pop %v2225
        %v2227 = vmul.f32 %v2219, %v2226
        %v2229 = vlaneseq
        %v2230 = vshrl.u32 %v2229, 7
        %v2231 = vsub.s32 0, %v2230
        %v2232 = vrot.slane %v2212, %v2231
        %v2234 = vmul.f32 %v2227, %v2232
        %v2236 = vlaneseq
        %v2237 = vshrl.u32 %v2236, 7
        %v2238 = vsub.s32 0, %v2237
        %v2239 = vrot.slane %v2214, %v2238
        %v2241 = vadd.f32 %v2234, %v2239
        %v2242 = vpack.c.bf16 %v2241, %v2241
        %s2243 = scalar_lea.vmem %s7, 16
        %v2244 = vld [vmem:[%s2243] sm:$0xf]
        %v2245 = vld [vmem:[%s2243 + $0x4] sm:$0xf]
        %v2246 = vld [vmem:[%s2243 + $0x8] sm:$0xf]
        %v2247 = vld [vmem:[%s2243 + $0xc] sm:$0xf]
        %s2248 = scalar_lea.vmem [#allocation10], 1
        %v2249 = vld [vmem:[%s2248] sm:$0x1]
        %v2251 = vlaneseq
        %v2252 = vshrl.u32 %v2251, 7
        %v2253 = vsub.s32 0, %v2252
        %v2254 = vrot.slane %v2249, %v2253
        %v2260 = vunpack.c.l.b16 %v2244
        %v2261 = vunpack.c.l.b16 %v2245
        %v2262 = vunpack.c.l.b16 %v2246
        %v2263 = vunpack.c.l.b16 %v2247
        %v2264 = vpack.c.b16 %v2261, %v2260
        %v2265 = vpack.c.b16 %v2263, %v2262
        %v2269 = vsel %vm594, %v2242, 0
        %2271 = vmatprep.subr.bf16.mxu0 0
        %2272 = vmatpush1.bf16.msra.mxu0 %v2264
        %2273 = vmatprep.subr.bf16.mxu0 0
        %2274 = vmatpush1.bf16.msra.mxu0 %v2265
        %2275 = vmatprep.subr.bf16.mxu0 0
        %2276 = vmatpush1.bf16.msra.mxu0 0
        %2277 = vmatprep.subr.bf16.mxu0 0
        %2278 = vmatpush1.bf16.msra.mxu0 0
        %2279 = vmatprep.subr.bf16.mxu0 0
        %2280 = vmatpush1.bf16.msra.mxu0 0
        %2281 = vmatprep.subr.bf16.mxu0 0
        %2282 = vmatpush1.bf16.msra.mxu0 0
        %2283 = vmatprep.subr.bf16.mxu0 0
        %2284 = vmatpush1.bf16.msra.mxu0 0
        %2285 = vmatprep.subr.bf16.mxu0 0
        %2286 = vmatpush1.bf16.msra.mxu0 0
        %2287 = vmatprep.subr.bf16.mxu0 0
        %2288 = vmatpush1.bf16.msra.mxu0 0
        %2289 = vmatprep.subr.bf16.mxu0 0
        %2290 = vmatpush1.bf16.msra.mxu0 0
        %2291 = vmatprep.subr.bf16.mxu0 0
        %2292 = vmatpush1.bf16.msra.mxu0 0
        %2293 = vmatprep.subr.bf16.mxu0 0
        %2294 = vmatpush1.bf16.msra.mxu0 0
        %2295 = vmatprep.subr.bf16.mxu0 0
        %2296 = vmatpush1.bf16.msra.mxu0 0
        %2297 = vmatprep.subr.bf16.mxu0 0
        %2298 = vmatpush1.bf16.msra.mxu0 0
        %2299 = vmatprep.subr.bf16.mxu0 0
        %2300 = vmatpush1.bf16.msra.mxu0 0
        %2301 = vmatprep.subr.bf16.mxu0 0
        %2302 = vmatpush1.bf16.msra.mxu0 0
        %2303 = vmatprep.mubr.bf16.mxu0 0
        %2304 = vmatmul.mubr.bf16.gmra.mrb[0].mxu0 %v2269
        %v2305 = vpop.f32.mrb[0].mxu0
        %v2306 = vadd.f32 %v2254, %v2305
        %v2307 = vpop.f32.mrb[0].mxu0
        %v2308 = vpop.f32.mrb[0].mxu0
        %v2309 = vpop.f32.mrb[0].mxu0
        %2310 = vdwg.mxu0
        %v2311 = vmax.f32 %v2306, 0.0
        %v2312 = vpack.c.bf16 %v2311, %v2311
        %s2313 = scalar_lea.vmem %s9, 32
        %v2314 = vld [vmem:[%s2313] sm:$0xf]
        %v2315 = vld [vmem:[%s2313 + $0x4] sm:$0xf]
        %v2316 = vld [vmem:[%s2313 + $0x8] sm:$0xf]
        %v2317 = vld [vmem:[%s2313 + $0xc] sm:$0xf]
        %v2318 = vld [vmem:[%s2313 + $0x10] sm:$0xf]
        %v2319 = vld [vmem:[%s2313 + $0x14] sm:$0xf]
        %v2320 = vld [vmem:[%s2313 + $0x18] sm:$0xf]
        %v2321 = vld [vmem:[%s2313 + $0x1c] sm:$0xf]
        %s2322 = scalar_lea.vmem %s10, 1
        %v2323 = vld [vmem:[%s2322] sm:$0x1]
        %v2325 = vlaneseq
        %v2326 = vshrl.u32 %v2325, 7
        %v2327 = vsub.s32 0, %v2326
        %v2328 = vrot.slane %v2323, %v2327
        %v2338 = vunpack.c.l.b16 %v2314
        %v2339 = vunpack.c.l.b16 %v2315
        %v2340 = vunpack.c.l.b16 %v2316
        %v2341 = vunpack.c.l.b16 %v2317
        %v2342 = vunpack.c.l.b16 %v2318
        %v2343 = vunpack.c.l.b16 %v2319
        %v2344 = vunpack.c.l.b16 %v2320
        %v2345 = vunpack.c.l.b16 %v2321
        %v2346 = vpack.c.b16 %v2339, %v2338
        %v2347 = vpack.c.b16 %v2341, %v2340
        %v2348 = vpack.c.b16 %v2343, %v2342
        %v2349 = vpack.c.b16 %v2345, %v2344
        %v2355 = vsel %vm1422, %v2312, 0
        %2357 = vmatprep.subr.bf16.mxu0 0
        %2358 = vmatpush1.bf16.msra.mxu0 %v2346
        %2359 = vmatprep.subr.bf16.mxu0 0
        %2360 = vmatpush1.bf16.msra.mxu0 %v2347
        %2361 = vmatprep.subr.bf16.mxu0 0
        %2362 = vmatpush1.bf16.msra.mxu0 %v2348
        %2363 = vmatprep.subr.bf16.mxu0 0
        %2364 = vmatpush1.bf16.msra.mxu0 %v2349
        %2365 = vmatprep.subr.bf16.mxu0 0
        %2366 = vmatpush1.bf16.msra.mxu0 0
        %2367 = vmatprep.subr.bf16.mxu0 0
        %2368 = vmatpush1.bf16.msra.mxu0 0
        %2369 = vmatprep.subr.bf16.mxu0 0
        %2370 = vmatpush1.bf16.msra.mxu0 0
        %2371 = vmatprep.subr.bf16.mxu0 0
        %2372 = vmatpush1.bf16.msra.mxu0 0
        %2373 = vmatprep.subr.bf16.mxu0 0
        %2374 = vmatpush1.bf16.msra.mxu0 0
        %2375 = vmatprep.subr.bf16.mxu0 0
        %2376 = vmatpush1.bf16.msra.mxu0 0
        %2377 = vmatprep.subr.bf16.mxu0 0
        %2378 = vmatpush1.bf16.msra.mxu0 0
        %2379 = vmatprep.subr.bf16.mxu0 0
        %2380 = vmatpush1.bf16.msra.mxu0 0
        %2381 = vmatprep.subr.bf16.mxu0 0
        %2382 = vmatpush1.bf16.msra.mxu0 0
        %2383 = vmatprep.subr.bf16.mxu0 0
        %2384 = vmatpush1.bf16.msra.mxu0 0
        %2385 = vmatprep.subr.bf16.mxu0 0
        %2386 = vmatpush1.bf16.msra.mxu0 0
        %2387 = vmatprep.subr.bf16.mxu0 0
        %2388 = vmatpush1.bf16.msra.mxu0 0
        %2389 = vmatprep.mubr.bf16.mxu0 0
        %2390 = vmatmul.mubr.bf16.gmra.mrb[0].mxu0 %v2355
        %v2391 = vpop.f32.mrb[0].mxu0
        %v2392 = vadd.f32 %v2328, %v2391
        %v2393 = vpop.f32.mrb[0].mxu0
        %v2394 = vpop.f32.mrb[0].mxu0
        %v2395 = vpop.f32.mrb[0].mxu0
        %2396 = vdwg.mxu0
        %v2397 = vadd.f32 %v2241, %v2392
        %s2398 = scalar_lea.vmem %s11, 1
        %v2399 = vld [vmem:[%s2398] sm:$0x1]
        %s2400 = scalar_lea.vmem %s12, 1
        %v2401 = vld [vmem:[%s2400] sm:$0x1]
        %v2402 = vsel %vm594, %v2397, 0.0
        %2403 = vadd.xlane.f32.xlu0 %v2402
        %v2404 = vpop.xlane.xlu0 %2403
        %v2405 = vmul.f32 %v2404, %v1289
        %v2406 = vsub.f32 %v2397, %v2405
        %v2407 = vmul.f32 %v2406, %v2406
        %v2408 = vsel %vm594, %v2407, 0.0
        %2409 = vadd.xlane.f32.xlu0 %v2408
        %v2410 = vpop.xlane.xlu0 %2409
        %v2411 = vmul.f32 %v2410, %v1289
        %v2412 = vadd.f32 %v2411, 1e-05
        %v2413 = vrsqrt.pop %v2412
        %v2414 = vmul.f32 %v2406, %v2413
        %v2416 = vlaneseq
        %v2417 = vshrl.u32 %v2416, 7
        %v2418 = vsub.s32 0, %v2417
        %v2419 = vrot.slane %v2399, %v2418
        %v2421 = vmul.f32 %v2414, %v2419
        %v2423 = vlaneseq
        %v2424 = vshrl.u32 %v2423, 7
        %v2425 = vsub.s32 0, %v2424
        %v2426 = vrot.slane %v2401, %v2425
        %v2428 = vadd.f32 %v2421, %v2426
        %v2429 = vld [vmem:[%s13] sm:$0x1]
        %v2430 = vld [vmem:[%s14] sm:$0x1]
        %v2431 = vsel %vm594, %v2428, 0.0
        %2432 = vadd.xlane.f32.xlu0 %v2431
        %v2433 = vpop.xlane.xlu0 %2432
        %v2434 = vmul.f32 %v2433, %v1289
        %v2435 = vsub.f32 %v2428, %v2434
        %v2436 = vmul.f32 %v2435, %v2435
        %v2437 = vsel %vm594, %v2436, 0.0
        %2438 = vadd.xlane.f32.xlu0 %v2437
        %v2439 = vpop.xlane.xlu0 %2438
        %v2440 = vmul.f32 %v2439, %v1289
        %v2441 = vadd.f32 %v2440, 1e-05
        %v2442 = vrsqrt.pop %v2441
        %v2443 = vmul.f32 %v2435, %v2442
        %v2445 = vlaneseq
        %v2446 = vshrl.u32 %v2445, 7
        %v2447 = vsub.s32 0, %v2446
        %v2448 = vrot.slane %v2429, %v2447
        %v2450 = vmul.f32 %v2443, %v2448
        %v2452 = vlaneseq
        %v2453 = vshrl.u32 %v2452, 7
        %v2454 = vsub.s32 0, %v2453
        %v2455 = vrot.slane %v2430, %v2454
        %v2457 = vadd.f32 %v2450, %v2455
        %2458 = vst.msk [vmem:[%s567] sm:$0xff] %vm594, %v2457
        %s2459 = sand.u32 %s362, 1
        %s2460 = scalar_lea.sflag [#allocation4], %s2459
        %s2461 = sand.u32 %s362, 1
        %s2462 = smul.addr %s2461, 8
        %s2463 = scalar_lea.vmem [#allocation11], %s2462
        // Predicated region
        $region101: #{tpu_custom_call.1} parent=79 // pred_check
          %p2464 = pneg %p372
        $region102: #{tpu_custom_call.1} parent=79 // pred_check_branch
          %2466 = sbr.rel (%p2464) target = $region104
        $region103: #{tpu_custom_call.1} parent=79 // pred_region
          %s2468 = ssub.s32 128, 128
          %2469 = vsyncadd %s2460, %s2468
          %s2470 = smul.addr %s34, 128
          %s2471 = scalar_lea.hbm %s15, %s2470
          %s2473 = sshll.u32 %s2463, 4
          %s2474 = int_to_ptr.vmem [resolvable:$true] %s2473
          %2476 = dma.vmem_to_hbm [thread:$0]  %s2474, 128, %s2471, %s2460
        $region104: #{tpu_custom_call.1} parent=79 // pred_fallthru
          _
      $region80: #{tpu_custom_call.1} parent=5 // pred_fallthru
        _
      %p2477 = scmp.le.s32.totalorder 2, %s29
      // Predicated region
      $region105: #{tpu_custom_call.1} parent=5 // pred_check
        %p2478 = pneg %p2477
      $region106: #{tpu_custom_call.1} parent=5 // pred_check_branch
        %2480 = sbr.rel (%p2478) target = $region108
      $region107: #{tpu_custom_call.1} parent=5 // pred_region
        %s2481 = ssub.s32 %s29, 2
        // Predicated region
        $region109: #{tpu_custom_call.1} parent=107 // pred_check
          %p2482 = pneg %p378
        $region110: #{tpu_custom_call.1} parent=107 // pred_check_branch
          %2484 = sbr.rel (%p2482) target = $region112
        $region111: #{tpu_custom_call.1} parent=107 // pred_region
          %s2485 = sand.u32 %s363, 1
          %s2486 = scalar_lea.sflag [#allocation4], %s2485
          %s2487 = sand.u32 %s363, 1
          %s2488 = smul.addr %s2487, 8
          %s2489 = scalar_lea.vmem [#allocation11], %s2488
          %2490 = dma.done %s2486, 128
        $region112: #{tpu_custom_call.1} parent=107 // pred_fallthru
          _
      $region108: #{tpu_custom_call.1} parent=5 // pred_fallthru
        _
    $region6: #{tpu_custom_call.1} parent=1 // loop_footer
      %s33 = sadd.s32 1, %s29
    $region7: #{tpu_custom_call.1} parent=1 // loop_footer_branch
      %28 = sbr.rel target = $region3
    $region8: #{tpu_custom_call.1} parent=1 // loop_exit
      _
    %2491 = vsyncpa [#allocation3], 1
    %s2492 = scalar_lea.sflag [#allocation3], 1
    %2493 = vsyncpa %s2492, 1
    %2494 = vsyncpa [#allocation6], 1
    %2495 = vsyncpa [#allocation9], 1
    %2496 = vsyncpa [#allocation4], 1
    %s2497 = scalar_lea.sflag [#allocation4], 1
    %2498 = vsyncpa %s2497, 1

</llo_original>
